<compile_context>
chip_gen: v7x
topology: tpu7x:2x2x1
jax: 0.10.0
libtpu: 0.0.40
codegen_flags: <defaults>
</compile_context>

<pallas_src>
import math
import numpy as np
import jax
import jax.numpy as jnp
from jax.experimental import pallas as pl
from jax.experimental.pallas import tpu as pltpu

D_MODEL = 32
N_HEADS = 4
D_HEAD = D_MODEL // N_HEADS
D_FF = 64
N_LAYERS = 2
EPS = 1e-6
NEG_INF = -1e9


# ---------------------------------------------------------------------------
# Kernel
# ---------------------------------------------------------------------------
def _layernorm(x, a, b):
    # custom LayerNorm: unbiased std (Bessel) and division by (std + eps)
    mean = jnp.mean(x, axis=-1, keepdims=True)
    diff = x - mean
    var = jnp.sum(diff * diff, axis=-1, keepdims=True) * (1.0 / (x.shape[-1] - 1))
    inv = pl.reciprocal(jnp.sqrt(var) + EPS)        # exact f32 reciprocal (accuracy)
    return a * (diff * inv) + b


def fused_encoder_kernel(x_ref, mask_ref,
                         ln1a_ref, ln1b_ref, wqkv_ref, bqkv_ref, wo_ref, bo_ref,
                         ln2a_ref, ln2b_ref, w1_ref, b1_ref, w2_ref, b2_ref,
                         fna_ref, fnb_ref, o_ref):
    x = x_ref[0]                 # (S, D)
    mask = mask_ref[0]           # (1, S)
    S = x.shape[0]

    # additive mask bias, computed ONCE (hoisted out of layers and heads)
    bias = jnp.where(mask == 0.0, jnp.float32(NEG_INF), jnp.float32(0.0))   # (1, S)

    for l in range(N_LAYERS):    # static unroll; weights + activation stay resident in VMEM
        # ---- sublayer 0: x + self_attn(norm(x), mask) ----
        xn = _layernorm(x, ln1a_ref[l], ln1b_ref[l])                          # (S, D)
        xnb = jnp.broadcast_to(xn[None], (3 * N_HEADS, S, D_MODEL))           # (3H, S, D)
        # one batched projection for Q,K,V of all heads; 1/sqrt(d_head) pre-folded into Q weights
        qkv = jnp.einsum('bsd,bdf->bsf', xnb, wqkv_ref[l],
                         preferred_element_type=jnp.float32) + bqkv_ref[l]    # (3H, S, Dh)
        q = qkv[:N_HEADS]                                                     # (H, S, Dh)
        k = qkv[N_HEADS:2 * N_HEADS]
        v = qkv[2 * N_HEADS:]

        scores = jnp.einsum('hqd,hkd->hqk', q, k,
                            preferred_element_type=jnp.float32) + bias        # (H, S, S)
        scores = scores - jnp.max(scores, axis=-1, keepdims=True)
        e = jnp.exp(scores)
        p = e * pl.reciprocal(jnp.sum(e, axis=-1, keepdims=True))             # exact divide
        ctx = jnp.einsum('hqk,hkd->hqd', p, v,
                         preferred_element_type=jnp.float32)                  # (H, S, Dh)

        # output projection per head + reduce over heads -> no lane concat / relayout
        attn = jnp.sum(jnp.einsum('hsd,hdf->hsf', ctx, wo_ref[l],
                                  preferred_element_type=jnp.float32),
                       axis=0) + bo_ref[l]                                    # (S, D)
        x = x + attn

        # ---- sublayer 1: x + ffn(norm(x)) ----
        xn2 = _layernorm(x, ln2a_ref[l], ln2b_ref[l])
        h = jnp.maximum(
            jnp.dot(xn2, w1_ref[l], preferred_element_type=jnp.float32) + b1_ref[l], 0.0)
        x = x + jnp.dot(h, w2_ref[l], preferred_element_type=jnp.float32) + b2_ref[l]

    # ---- final LayerNorm: single HBM store per batch element ----
    o_ref[0] = _layernorm(x, fna_ref[...], fnb_ref[...])


# ---------------------------------------------------------------------------
# Wrappers / parameter packing
# ---------------------------------------------------------------------------
def _const_map(ndim):
    return lambda b: (0,) * ndim


def pack_params(layer_params_list):
    """Stack per-layer params on a leading L axis; split heads and fold the q-scale."""
    scale = 1.0 / math.sqrt(D_HEAD)

    def split_heads_out(w):            # (D, D) -> (H, D, Dh)   (split output columns)
        return w.reshape(D_MODEL, N_HEADS, D_HEAD).transpose(1, 0, 2)

    def split_heads_bias(b):           # (1, D) -> (H, 1, Dh)
        return b.reshape(1, N_HEADS, D_HEAD).transpose(1, 0, 2)

    per_layer = []
    for p in layer_params_list:
        wqkv = jnp.concatenate([split_heads_out(p["wq"] * scale),
                                split_heads_out(p["wk"]),
                                split_heads_out(p["wv"])], axis=0)            # (3H, D, Dh)
        bqkv = jnp.concatenate([split_heads_bias(p["bq"] * scale),
                                split_heads_bias(p["bk"]),
                                split_heads_bias(p["bv"])], axis=0)           # (3H, 1, Dh)
        wo_h = p["wo"].reshape(N_HEADS, D_HEAD, D_MODEL)                      # (H, Dh, D)
        per_layer.append((p["a1"], p["b1"], wqkv, bqkv, wo_h, p["bo"],
                          p["a2"], p["b2"], p["w1"], p["b1f"], p["w2"], p["b2f"]))
    return [jnp.stack(ws, axis=0) for ws in zip(*per_layer)]


def encoder_forward(x, mask, layer_params_list, norm_a, norm_b):
    """Whole forward pass (N layers + final norm) in a single fused pallas_call."""
    B, S, D = x.shape
    weights = pack_params(layer_params_list) + [norm_a, norm_b]

    in_specs = [pl.BlockSpec((1, S, D), lambda b: (b, 0, 0)),
                pl.BlockSpec((1, 1, S), lambda b: (b, 0, 0))]
    in_specs += [pl.BlockSpec(w.shape, _const_map(w.ndim)) for w in weights]

    return pl.pallas_call(
        fused_encoder_kernel,
        out_shape=jax.ShapeDtypeStruct(x.shape, x.dtype),
        grid=(B,),
        in_specs=in_specs,
        out_specs=pl.BlockSpec((1, S, D), lambda b: (b, 0, 0)),
        compiler_params=pltpu.CompilerParams(dimension_semantics=("parallel",)),
    )(x, mask, *weights)


# ---------------------------------------------------------------------------
# Deterministic parameter init (shapes from the PyTorch __init__s)
# ---------------------------------------------------------------------------
def init_layer_params(key):
    ks = jax.random.split(key, 10)

    def lin(k, fan_in, fan_out):
        kw, kb = jax.random.split(k)
        w = jax.random.normal(kw, (fan_in, fan_out), jnp.float32) * 0.05
        b = jax.random.normal(kb, (1, fan_out), jnp.float32) * 0.02
        return w, b

    wq, bq = lin(ks[0], D_MODEL, D_MODEL)
    wk, bk = lin(ks[1], D_MODEL, D_MODEL)
    wv, bv = lin(ks[2], D_MODEL, D_MODEL)
    wo, bo = lin(ks[3], D_MODEL, D_MODEL)
    w1, b1f = lin(ks[4], D_MODEL, D_FF)
    w2, b2f = lin(ks[5], D_FF, D_MODEL)
    return {
        "a1": jnp.ones((1, D_MODEL), jnp.float32), "b1": jnp.zeros((1, D_MODEL), jnp.float32),
        "a2": jnp.ones((1, D_MODEL), jnp.float32), "b2": jnp.zeros((1, D_MODEL), jnp.float32),
        "wq": wq, "bq": bq, "wk": wk, "bk": bk, "wv": wv, "bv": bv, "wo": wo, "bo": bo,
        "w1": w1, "b1f": b1f, "w2": w2, "b2f": b2f,
    }


# ---------------------------------------------------------------------------
# Pure-JAX reference (mirrors the PyTorch semantics) for validation
# ---------------------------------------------------------------------------
def ref_layernorm(x, a, b):
    mean = x.mean(-1, keepdims=True)
    diff = x - mean
    var = (diff * diff).sum(-1, keepdims=True) / (x.shape[-1] - 1)
    return a * diff / (jnp.sqrt(var) + EPS) + b


def ref_encoder(x, mask, layer_params_list, norm_a, norm_b):
    B, S, D = x.shape
    for p in layer_params_list:
        xn = ref_layernorm(x, p["a1"], p["b1"])
        q = xn @ p["wq"] + p["bq"]
        k = xn @ p["wk"] + p["bk"]
        v = xn @ p["wv"] + p["bv"]

        def split(t):
            return t.reshape(B, S, N_HEADS, D_HEAD).transpose(0, 2, 1, 3)

        qh, kh, vh = split(q), split(k), split(v)
        scores = jnp.einsum("bhqd,bhkd->bhqk", qh, kh) / jnp.sqrt(jnp.float32(D_HEAD))
        scores = jnp.where(mask[:, None, :, :] == 0, -1e9, scores)
        p_attn = jax.nn.softmax(scores, axis=-1)
        attn = jnp.einsum("bhqk,bhkd->bhqd", p_attn, vh)
        attn = attn.transpose(0, 2, 1, 3).reshape(B, S, D)
        attn = attn @ p["wo"] + p["bo"]
        x1 = x + attn
        x1n = ref_layernorm(x1, p["a2"], p["b2"])
        ff = jnp.maximum(x1n @ p["w1"] + p["b1f"], 0.0) @ p["w2"] + p["b2f"]
        x = x1 + ff
    return ref_layernorm(x, norm_a, norm_b)


# ---------------------------------------------------------------------------
if __name__ == "__main__":
    B, S = 2, 8
    key = jax.random.PRNGKey(0)
    kx, kmask, *kls = jax.random.split(key, 2 + N_LAYERS)

    x = jax.random.normal(kx, (B, S, D_MODEL), jnp.float32)
    # mask: 1 = attend, 0 = masked; mask out the last 2 positions for batch 1
    mask = jnp.ones((B, 1, S), jnp.float32)
    mask = mask.at[1, 0, S - 2:].set(0.0)

    layer_params = [init_layer_params(k) for k in kls]
    norm_a = jnp.ones((1, D_MODEL), jnp.float32)
    norm_b = jnp.zeros((1, D_MODEL), jnp.float32)

    out = jax.block_until_ready(encoder_forward(x, mask, layer_params, norm_a, norm_b))

    ref = ref_encoder(x, mask, layer_params, norm_a, norm_b)
    np.testing.assert_allclose(np.asarray(out), np.asarray(ref), rtol=1e-3, atol=1e-3)

    # TODO(synk): dropout inside SublayerConnection is omitted (eval-mode identity).
    print("KERNEL_OK")
</pallas_src>

<mosaic_0001>
module attributes {stable_mosaic.version = 11 : i64} {
  func.func @fused_encoder_kernel(%arg0: i32, %arg1: memref<1x8x32xf32, #tpu.memory_space<vmem>>, %arg2: memref<1x1x8xf32, #tpu.memory_space<vmem>>, %arg3: memref<2x1x32xf32, #tpu.memory_space<vmem>>, %arg4: memref<2x1x32xf32, #tpu.memory_space<vmem>>, %arg5: memref<2x12x32x8xf32, #tpu.memory_space<vmem>>, %arg6: memref<2x12x1x8xf32, #tpu.memory_space<vmem>>, %arg7: memref<2x4x8x32xf32, #tpu.memory_space<vmem>>, %arg8: memref<2x1x32xf32, #tpu.memory_space<vmem>>, %arg9: memref<2x1x32xf32, #tpu.memory_space<vmem>>, %arg10: memref<2x1x32xf32, #tpu.memory_space<vmem>>, %arg11: memref<2x32x64xf32, #tpu.memory_space<vmem>>, %arg12: memref<2x1x64xf32, #tpu.memory_space<vmem>>, %arg13: memref<2x64x32xf32, #tpu.memory_space<vmem>>, %arg14: memref<2x1x32xf32, #tpu.memory_space<vmem>>, %arg15: memref<1x32xf32, #tpu.memory_space<vmem>>, %arg16: memref<1x32xf32, #tpu.memory_space<vmem>>, %arg17: memref<1x8x32xf32, #tpu.memory_space<vmem>>) attributes {dimension_semantics = [#tpu.dimension_semantics<parallel>], iteration_bounds = array<i64: 2>, scalar_prefetch = 0 : i64, scratch_operands = 0 : i64, tpu.core_type = #tpu.core_type<tc>, window_params = [{transform_indices = @transform_0, window_bounds = array<i64: 1, 8, 32>}, {transform_indices = @transform_1, window_bounds = array<i64: 1, 1, 8>}, {pipeline_mode = #tpu.pipeline_mode<synchronous>, transform_indices = @transform_2, window_bounds = array<i64: 2, 1, 32>}, {pipeline_mode = #tpu.pipeline_mode<synchronous>, transform_indices = @transform_3, window_bounds = array<i64: 2, 1, 32>}, {pipeline_mode = #tpu.pipeline_mode<synchronous>, transform_indices = @transform_4, window_bounds = array<i64: 2, 12, 32, 8>}, {pipeline_mode = #tpu.pipeline_mode<synchronous>, transform_indices = @transform_5, window_bounds = array<i64: 2, 12, 1, 8>}, {pipeline_mode = #tpu.pipeline_mode<synchronous>, transform_indices = @transform_6, window_bounds = array<i64: 2, 4, 8, 32>}, {pipeline_mode = #tpu.pipeline_mode<synchronous>, transform_indices = @transform_7, window_bounds = array<i64: 2, 1, 32>}, {pipeline_mode = #tpu.pipeline_mode<synchronous>, transform_indices = @transform_8, window_bounds = array<i64: 2, 1, 32>}, {pipeline_mode = #tpu.pipeline_mode<synchronous>, transform_indices = @transform_9, window_bounds = array<i64: 2, 1, 32>}, {pipeline_mode = #tpu.pipeline_mode<synchronous>, transform_indices = @transform_10, window_bounds = array<i64: 2, 32, 64>}, {pipeline_mode = #tpu.pipeline_mode<synchronous>, transform_indices = @transform_11, window_bounds = array<i64: 2, 1, 64>}, {pipeline_mode = #tpu.pipeline_mode<synchronous>, transform_indices = @transform_12, window_bounds = array<i64: 2, 64, 32>}, {pipeline_mode = #tpu.pipeline_mode<synchronous>, transform_indices = @transform_13, window_bounds = array<i64: 2, 1, 32>}, {pipeline_mode = #tpu.pipeline_mode<synchronous>, transform_indices = @transform_14, window_bounds = array<i64: 1, 32>}, {pipeline_mode = #tpu.pipeline_mode<synchronous>, transform_indices = @transform_15, window_bounds = array<i64: 1, 32>}, {transform_indices = @transform_16, window_bounds = array<i64: 1, 8, 32>}]} {
    %c0 = arith.constant 0 : index
    %c0_0 = arith.constant 0 : index
    %c0_1 = arith.constant 0 : index
    %0 = vector.load %arg1[%c0, %c0_0, %c0_1] : memref<1x8x32xf32, #tpu.memory_space<vmem>>, vector<1x8x32xf32>
    %1 = vector.shape_cast %0 : vector<1x8x32xf32> to vector<8x32xf32>
    %c0_2 = arith.constant 0 : index
    %c0_3 = arith.constant 0 : index
    %c0_4 = arith.constant 0 : index
    %2 = vector.load %arg2[%c0_2, %c0_3, %c0_4] : memref<1x1x8xf32, #tpu.memory_space<vmem>>, vector<1x1x8xf32>
    %3 = vector.shape_cast %2 : vector<1x1x8xf32> to vector<1x8xf32>
    %cst = arith.constant 0.000000e+00 : f32
    %4 = vector.broadcast %cst : f32 to vector<1x8xf32>
    %5 = arith.cmpf oeq, %3, %4 : vector<1x8xf32>
    %cst_5 = arith.constant -1.000000e+09 : f32
    %cst_6 = arith.constant 0.000000e+00 : f32
    %6 = vector.broadcast %cst_5 : f32 to vector<1x8xf32>
    %7 = vector.broadcast %cst_6 : f32 to vector<1x8xf32>
    %8 = arith.select %5, %6, %7 : vector<1x8xi1>, vector<1x8xf32>
    %c0_7 = arith.constant 0 : index
    %c0_8 = arith.constant 0 : index
    %c0_9 = arith.constant 0 : index
    %9 = vector.load %arg3[%c0_7, %c0_8, %c0_9] : memref<2x1x32xf32, #tpu.memory_space<vmem>>, vector<1x1x32xf32>
    %10 = vector.shape_cast %9 : vector<1x1x32xf32> to vector<1x32xf32>
    %c0_10 = arith.constant 0 : index
    %c0_11 = arith.constant 0 : index
    %c0_12 = arith.constant 0 : index
    %11 = vector.load %arg4[%c0_10, %c0_11, %c0_12] : memref<2x1x32xf32, #tpu.memory_space<vmem>>, vector<1x1x32xf32>
    %12 = vector.shape_cast %11 : vector<1x1x32xf32> to vector<1x32xf32>
    %cst_13 = arith.constant dense<0.000000e+00> : vector<8xf32>
    %13 = vector.multi_reduction <add>, %1, %cst_13 [1] : vector<8x32xf32> to vector<8xf32>
    %14 = vector.shape_cast %13 : vector<8xf32> to vector<8x1xf32>
    %cst_14 = arith.constant 3.200000e+01 : f32
    %15 = vector.broadcast %cst_14 : f32 to vector<8x1xf32>
    %16 = arith.divf %14, %15 : vector<8x1xf32>
    %17 = vector.broadcast %16 : vector<8x1xf32> to vector<8x32xf32>
    %18 = arith.subf %1, %17 : vector<8x32xf32>
    %19 = arith.mulf %18, %18 : vector<8x32xf32>
    %cst_15 = arith.constant dense<0.000000e+00> : vector<8xf32>
    %20 = vector.multi_reduction <add>, %19, %cst_15 [1] : vector<8x32xf32> to vector<8xf32>
    %21 = vector.shape_cast %20 : vector<8xf32> to vector<8x1xf32>
    %cst_16 = arith.constant 0.0322580636 : f32
    %22 = vector.broadcast %cst_16 : f32 to vector<8x1xf32>
    %23 = arith.mulf %21, %22 : vector<8x1xf32>
    %24 = math.sqrt %23 : vector<8x1xf32>
    %cst_17 = arith.constant 9.99999997E-7 : f32
    %25 = vector.broadcast %cst_17 : f32 to vector<8x1xf32>
    %26 = arith.addf %24, %25 : vector<8x1xf32>
    %27 = tpu.reciprocal %26 : vector<8x1xf32> -> vector<8x1xf32>
    %28 = vector.broadcast %27 : vector<8x1xf32> to vector<8x32xf32>
    %29 = arith.mulf %18, %28 : vector<8x32xf32>
    %30 = vector.broadcast %10 : vector<1x32xf32> to vector<8x32xf32>
    %31 = arith.mulf %30, %29 : vector<8x32xf32>
    %32 = vector.broadcast %12 : vector<1x32xf32> to vector<8x32xf32>
    %33 = arith.addf %31, %32 : vector<8x32xf32>
    %34 = vector.shape_cast %33 : vector<8x32xf32> to vector<1x8x32xf32>
    %35 = vector.shape_cast %34 : vector<1x8x32xf32> to vector<1x8x32xf32>
    %36 = vector.broadcast %35 : vector<1x8x32xf32> to vector<12x8x32xf32>
    %c0_18 = arith.constant 0 : index
    %c0_19 = arith.constant 0 : index
    %c0_20 = arith.constant 0 : index
    %c0_21 = arith.constant 0 : index
    %37 = vector.load %arg5[%c0_18, %c0_19, %c0_20, %c0_21] : memref<2x12x32x8xf32, #tpu.memory_space<vmem>>, vector<1x12x32x8xf32>
    %38 = vector.shape_cast %37 : vector<1x12x32x8xf32> to vector<12x32x8xf32>
    "tpu.trace_start"() <{level = 10 : i32, message = "bsd,bdf->bsf"}> : () -> ()
    %cst_22 = arith.constant dense<0.000000e+00> : vector<12x8x8xf32>
    %39 = tpu.matmul %36, %38, %cst_22 {dimension_numbers = #tpu.dot_dimension_numbers<[2], [1], [1], [2], [0, 0, 0, 1, 1, 2], [0], [0]>} : vector<12x8x32xf32>, vector<12x32x8xf32>, vector<12x8x8xf32> -> vector<12x8x8xf32>
    "tpu.trace_stop"() : () -> ()
    %c0_23 = arith.constant 0 : index
    %c0_24 = arith.constant 0 : index
    %c0_25 = arith.constant 0 : index
    %c0_26 = arith.constant 0 : index
    %40 = vector.load %arg6[%c0_23, %c0_24, %c0_25, %c0_26] : memref<2x12x1x8xf32, #tpu.memory_space<vmem>>, vector<1x12x1x8xf32>
    %41 = vector.shape_cast %40 : vector<1x12x1x8xf32> to vector<12x1x8xf32>
    %42 = vector.broadcast %41 : vector<12x1x8xf32> to vector<12x8x8xf32>
    %43 = arith.addf %39, %42 : vector<12x8x8xf32>
    %44 = vector.extract_strided_slice %43 {offsets = [0, 0, 0], sizes = [4, 8, 8], strides = [1, 1, 1]} : vector<12x8x8xf32> to vector<4x8x8xf32>
    %45 = vector.extract_strided_slice %43 {offsets = [4, 0, 0], sizes = [4, 8, 8], strides = [1, 1, 1]} : vector<12x8x8xf32> to vector<4x8x8xf32>
    %46 = vector.extract_strided_slice %43 {offsets = [8, 0, 0], sizes = [4, 8, 8], strides = [1, 1, 1]} : vector<12x8x8xf32> to vector<4x8x8xf32>
    "tpu.trace_start"() <{level = 10 : i32, message = "hqd,hkd->hqk"}> : () -> ()
    %cst_27 = arith.constant dense<0.000000e+00> : vector<4x8x8xf32>
    %47 = tpu.matmul %44, %45, %cst_27 {dimension_numbers = #tpu.dot_dimension_numbers<[2], [2], [1], [1], [0, 0, 0, 1, 1, 1], [0], [0]>} : vector<4x8x8xf32>, vector<4x8x8xf32>, vector<4x8x8xf32> -> vector<4x8x8xf32>
    "tpu.trace_stop"() : () -> ()
    %48 = vector.shape_cast %8 : vector<1x8xf32> to vector<1x1x8xf32>
    %49 = vector.broadcast %48 : vector<1x1x8xf32> to vector<4x8x8xf32>
    %50 = arith.addf %47, %49 : vector<4x8x8xf32>
    %cst_28 = arith.constant dense<0xFF800000> : vector<4x8xf32>
    %51 = vector.multi_reduction <maximumf>, %50, %cst_28 [2] : vector<4x8x8xf32> to vector<4x8xf32>
    %52 = vector.shape_cast %51 : vector<4x8xf32> to vector<4x8x1xf32>
    %53 = vector.broadcast %52 : vector<4x8x1xf32> to vector<4x8x8xf32>
    %54 = arith.subf %50, %53 : vector<4x8x8xf32>
    %55 = math.exp %54 : vector<4x8x8xf32>
    %cst_29 = arith.constant dense<0.000000e+00> : vector<4x8xf32>
    %56 = vector.multi_reduction <add>, %55, %cst_29 [2] : vector<4x8x8xf32> to vector<4x8xf32>
    %57 = vector.shape_cast %56 : vector<4x8xf32> to vector<4x8x1xf32>
    %58 = tpu.reciprocal %57 : vector<4x8x1xf32> -> vector<4x8x1xf32>
    %59 = vector.broadcast %58 : vector<4x8x1xf32> to vector<4x8x8xf32>
    %60 = arith.mulf %55, %59 : vector<4x8x8xf32>
    "tpu.trace_start"() <{level = 10 : i32, message = "hqk,hkd->hqd"}> : () -> ()
    %cst_30 = arith.constant dense<0.000000e+00> : vector<4x8x8xf32>
    %61 = tpu.matmul %60, %46, %cst_30 {dimension_numbers = #tpu.dot_dimension_numbers<[2], [1], [1], [2], [0, 0, 0, 1, 1, 2], [0], [0]>} : vector<4x8x8xf32>, vector<4x8x8xf32>, vector<4x8x8xf32> -> vector<4x8x8xf32>
    "tpu.trace_stop"() : () -> ()
    %c0_31 = arith.constant 0 : index
    %c0_32 = arith.constant 0 : index
    %c0_33 = arith.constant 0 : index
    %c0_34 = arith.constant 0 : index
    %62 = vector.load %arg7[%c0_31, %c0_32, %c0_33, %c0_34] : memref<2x4x8x32xf32, #tpu.memory_space<vmem>>, vector<1x4x8x32xf32>
    %63 = vector.shape_cast %62 : vector<1x4x8x32xf32> to vector<4x8x32xf32>
    "tpu.trace_start"() <{level = 10 : i32, message = "hsd,hdf->hsf"}> : () -> ()
    %cst_35 = arith.constant dense<0.000000e+00> : vector<4x8x32xf32>
    %64 = tpu.matmul %61, %63, %cst_35 {dimension_numbers = #tpu.dot_dimension_numbers<[2], [1], [1], [2], [0, 0, 0, 1, 1, 2], [0], [0]>} : vector<4x8x8xf32>, vector<4x8x32xf32>, vector<4x8x32xf32> -> vector<4x8x32xf32>
    "tpu.trace_stop"() : () -> ()
    %cst_36 = arith.constant dense<0.000000e+00> : vector<8x32xf32>
    %65 = vector.multi_reduction <add>, %64, %cst_36 [0] : vector<4x8x32xf32> to vector<8x32xf32>
    %c0_37 = arith.constant 0 : index
    %c0_38 = arith.constant 0 : index
    %c0_39 = arith.constant 0 : index
    %66 = vector.load %arg8[%c0_37, %c0_38, %c0_39] : memref<2x1x32xf32, #tpu.memory_space<vmem>>, vector<1x1x32xf32>
    %67 = vector.shape_cast %66 : vector<1x1x32xf32> to vector<1x32xf32>
    %68 = vector.broadcast %67 : vector<1x32xf32> to vector<8x32xf32>
    %69 = arith.addf %65, %68 : vector<8x32xf32>
    %70 = arith.addf %1, %69 : vector<8x32xf32>
    %c0_40 = arith.constant 0 : index
    %c0_41 = arith.constant 0 : index
    %c0_42 = arith.constant 0 : index
    %71 = vector.load %arg9[%c0_40, %c0_41, %c0_42] : memref<2x1x32xf32, #tpu.memory_space<vmem>>, vector<1x1x32xf32>
    %72 = vector.shape_cast %71 : vector<1x1x32xf32> to vector<1x32xf32>
    %c0_43 = arith.constant 0 : index
    %c0_44 = arith.constant 0 : index
    %c0_45 = arith.constant 0 : index
    %73 = vector.load %arg10[%c0_43, %c0_44, %c0_45] : memref<2x1x32xf32, #tpu.memory_space<vmem>>, vector<1x1x32xf32>
    %74 = vector.shape_cast %73 : vector<1x1x32xf32> to vector<1x32xf32>
    %cst_46 = arith.constant dense<0.000000e+00> : vector<8xf32>
    %75 = vector.multi_reduction <add>, %70, %cst_46 [1] : vector<8x32xf32> to vector<8xf32>
    %76 = vector.shape_cast %75 : vector<8xf32> to vector<8x1xf32>
    %cst_47 = arith.constant 3.200000e+01 : f32
    %77 = vector.broadcast %cst_47 : f32 to vector<8x1xf32>
    %78 = arith.divf %76, %77 : vector<8x1xf32>
    %79 = vector.broadcast %78 : vector<8x1xf32> to vector<8x32xf32>
    %80 = arith.subf %70, %79 : vector<8x32xf32>
    %81 = arith.mulf %80, %80 : vector<8x32xf32>
    %cst_48 = arith.constant dense<0.000000e+00> : vector<8xf32>
    %82 = vector.multi_reduction <add>, %81, %cst_48 [1] : vector<8x32xf32> to vector<8xf32>
    %83 = vector.shape_cast %82 : vector<8xf32> to vector<8x1xf32>
    %cst_49 = arith.constant 0.0322580636 : f32
    %84 = vector.broadcast %cst_49 : f32 to vector<8x1xf32>
    %85 = arith.mulf %83, %84 : vector<8x1xf32>
    %86 = math.sqrt %85 : vector<8x1xf32>
    %cst_50 = arith.constant 9.99999997E-7 : f32
    %87 = vector.broadcast %cst_50 : f32 to vector<8x1xf32>
    %88 = arith.addf %86, %87 : vector<8x1xf32>
    %89 = tpu.reciprocal %88 : vector<8x1xf32> -> vector<8x1xf32>
    %90 = vector.broadcast %89 : vector<8x1xf32> to vector<8x32xf32>
    %91 = arith.mulf %80, %90 : vector<8x32xf32>
    %92 = vector.broadcast %72 : vector<1x32xf32> to vector<8x32xf32>
    %93 = arith.mulf %92, %91 : vector<8x32xf32>
    %94 = vector.broadcast %74 : vector<1x32xf32> to vector<8x32xf32>
    %95 = arith.addf %93, %94 : vector<8x32xf32>
    %c0_51 = arith.constant 0 : index
    %c0_52 = arith.constant 0 : index
    %c0_53 = arith.constant 0 : index
    %96 = vector.load %arg11[%c0_51, %c0_52, %c0_53] : memref<2x32x64xf32, #tpu.memory_space<vmem>>, vector<1x32x64xf32>
    %97 = vector.shape_cast %96 : vector<1x32x64xf32> to vector<32x64xf32>
    %cst_54 = arith.constant dense<0.000000e+00> : vector<8x64xf32>
    %98 = tpu.matmul %95, %97, %cst_54 {dimension_numbers = #tpu.dot_dimension_numbers<[1], [0], [0], [1], [0, 0, 1, 1], [], []>} : vector<8x32xf32>, vector<32x64xf32>, vector<8x64xf32> -> vector<8x64xf32>
    %c0_55 = arith.constant 0 : index
    %c0_56 = arith.constant 0 : index
    %c0_57 = arith.constant 0 : index
    %99 = vector.load %arg12[%c0_55, %c0_56, %c0_57] : memref<2x1x64xf32, #tpu.memory_space<vmem>>, vector<1x1x64xf32>
    %100 = vector.shape_cast %99 : vector<1x1x64xf32> to vector<1x64xf32>
    %101 = vector.broadcast %100 : vector<1x64xf32> to vector<8x64xf32>
    %102 = arith.addf %98, %101 : vector<8x64xf32>
    %cst_58 = arith.constant 0.000000e+00 : f32
    %103 = vector.broadcast %cst_58 : f32 to vector<8x64xf32>
    %104 = arith.maximumf %102, %103 : vector<8x64xf32>
    %c0_59 = arith.constant 0 : index
    %c0_60 = arith.constant 0 : index
    %c0_61 = arith.constant 0 : index
    %105 = vector.load %arg13[%c0_59, %c0_60, %c0_61] : memref<2x64x32xf32, #tpu.memory_space<vmem>>, vector<1x64x32xf32>
    %106 = vector.shape_cast %105 : vector<1x64x32xf32> to vector<64x32xf32>
    %cst_62 = arith.constant dense<0.000000e+00> : vector<8x32xf32>
    %107 = tpu.matmul %104, %106, %cst_62 {dimension_numbers = #tpu.dot_dimension_numbers<[1], [0], [0], [1], [0, 0, 1, 1], [], []>} : vector<8x64xf32>, vector<64x32xf32>, vector<8x32xf32> -> vector<8x32xf32>
    %108 = arith.addf %70, %107 : vector<8x32xf32>
    %c0_63 = arith.constant 0 : index
    %c0_64 = arith.constant 0 : index
    %c0_65 = arith.constant 0 : index
    %109 = vector.load %arg14[%c0_63, %c0_64, %c0_65] : memref<2x1x32xf32, #tpu.memory_space<vmem>>, vector<1x1x32xf32>
    %110 = vector.shape_cast %109 : vector<1x1x32xf32> to vector<1x32xf32>
    %111 = vector.broadcast %110 : vector<1x32xf32> to vector<8x32xf32>
    %112 = arith.addf %108, %111 : vector<8x32xf32>
    %c1 = arith.constant 1 : index
    %c0_66 = arith.constant 0 : index
    %c0_67 = arith.constant 0 : index
    %113 = vector.load %arg3[%c1, %c0_66, %c0_67] : memref<2x1x32xf32, #tpu.memory_space<vmem>>, vector<1x1x32xf32>
    %114 = vector.shape_cast %113 : vector<1x1x32xf32> to vector<1x32xf32>
    %c1_68 = arith.constant 1 : index
    %c0_69 = arith.constant 0 : index
    %c0_70 = arith.constant 0 : index
    %115 = vector.load %arg4[%c1_68, %c0_69, %c0_70] : memref<2x1x32xf32, #tpu.memory_space<vmem>>, vector<1x1x32xf32>
    %116 = vector.shape_cast %115 : vector<1x1x32xf32> to vector<1x32xf32>
    %cst_71 = arith.constant dense<0.000000e+00> : vector<8xf32>
    %117 = vector.multi_reduction <add>, %112, %cst_71 [1] : vector<8x32xf32> to vector<8xf32>
    %118 = vector.shape_cast %117 : vector<8xf32> to vector<8x1xf32>
    %cst_72 = arith.constant 3.200000e+01 : f32
    %119 = vector.broadcast %cst_72 : f32 to vector<8x1xf32>
    %120 = arith.divf %118, %119 : vector<8x1xf32>
    %121 = vector.broadcast %120 : vector<8x1xf32> to vector<8x32xf32>
    %122 = arith.subf %112, %121 : vector<8x32xf32>
    %123 = arith.mulf %122, %122 : vector<8x32xf32>
    %cst_73 = arith.constant dense<0.000000e+00> : vector<8xf32>
    %124 = vector.multi_reduction <add>, %123, %cst_73 [1] : vector<8x32xf32> to vector<8xf32>
    %125 = vector.shape_cast %124 : vector<8xf32> to vector<8x1xf32>
    %cst_74 = arith.constant 0.0322580636 : f32
    %126 = vector.broadcast %cst_74 : f32 to vector<8x1xf32>
    %127 = arith.mulf %125, %126 : vector<8x1xf32>
    %128 = math.sqrt %127 : vector<8x1xf32>
    %cst_75 = arith.constant 9.99999997E-7 : f32
    %129 = vector.broadcast %cst_75 : f32 to vector<8x1xf32>
    %130 = arith.addf %128, %129 : vector<8x1xf32>
    %131 = tpu.reciprocal %130 : vector<8x1xf32> -> vector<8x1xf32>
    %132 = vector.broadcast %131 : vector<8x1xf32> to vector<8x32xf32>
    %133 = arith.mulf %122, %132 : vector<8x32xf32>
    %134 = vector.broadcast %114 : vector<1x32xf32> to vector<8x32xf32>
    %135 = arith.mulf %134, %133 : vector<8x32xf32>
    %136 = vector.broadcast %116 : vector<1x32xf32> to vector<8x32xf32>
    %137 = arith.addf %135, %136 : vector<8x32xf32>
    %138 = vector.shape_cast %137 : vector<8x32xf32> to vector<1x8x32xf32>
    %139 = vector.shape_cast %138 : vector<1x8x32xf32> to vector<1x8x32xf32>
    %140 = vector.broadcast %139 : vector<1x8x32xf32> to vector<12x8x32xf32>
    %c1_76 = arith.constant 1 : index
    %c0_77 = arith.constant 0 : index
    %c0_78 = arith.constant 0 : index
    %c0_79 = arith.constant 0 : index
    %141 = vector.load %arg5[%c1_76, %c0_77, %c0_78, %c0_79] : memref<2x12x32x8xf32, #tpu.memory_space<vmem>>, vector<1x12x32x8xf32>
    %142 = vector.shape_cast %141 : vector<1x12x32x8xf32> to vector<12x32x8xf32>
    "tpu.trace_start"() <{level = 10 : i32, message = "bsd,bdf->bsf"}> : () -> ()
    %cst_80 = arith.constant dense<0.000000e+00> : vector<12x8x8xf32>
    %143 = tpu.matmul %140, %142, %cst_80 {dimension_numbers = #tpu.dot_dimension_numbers<[2], [1], [1], [2], [0, 0, 0, 1, 1, 2], [0], [0]>} : vector<12x8x32xf32>, vector<12x32x8xf32>, vector<12x8x8xf32> -> vector<12x8x8xf32>
    "tpu.trace_stop"() : () -> ()
    %c1_81 = arith.constant 1 : index
    %c0_82 = arith.constant 0 : index
    %c0_83 = arith.constant 0 : index
    %c0_84 = arith.constant 0 : index
    %144 = vector.load %arg6[%c1_81, %c0_82, %c0_83, %c0_84] : memref<2x12x1x8xf32, #tpu.memory_space<vmem>>, vector<1x12x1x8xf32>
    %145 = vector.shape_cast %144 : vector<1x12x1x8xf32> to vector<12x1x8xf32>
    %146 = vector.broadcast %145 : vector<12x1x8xf32> to vector<12x8x8xf32>
    %147 = arith.addf %143, %146 : vector<12x8x8xf32>
    %148 = vector.extract_strided_slice %147 {offsets = [0, 0, 0], sizes = [4, 8, 8], strides = [1, 1, 1]} : vector<12x8x8xf32> to vector<4x8x8xf32>
    %149 = vector.extract_strided_slice %147 {offsets = [4, 0, 0], sizes = [4, 8, 8], strides = [1, 1, 1]} : vector<12x8x8xf32> to vector<4x8x8xf32>
    %150 = vector.extract_strided_slice %147 {offsets = [8, 0, 0], sizes = [4, 8, 8], strides = [1, 1, 1]} : vector<12x8x8xf32> to vector<4x8x8xf32>
    "tpu.trace_start"() <{level = 10 : i32, message = "hqd,hkd->hqk"}> : () -> ()
    %cst_85 = arith.constant dense<0.000000e+00> : vector<4x8x8xf32>
    %151 = tpu.matmul %148, %149, %cst_85 {dimension_numbers = #tpu.dot_dimension_numbers<[2], [2], [1], [1], [0, 0, 0, 1, 1, 1], [0], [0]>} : vector<4x8x8xf32>, vector<4x8x8xf32>, vector<4x8x8xf32> -> vector<4x8x8xf32>
    "tpu.trace_stop"() : () -> ()
    %152 = vector.shape_cast %8 : vector<1x8xf32> to vector<1x1x8xf32>
    %153 = vector.broadcast %152 : vector<1x1x8xf32> to vector<4x8x8xf32>
    %154 = arith.addf %151, %153 : vector<4x8x8xf32>
    %cst_86 = arith.constant dense<0xFF800000> : vector<4x8xf32>
    %155 = vector.multi_reduction <maximumf>, %154, %cst_86 [2] : vector<4x8x8xf32> to vector<4x8xf32>
    %156 = vector.shape_cast %155 : vector<4x8xf32> to vector<4x8x1xf32>
    %157 = vector.broadcast %156 : vector<4x8x1xf32> to vector<4x8x8xf32>
    %158 = arith.subf %154, %157 : vector<4x8x8xf32>
    %159 = math.exp %158 : vector<4x8x8xf32>
    %cst_87 = arith.constant dense<0.000000e+00> : vector<4x8xf32>
    %160 = vector.multi_reduction <add>, %159, %cst_87 [2] : vector<4x8x8xf32> to vector<4x8xf32>
    %161 = vector.shape_cast %160 : vector<4x8xf32> to vector<4x8x1xf32>
    %162 = tpu.reciprocal %161 : vector<4x8x1xf32> -> vector<4x8x1xf32>
    %163 = vector.broadcast %162 : vector<4x8x1xf32> to vector<4x8x8xf32>
    %164 = arith.mulf %159, %163 : vector<4x8x8xf32>
    "tpu.trace_start"() <{level = 10 : i32, message = "hqk,hkd->hqd"}> : () -> ()
    %cst_88 = arith.constant dense<0.000000e+00> : vector<4x8x8xf32>
    %165 = tpu.matmul %164, %150, %cst_88 {dimension_numbers = #tpu.dot_dimension_numbers<[2], [1], [1], [2], [0, 0, 0, 1, 1, 2], [0], [0]>} : vector<4x8x8xf32>, vector<4x8x8xf32>, vector<4x8x8xf32> -> vector<4x8x8xf32>
    "tpu.trace_stop"() : () -> ()
    %c1_89 = arith.constant 1 : index
    %c0_90 = arith.constant 0 : index
    %c0_91 = arith.constant 0 : index
    %c0_92 = arith.constant 0 : index
    %166 = vector.load %arg7[%c1_89, %c0_90, %c0_91, %c0_92] : memref<2x4x8x32xf32, #tpu.memory_space<vmem>>, vector<1x4x8x32xf32>
    %167 = vector.shape_cast %166 : vector<1x4x8x32xf32> to vector<4x8x32xf32>
    "tpu.trace_start"() <{level = 10 : i32, message = "hsd,hdf->hsf"}> : () -> ()
    %cst_93 = arith.constant dense<0.000000e+00> : vector<4x8x32xf32>
    %168 = tpu.matmul %165, %167, %cst_93 {dimension_numbers = #tpu.dot_dimension_numbers<[2], [1], [1], [2], [0, 0, 0, 1, 1, 2], [0], [0]>} : vector<4x8x8xf32>, vector<4x8x32xf32>, vector<4x8x32xf32> -> vector<4x8x32xf32>
    "tpu.trace_stop"() : () -> ()
    %cst_94 = arith.constant dense<0.000000e+00> : vector<8x32xf32>
    %169 = vector.multi_reduction <add>, %168, %cst_94 [0] : vector<4x8x32xf32> to vector<8x32xf32>
    %c1_95 = arith.constant 1 : index
    %c0_96 = arith.constant 0 : index
    %c0_97 = arith.constant 0 : index
    %170 = vector.load %arg8[%c1_95, %c0_96, %c0_97] : memref<2x1x32xf32, #tpu.memory_space<vmem>>, vector<1x1x32xf32>
    %171 = vector.shape_cast %170 : vector<1x1x32xf32> to vector<1x32xf32>
    %172 = vector.broadcast %171 : vector<1x32xf32> to vector<8x32xf32>
    %173 = arith.addf %169, %172 : vector<8x32xf32>
    %174 = arith.addf %112, %173 : vector<8x32xf32>
    %c1_98 = arith.constant 1 : index
    %c0_99 = arith.constant 0 : index
    %c0_100 = arith.constant 0 : index
    %175 = vector.load %arg9[%c1_98, %c0_99, %c0_100] : memref<2x1x32xf32, #tpu.memory_space<vmem>>, vector<1x1x32xf32>
    %176 = vector.shape_cast %175 : vector<1x1x32xf32> to vector<1x32xf32>
    %c1_101 = arith.constant 1 : index
    %c0_102 = arith.constant 0 : index
    %c0_103 = arith.constant 0 : index
    %177 = vector.load %arg10[%c1_101, %c0_102, %c0_103] : memref<2x1x32xf32, #tpu.memory_space<vmem>>, vector<1x1x32xf32>
    %178 = vector.shape_cast %177 : vector<1x1x32xf32> to vector<1x32xf32>
    %cst_104 = arith.constant dense<0.000000e+00> : vector<8xf32>
    %179 = vector.multi_reduction <add>, %174, %cst_104 [1] : vector<8x32xf32> to vector<8xf32>
    %180 = vector.shape_cast %179 : vector<8xf32> to vector<8x1xf32>
    %cst_105 = arith.constant 3.200000e+01 : f32
    %181 = vector.broadcast %cst_105 : f32 to vector<8x1xf32>
    %182 = arith.divf %180, %181 : vector<8x1xf32>
    %183 = vector.broadcast %182 : vector<8x1xf32> to vector<8x32xf32>
    %184 = arith.subf %174, %183 : vector<8x32xf32>
    %185 = arith.mulf %184, %184 : vector<8x32xf32>
    %cst_106 = arith.constant dense<0.000000e+00> : vector<8xf32>
    %186 = vector.multi_reduction <add>, %185, %cst_106 [1] : vector<8x32xf32> to vector<8xf32>
    %187 = vector.shape_cast %186 : vector<8xf32> to vector<8x1xf32>
    %cst_107 = arith.constant 0.0322580636 : f32
    %188 = vector.broadcast %cst_107 : f32 to vector<8x1xf32>
    %189 = arith.mulf %187, %188 : vector<8x1xf32>
    %190 = math.sqrt %189 : vector<8x1xf32>
    %cst_108 = arith.constant 9.99999997E-7 : f32
    %191 = vector.broadcast %cst_108 : f32 to vector<8x1xf32>
    %192 = arith.addf %190, %191 : vector<8x1xf32>
    %193 = tpu.reciprocal %192 : vector<8x1xf32> -> vector<8x1xf32>
    %194 = vector.broadcast %193 : vector<8x1xf32> to vector<8x32xf32>
    %195 = arith.mulf %184, %194 : vector<8x32xf32>
    %196 = vector.broadcast %176 : vector<1x32xf32> to vector<8x32xf32>
    %197 = arith.mulf %196, %195 : vector<8x32xf32>
    %198 = vector.broadcast %178 : vector<1x32xf32> to vector<8x32xf32>
    %199 = arith.addf %197, %198 : vector<8x32xf32>
    %c1_109 = arith.constant 1 : index
    %c0_110 = arith.constant 0 : index
    %c0_111 = arith.constant 0 : index
    %200 = vector.load %arg11[%c1_109, %c0_110, %c0_111] : memref<2x32x64xf32, #tpu.memory_space<vmem>>, vector<1x32x64xf32>
    %201 = vector.shape_cast %200 : vector<1x32x64xf32> to vector<32x64xf32>
    %cst_112 = arith.constant dense<0.000000e+00> : vector<8x64xf32>
    %202 = tpu.matmul %199, %201, %cst_112 {dimension_numbers = #tpu.dot_dimension_numbers<[1], [0], [0], [1], [0, 0, 1, 1], [], []>} : vector<8x32xf32>, vector<32x64xf32>, vector<8x64xf32> -> vector<8x64xf32>
    %c1_113 = arith.constant 1 : index
    %c0_114 = arith.constant 0 : index
    %c0_115 = arith.constant 0 : index
    %203 = vector.load %arg12[%c1_113, %c0_114, %c0_115] : memref<2x1x64xf32, #tpu.memory_space<vmem>>, vector<1x1x64xf32>
    %204 = vector.shape_cast %203 : vector<1x1x64xf32> to vector<1x64xf32>
    %205 = vector.broadcast %204 : vector<1x64xf32> to vector<8x64xf32>
    %206 = arith.addf %202, %205 : vector<8x64xf32>
    %cst_116 = arith.constant 0.000000e+00 : f32
    %207 = vector.broadcast %cst_116 : f32 to vector<8x64xf32>
    %208 = arith.maximumf %206, %207 : vector<8x64xf32>
    %c1_117 = arith.constant 1 : index
    %c0_118 = arith.constant 0 : index
    %c0_119 = arith.constant 0 : index
    %209 = vector.load %arg13[%c1_117, %c0_118, %c0_119] : memref<2x64x32xf32, #tpu.memory_space<vmem>>, vector<1x64x32xf32>
    %210 = vector.shape_cast %209 : vector<1x64x32xf32> to vector<64x32xf32>
    %cst_120 = arith.constant dense<0.000000e+00> : vector<8x32xf32>
    %211 = tpu.matmul %208, %210, %cst_120 {dimension_numbers = #tpu.dot_dimension_numbers<[1], [0], [0], [1], [0, 0, 1, 1], [], []>} : vector<8x64xf32>, vector<64x32xf32>, vector<8x32xf32> -> vector<8x32xf32>
    %212 = arith.addf %174, %211 : vector<8x32xf32>
    %c1_121 = arith.constant 1 : index
    %c0_122 = arith.constant 0 : index
    %c0_123 = arith.constant 0 : index
    %213 = vector.load %arg14[%c1_121, %c0_122, %c0_123] : memref<2x1x32xf32, #tpu.memory_space<vmem>>, vector<1x1x32xf32>
    %214 = vector.shape_cast %213 : vector<1x1x32xf32> to vector<1x32xf32>
    %215 = vector.broadcast %214 : vector<1x32xf32> to vector<8x32xf32>
    %216 = arith.addf %212, %215 : vector<8x32xf32>
    %c0_124 = arith.constant 0 : index
    %c0_125 = arith.constant 0 : index
    %217 = vector.load %arg15[%c0_124, %c0_125] : memref<1x32xf32, #tpu.memory_space<vmem>>, vector<1x32xf32>
    %c0_126 = arith.constant 0 : index
    %c0_127 = arith.constant 0 : index
    %218 = vector.load %arg16[%c0_126, %c0_127] : memref<1x32xf32, #tpu.memory_space<vmem>>, vector<1x32xf32>
    %cst_128 = arith.constant dense<0.000000e+00> : vector<8xf32>
    %219 = vector.multi_reduction <add>, %216, %cst_128 [1] : vector<8x32xf32> to vector<8xf32>
    %220 = vector.shape_cast %219 : vector<8xf32> to vector<8x1xf32>
    %cst_129 = arith.constant 3.200000e+01 : f32
    %221 = vector.broadcast %cst_129 : f32 to vector<8x1xf32>
    %222 = arith.divf %220, %221 : vector<8x1xf32>
    %223 = vector.broadcast %222 : vector<8x1xf32> to vector<8x32xf32>
    %224 = arith.subf %216, %223 : vector<8x32xf32>
    %225 = arith.mulf %224, %224 : vector<8x32xf32>
    %cst_130 = arith.constant dense<0.000000e+00> : vector<8xf32>
    %226 = vector.multi_reduction <add>, %225, %cst_130 [1] : vector<8x32xf32> to vector<8xf32>
    %227 = vector.shape_cast %226 : vector<8xf32> to vector<8x1xf32>
    %cst_131 = arith.constant 0.0322580636 : f32
    %228 = vector.broadcast %cst_131 : f32 to vector<8x1xf32>
    %229 = arith.mulf %227, %228 : vector<8x1xf32>
    %230 = math.sqrt %229 : vector<8x1xf32>
    %cst_132 = arith.constant 9.99999997E-7 : f32
    %231 = vector.broadcast %cst_132 : f32 to vector<8x1xf32>
    %232 = arith.addf %230, %231 : vector<8x1xf32>
    %233 = tpu.reciprocal %232 : vector<8x1xf32> -> vector<8x1xf32>
    %234 = vector.broadcast %233 : vector<8x1xf32> to vector<8x32xf32>
    %235 = arith.mulf %224, %234 : vector<8x32xf32>
    %236 = vector.broadcast %217 : vector<1x32xf32> to vector<8x32xf32>
    %237 = arith.mulf %236, %235 : vector<8x32xf32>
    %238 = vector.broadcast %218 : vector<1x32xf32> to vector<8x32xf32>
    %239 = arith.addf %237, %238 : vector<8x32xf32>
    %c0_133 = arith.constant 0 : index
    %c0_134 = arith.constant 0 : index
    %c0_135 = arith.constant 0 : index
    %240 = vector.load %arg17[%c0_133, %c0_134, %c0_135] : memref<1x8x32xf32, #tpu.memory_space<vmem>>, vector<1x8x32xf32>
    %241 = vector.shape_cast %240 : vector<1x8x32xf32> to vector<8x32xf32>
    %242 = vector.shape_cast %239 : vector<8x32xf32> to vector<1x8x32xf32>
    tpu.vector_store %arg17[%c0_133, %c0_134, %c0_135], %242 {strides = array<i32>} : memref<1x8x32xf32, #tpu.memory_space<vmem>>, vector<1x8x32xf32>,
    return
  }
  func.func @transform_0(%arg0: i32) -> (i32, i32, i32) {
    %c0_i32 = arith.constant 0 : i32
    %c0_i32_0 = arith.constant 0 : i32
    %c0_i32_1 = arith.constant 0 : i32
    return %arg0, %c0_i32, %c0_i32_0 : i32, i32, i32
  }
  func.func @transform_1(%arg0: i32) -> (i32, i32, i32) {
    %c0_i32 = arith.constant 0 : i32
    %c0_i32_0 = arith.constant 0 : i32
    %c0_i32_1 = arith.constant 0 : i32
    return %arg0, %c0_i32, %c0_i32_0 : i32, i32, i32
  }
  func.func @transform_2(%arg0: i32) -> (i32, i32, i32) {
    %c0_i32 = arith.constant 0 : i32
    %c0_i32_0 = arith.constant 0 : i32
    %c0_i32_1 = arith.constant 0 : i32
    %c0_i32_2 = arith.constant 0 : i32
    return %c0_i32, %c0_i32_0, %c0_i32_1 : i32, i32, i32
  }
  func.func @transform_3(%arg0: i32) -> (i32, i32, i32) {
    %c0_i32 = arith.constant 0 : i32
    %c0_i32_0 = arith.constant 0 : i32
    %c0_i32_1 = arith.constant 0 : i32
    %c0_i32_2 = arith.constant 0 : i32
    return %c0_i32, %c0_i32_0, %c0_i32_1 : i32, i32, i32
  }
  func.func @transform_4(%arg0: i32) -> (i32, i32, i32, i32) {
    %c0_i32 = arith.constant 0 : i32
    %c0_i32_0 = arith.constant 0 : i32
    %c0_i32_1 = arith.constant 0 : i32
    %c0_i32_2 = arith.constant 0 : i32
    %c0_i32_3 = arith.constant 0 : i32
    return %c0_i32, %c0_i32_0, %c0_i32_1, %c0_i32_2 : i32, i32, i32, i32
  }
  func.func @transform_5(%arg0: i32) -> (i32, i32, i32, i32) {
    %c0_i32 = arith.constant 0 : i32
    %c0_i32_0 = arith.constant 0 : i32
    %c0_i32_1 = arith.constant 0 : i32
    %c0_i32_2 = arith.constant 0 : i32
    %c0_i32_3 = arith.constant 0 : i32
    return %c0_i32, %c0_i32_0, %c0_i32_1, %c0_i32_2 : i32, i32, i32, i32
  }
  func.func @transform_6(%arg0: i32) -> (i32, i32, i32, i32) {
    %c0_i32 = arith.constant 0 : i32
    %c0_i32_0 = arith.constant 0 : i32
    %c0_i32_1 = arith.constant 0 : i32
    %c0_i32_2 = arith.constant 0 : i32
    %c0_i32_3 = arith.constant 0 : i32
    return %c0_i32, %c0_i32_0, %c0_i32_1, %c0_i32_2 : i32, i32, i32, i32
  }
  func.func @transform_7(%arg0: i32) -> (i32, i32, i32) {
    %c0_i32 = arith.constant 0 : i32
    %c0_i32_0 = arith.constant 0 : i32
    %c0_i32_1 = arith.constant 0 : i32
    %c0_i32_2 = arith.constant 0 : i32
    return %c0_i32, %c0_i32_0, %c0_i32_1 : i32, i32, i32
  }
  func.func @transform_8(%arg0: i32) -> (i32, i32, i32) {
    %c0_i32 = arith.constant 0 : i32
    %c0_i32_0 = arith.constant 0 : i32
    %c0_i32_1 = arith.constant 0 : i32
    %c0_i32_2 = arith.constant 0 : i32
    return %c0_i32, %c0_i32_0, %c0_i32_1 : i32, i32, i32
  }
  func.func @transform_9(%arg0: i32) -> (i32, i32, i32) {
    %c0_i32 = arith.constant 0 : i32
    %c0_i32_0 = arith.constant 0 : i32
    %c0_i32_1 = arith.constant 0 : i32
    %c0_i32_2 = arith.constant 0 : i32
    return %c0_i32, %c0_i32_0, %c0_i32_1 : i32, i32, i32
  }
  func.func @transform_10(%arg0: i32) -> (i32, i32, i32) {
    %c0_i32 = arith.constant 0 : i32
    %c0_i32_0 = arith.constant 0 : i32
    %c0_i32_1 = arith.constant 0 : i32
    %c0_i32_2 = arith.constant 0 : i32
    return %c0_i32, %c0_i32_0, %c0_i32_1 : i32, i32, i32
  }
  func.func @transform_11(%arg0: i32) -> (i32, i32, i32) {
    %c0_i32 = arith.constant 0 : i32
    %c0_i32_0 = arith.constant 0 : i32
    %c0_i32_1 = arith.constant 0 : i32
    %c0_i32_2 = arith.constant 0 : i32
    return %c0_i32, %c0_i32_0, %c0_i32_1 : i32, i32, i32
  }
  func.func @transform_12(%arg0: i32) -> (i32, i32, i32) {
    %c0_i32 = arith.constant 0 : i32
    %c0_i32_0 = arith.constant 0 : i32
    %c0_i32_1 = arith.constant 0 : i32
    %c0_i32_2 = arith.constant 0 : i32
    return %c0_i32, %c0_i32_0, %c0_i32_1 : i32, i32, i32
  }
  func.func @transform_13(%arg0: i32) -> (i32, i32, i32) {
    %c0_i32 = arith.constant 0 : i32
    %c0_i32_0 = arith.constant 0 : i32
    %c0_i32_1 = arith.constant 0 : i32
    %c0_i32_2 = arith.constant 0 : i32
    return %c0_i32, %c0_i32_0, %c0_i32_1 : i32, i32, i32
  }
  func.func @transform_14(%arg0: i32) -> (i32, i32) {
    %c0_i32 = arith.constant 0 : i32
    %c0_i32_0 = arith.constant 0 : i32
    %c0_i32_1 = arith.constant 0 : i32
    return %c0_i32, %c0_i32_0 : i32, i32
  }
  func.func @transform_15(%arg0: i32) -> (i32, i32) {
    %c0_i32 = arith.constant 0 : i32
    %c0_i32_0 = arith.constant 0 : i32
    %c0_i32_1 = arith.constant 0 : i32
    return %c0_i32, %c0_i32_0 : i32, i32
  }
  func.func @transform_16(%arg0: i32) -> (i32, i32, i32) {
    %c0_i32 = arith.constant 0 : i32
    %c0_i32_0 = arith.constant 0 : i32
    %c0_i32_1 = arith.constant 0 : i32
    return %arg0, %c0_i32, %c0_i32_0 : i32, i32, i32
  }
}

</mosaic_0001>

<llo_original>
// kernel: tpu_custom_call.1
$region0: #{tpu_custom_call.1}
  #allocation0 [shape = 'u32[]', space=smem, size = 0x4, offset = 0x4, fixed_abs, tag = 'smem constant byte address 0x4 - core index']
  #allocation1 [shape = 'u32[144,128]{1,0:T(1,128)}', space=vmem, size = 0x12000, scoped, tag = 'internal scratch']
  %s0 = inlined_call_operand.vmem [shape: f32[2,8,32], index: 0, kind: input, shape index: {}]
  %s1 = inlined_call_operand.vmem [shape: f32[2,1,8], index: 1, kind: input, shape index: {}]
  %s2 = inlined_call_operand.vmem [shape: f32[2,1,32], index: 2, kind: input, shape index: {}]
  %s3 = inlined_call_operand.vmem [shape: f32[2,1,32], index: 3, kind: input, shape index: {}]
  %s4 = inlined_call_operand.vmem [shape: f32[2,12,32,8], index: 4, kind: input, shape index: {}]
  %s5 = inlined_call_operand.vmem [shape: f32[2,12,1,8], index: 5, kind: input, shape index: {}]
  %s6 = inlined_call_operand.vmem [shape: f32[2,4,8,32], index: 6, kind: input, shape index: {}]
  %s7 = inlined_call_operand.vmem [shape: f32[2,1,32], index: 7, kind: input, shape index: {}]
  %s8 = inlined_call_operand.vmem [shape: f32[2,1,32], index: 8, kind: input, shape index: {}]
  %s9 = inlined_call_operand.vmem [shape: f32[2,1,32], index: 9, kind: input, shape index: {}]
  %s10 = inlined_call_operand.vmem [shape: f32[2,32,64], index: 10, kind: input, shape index: {}]
  %s11 = inlined_call_operand.vmem [shape: f32[2,1,64], index: 11, kind: input, shape index: {}]
  %s12 = inlined_call_operand.vmem [shape: f32[2,64,32], index: 12, kind: input, shape index: {}]
  %s13 = inlined_call_operand.vmem [shape: f32[2,1,32], index: 13, kind: input, shape index: {}]
  %s14 = inlined_call_operand.vmem [shape: f32[1,32], index: 14, kind: input, shape index: {}]
  %s15 = inlined_call_operand.vmem [shape: f32[1,32], index: 15, kind: input, shape index: {}]
  %s16 = inlined_call_operand.hbm [shape: f32[2,8,32], index: 16, kind: output, shape index: {}]
  %s17 = sld [smem:[#allocation0]]
  $region97: #{tpu_custom_call.1} parent=0
    _
  %s19 = ssub.s32 1, %s17
  %s20 = scalar_select 0, %s19, %s17
  $region1: #{tpu_custom_call.1} parent=0
    #allocation2 [shape = 'u8[8192]{0}', space=vmem, size = 0x2000, scoped, tag = 'output window, operand 0']
    #allocation3 [shape = 's32[2]{0}', space=sflag, size = 0x8, scoped, tag = 'scoped memory for tpu_custom_call.1']
    %21 = vsyncpa [#allocation3], 0
    %s22 = scalar_lea.sflag [#allocation3], 1
    %23 = vsyncpa %s22, 0
    loop: start=0, step=1, limit=4
    $region2: #{tpu_custom_call.1} parent=1 // loop_pre_header
      _
    $region3: #{tpu_custom_call.1} parent=1 // loop_header
      %s25 = sphi 0, %s29
      %p26 = scmp.ge.s32.totalorder %s25, 4
      %s35 = sphi 0, %s37
      %s38 = sphi 0, %s35
      %s39 = sphi 0, %s38
      %s55 = sphi 0, %s39
      %s61 = sphi 0, %s63
      %s64 = sphi 0, %s61
      %s65 = sphi 0, %s64
      %s81 = sphi 0, %s65
      %s85 = sphi 0, %s85
      %s87 = sphi 0, %s85
      %s88 = sphi 0, %s87
      %s102 = sphi 0, %s88
      %s106 = sphi 0, %s106
      %s108 = sphi 0, %s106
      %s109 = sphi 0, %s108
      %s123 = sphi 0, %s109
      %s127 = sphi 0, %s127
      %s129 = sphi 0, %s127
      %s130 = sphi 0, %s129
      %s144 = sphi 0, %s130
      %s148 = sphi 0, %s148
      %s150 = sphi 0, %s148
      %s151 = sphi 0, %s150
      %s165 = sphi 0, %s151
      %s169 = sphi 0, %s169
      %s171 = sphi 0, %s169
      %s172 = sphi 0, %s171
      %s186 = sphi 0, %s172
      %s190 = sphi 0, %s190
      %s192 = sphi 0, %s190
      %s193 = sphi 0, %s192
      %s207 = sphi 0, %s193
      %s211 = sphi 0, %s211
      %s213 = sphi 0, %s211
      %s214 = sphi 0, %s213
      %s228 = sphi 0, %s214
      %s232 = sphi 0, %s232
      %s234 = sphi 0, %s232
      %s235 = sphi 0, %s234
      %s249 = sphi 0, %s235
      %s253 = sphi 0, %s253
      %s255 = sphi 0, %s253
      %s256 = sphi 0, %s255
      %s270 = sphi 0, %s256
      %s274 = sphi 0, %s274
      %s276 = sphi 0, %s274
      %s277 = sphi 0, %s276
      %s291 = sphi 0, %s277
      %s295 = sphi 0, %s295
      %s297 = sphi 0, %s295
      %s298 = sphi 0, %s297
      %s312 = sphi 0, %s298
      %s316 = sphi 0, %s316
      %s318 = sphi 0, %s316
      %s319 = sphi 0, %s318
      %s333 = sphi 0, %s319
      %s337 = sphi 0, %s337
      %s339 = sphi 0, %s337
      %s340 = sphi 0, %s339
      %s354 = sphi 0, %s340
      %s358 = sphi 0, %s358
      %s360 = sphi 0, %s358
      %s361 = sphi 0, %s360
      %s375 = sphi 0, %s361
      %s381 = sphi 0, %s383
      %s384 = sphi 0, %s381
      %s385 = sphi 0, %s384
      %s401 = sphi 0, %s385
    $region4: #{tpu_custom_call.1} parent=1 // loop_header_branch
      %28 = sbr.rel (%p26) target = $region8
    $region5: #{tpu_custom_call.1} parent=1 // loop_body
      %s30 = ssub.s32 %s25, 1
      %s31 = ssub.s32 %s25, 2
      %s32 = sadd.s32 %s25, 1
      %s33 = ssub.s32 %s25, %s32
      %p34 = scmp.eq.s32.totalorder %s33, 0
      %s36 = sadd.s32 %s35, 1
      %s37 = scalar_select %p34, %s35, %s36
      %p40 = pneg %p34
      %p41 = scmp.eq.s32.totalorder %s25, 1
      %p42 = por %p40, %p41
      %p43 = scmp.ne.s32.totalorder %s35, %s38
      %p44 = scmp.eq.s32.totalorder %s25, 0
      %p45 = por %p43, %p44
      %p46 = scmp.ne.s32.totalorder %s35, %s38
      %p47 = scmp.eq.s32.totalorder %s30, 1
      %p48 = por %p46, %p47
      %p49 = scmp.ne.s32.totalorder %s38, %s39
      %p50 = scmp.eq.s32.totalorder %s30, 0
      %p51 = por %p49, %p50
      %p52 = scmp.ne.s32.totalorder %s38, %s39
      %p53 = scmp.eq.s32.totalorder %s31, 1
      %p54 = por %p52, %p53
      %p56 = scmp.ne.s32.totalorder %s39, %s55
      %p57 = scmp.eq.s32.totalorder %s31, 0
      %p58 = por %p56, %p57
      %s59 = ssub.s32 %s25, %s32
      %p60 = scmp.eq.s32.totalorder %s59, 0
      %s62 = sadd.s32 %s61, 1
      %s63 = scalar_select %p60, %s61, %s62
      %p66 = pneg %p60
      %p67 = scmp.eq.s32.totalorder %s25, 1
      %p68 = por %p66, %p67
      %p69 = scmp.ne.s32.totalorder %s61, %s64
      %p70 = scmp.eq.s32.totalorder %s25, 0
      %p71 = por %p69, %p70
      %p72 = scmp.ne.s32.totalorder %s61, %s64
      %p73 = scmp.eq.s32.totalorder %s30, 1
      %p74 = por %p72, %p73
      %p75 = scmp.ne.s32.totalorder %s64, %s65
      %p76 = scmp.eq.s32.totalorder %s30, 0
      %p77 = por %p75, %p76
      %p78 = scmp.ne.s32.totalorder %s64, %s65
      %p79 = scmp.eq.s32.totalorder %s31, 1
      %p80 = por %p78, %p79
      %p82 = scmp.ne.s32.totalorder %s65, %s81
      %p83 = scmp.eq.s32.totalorder %s31, 0
      %p84 = por %p82, %p83
      %s86 = sadd.s32 %s85, 1
      %p89 = scmp.eq.s32.totalorder %s25, 1
      %p90 = scmp.ne.s32.totalorder %s85, %s87
      %p91 = scmp.eq.s32.totalorder %s25, 0
      %p92 = por %p90, %p91
      %p93 = scmp.ne.s32.totalorder %s85, %s87
      %p94 = scmp.eq.s32.totalorder %s30, 1
      %p95 = por %p93, %p94
      %p96 = scmp.ne.s32.totalorder %s87, %s88
      %p97 = scmp.eq.s32.totalorder %s30, 0
      %p98 = por %p96, %p97
      %p99 = scmp.ne.s32.totalorder %s87, %s88
      %p100 = scmp.eq.s32.totalorder %s31, 1
      %p101 = por %p99, %p100
      %p103 = scmp.ne.s32.totalorder %s88, %s102
      %p104 = scmp.eq.s32.totalorder %s31, 0
      %p105 = por %p103, %p104
      %s107 = sadd.s32 %s106, 1
      %p110 = scmp.eq.s32.totalorder %s25, 1
      %p111 = scmp.ne.s32.totalorder %s106, %s108
      %p112 = scmp.eq.s32.totalorder %s25, 0
      %p113 = por %p111, %p112
      %p114 = scmp.ne.s32.totalorder %s106, %s108
      %p115 = scmp.eq.s32.totalorder %s30, 1
      %p116 = por %p114, %p115
      %p117 = scmp.ne.s32.totalorder %s108, %s109
      %p118 = scmp.eq.s32.totalorder %s30, 0
      %p119 = por %p117, %p118
      %p120 = scmp.ne.s32.totalorder %s108, %s109
      %p121 = scmp.eq.s32.totalorder %s31, 1
      %p122 = por %p120, %p121
      %p124 = scmp.ne.s32.totalorder %s109, %s123
      %p125 = scmp.eq.s32.totalorder %s31, 0
      %p126 = por %p124, %p125
      %s128 = sadd.s32 %s127, 1
      %p131 = scmp.eq.s32.totalorder %s25, 1
      %p132 = scmp.ne.s32.totalorder %s127, %s129
      %p133 = scmp.eq.s32.totalorder %s25, 0
      %p134 = por %p132, %p133
      %p135 = scmp.ne.s32.totalorder %s127, %s129
      %p136 = scmp.eq.s32.totalorder %s30, 1
      %p137 = por %p135, %p136
      %p138 = scmp.ne.s32.totalorder %s129, %s130
      %p139 = scmp.eq.s32.totalorder %s30, 0
      %p140 = por %p138, %p139
      %p141 = scmp.ne.s32.totalorder %s129, %s130
      %p142 = scmp.eq.s32.totalorder %s31, 1
      %p143 = por %p141, %p142
      %p145 = scmp.ne.s32.totalorder %s130, %s144
      %p146 = scmp.eq.s32.totalorder %s31, 0
      %p147 = por %p145, %p146
      %s149 = sadd.s32 %s148, 1
      %p152 = scmp.eq.s32.totalorder %s25, 1
      %p153 = scmp.ne.s32.totalorder %s148, %s150
      %p154 = scmp.eq.s32.totalorder %s25, 0
      %p155 = por %p153, %p154
      %p156 = scmp.ne.s32.totalorder %s148, %s150
      %p157 = scmp.eq.s32.totalorder %s30, 1
      %p158 = por %p156, %p157
      %p159 = scmp.ne.s32.totalorder %s150, %s151
      %p160 = scmp.eq.s32.totalorder %s30, 0
      %p161 = por %p159, %p160
      %p162 = scmp.ne.s32.totalorder %s150, %s151
      %p163 = scmp.eq.s32.totalorder %s31, 1
      %p164 = por %p162, %p163
      %p166 = scmp.ne.s32.totalorder %s151, %s165
      %p167 = scmp.eq.s32.totalorder %s31, 0
      %p168 = por %p166, %p167
      %s170 = sadd.s32 %s169, 1
      %p173 = scmp.eq.s32.totalorder %s25, 1
      %p174 = scmp.ne.s32.totalorder %s169, %s171
      %p175 = scmp.eq.s32.totalorder %s25, 0
      %p176 = por %p174, %p175
      %p177 = scmp.ne.s32.totalorder %s169, %s171
      %p178 = scmp.eq.s32.totalorder %s30, 1
      %p179 = por %p177, %p178
      %p180 = scmp.ne.s32.totalorder %s171, %s172
      %p181 = scmp.eq.s32.totalorder %s30, 0
      %p182 = por %p180, %p181
      %p183 = scmp.ne.s32.totalorder %s171, %s172
      %p184 = scmp.eq.s32.totalorder %s31, 1
      %p185 = por %p183, %p184
      %p187 = scmp.ne.s32.totalorder %s172, %s186
      %p188 = scmp.eq.s32.totalorder %s31, 0
      %p189 = por %p187, %p188
      %s191 = sadd.s32 %s190, 1
      %p194 = scmp.eq.s32.totalorder %s25, 1
      %p195 = scmp.ne.s32.totalorder %s190, %s192
      %p196 = scmp.eq.s32.totalorder %s25, 0
      %p197 = por %p195, %p196
      %p198 = scmp.ne.s32.totalorder %s190, %s192
      %p199 = scmp.eq.s32.totalorder %s30, 1
      %p200 = por %p198, %p199
      %p201 = scmp.ne.s32.totalorder %s192, %s193
      %p202 = scmp.eq.s32.totalorder %s30, 0
      %p203 = por %p201, %p202
      %p204 = scmp.ne.s32.totalorder %s192, %s193
      %p205 = scmp.eq.s32.totalorder %s31, 1
      %p206 = por %p204, %p205
      %p208 = scmp.ne.s32.totalorder %s193, %s207
      %p209 = scmp.eq.s32.totalorder %s31, 0
      %p210 = por %p208, %p209
      %s212 = sadd.s32 %s211, 1
      %p215 = scmp.eq.s32.totalorder %s25, 1
      %p216 = scmp.ne.s32.totalorder %s211, %s213
      %p217 = scmp.eq.s32.totalorder %s25, 0
      %p218 = por %p216, %p217
      %p219 = scmp.ne.s32.totalorder %s211, %s213
      %p220 = scmp.eq.s32.totalorder %s30, 1
      %p221 = por %p219, %p220
      %p222 = scmp.ne.s32.totalorder %s213, %s214
      %p223 = scmp.eq.s32.totalorder %s30, 0
      %p224 = por %p222, %p223
      %p225 = scmp.ne.s32.totalorder %s213, %s214
      %p226 = scmp.eq.s32.totalorder %s31, 1
      %p227 = por %p225, %p226
      %p229 = scmp.ne.s32.totalorder %s214, %s228
      %p230 = scmp.eq.s32.totalorder %s31, 0
      %p231 = por %p229, %p230
      %s233 = sadd.s32 %s232, 1
      %p236 = scmp.eq.s32.totalorder %s25, 1
      %p237 = scmp.ne.s32.totalorder %s232, %s234
      %p238 = scmp.eq.s32.totalorder %s25, 0
      %p239 = por %p237, %p238
      %p240 = scmp.ne.s32.totalorder %s232, %s234
      %p241 = scmp.eq.s32.totalorder %s30, 1
      %p242 = por %p240, %p241
      %p243 = scmp.ne.s32.totalorder %s234, %s235
      %p244 = scmp.eq.s32.totalorder %s30, 0
      %p245 = por %p243, %p244
      %p246 = scmp.ne.s32.totalorder %s234, %s235
      %p247 = scmp.eq.s32.totalorder %s31, 1
      %p248 = por %p246, %p247
      %p250 = scmp.ne.s32.totalorder %s235, %s249
      %p251 = scmp.eq.s32.totalorder %s31, 0
      %p252 = por %p250, %p251
      %s254 = sadd.s32 %s253, 1
      %p257 = scmp.eq.s32.totalorder %s25, 1
      %p258 = scmp.ne.s32.totalorder %s253, %s255
      %p259 = scmp.eq.s32.totalorder %s25, 0
      %p260 = por %p258, %p259
      %p261 = scmp.ne.s32.totalorder %s253, %s255
      %p262 = scmp.eq.s32.totalorder %s30, 1
      %p263 = por %p261, %p262
      %p264 = scmp.ne.s32.totalorder %s255, %s256
      %p265 = scmp.eq.s32.totalorder %s30, 0
      %p266 = por %p264, %p265
      %p267 = scmp.ne.s32.totalorder %s255, %s256
      %p268 = scmp.eq.s32.totalorder %s31, 1
      %p269 = por %p267, %p268
      %p271 = scmp.ne.s32.totalorder %s256, %s270
      %p272 = scmp.eq.s32.totalorder %s31, 0
      %p273 = por %p271, %p272
      %s275 = sadd.s32 %s274, 1
      %p278 = scmp.eq.s32.totalorder %s25, 1
      %p279 = scmp.ne.s32.totalorder %s274, %s276
      %p280 = scmp.eq.s32.totalorder %s25, 0
      %p281 = por %p279, %p280
      %p282 = scmp.ne.s32.totalorder %s274, %s276
      %p283 = scmp.eq.s32.totalorder %s30, 1
      %p284 = por %p282, %p283
      %p285 = scmp.ne.s32.totalorder %s276, %s277
      %p286 = scmp.eq.s32.totalorder %s30, 0
      %p287 = por %p285, %p286
      %p288 = scmp.ne.s32.totalorder %s276, %s277
      %p289 = scmp.eq.s32.totalorder %s31, 1
      %p290 = por %p288, %p289
      %p292 = scmp.ne.s32.totalorder %s277, %s291
      %p293 = scmp.eq.s32.totalorder %s31, 0
      %p294 = por %p292, %p293
      %s296 = sadd.s32 %s295, 1
      %p299 = scmp.eq.s32.totalorder %s25, 1
      %p300 = scmp.ne.s32.totalorder %s295, %s297
      %p301 = scmp.eq.s32.totalorder %s25, 0
      %p302 = por %p300, %p301
      %p303 = scmp.ne.s32.totalorder %s295, %s297
      %p304 = scmp.eq.s32.totalorder %s30, 1
      %p305 = por %p303, %p304
      %p306 = scmp.ne.s32.totalorder %s297, %s298
      %p307 = scmp.eq.s32.totalorder %s30, 0
      %p308 = por %p306, %p307
      %p309 = scmp.ne.s32.totalorder %s297, %s298
      %p310 = scmp.eq.s32.totalorder %s31, 1
      %p311 = por %p309, %p310
      %p313 = scmp.ne.s32.totalorder %s298, %s312
      %p314 = scmp.eq.s32.totalorder %s31, 0
      %p315 = por %p313, %p314
      %s317 = sadd.s32 %s316, 1
      %p320 = scmp.eq.s32.totalorder %s25, 1
      %p321 = scmp.ne.s32.totalorder %s316, %s318
      %p322 = scmp.eq.s32.totalorder %s25, 0
      %p323 = por %p321, %p322
      %p324 = scmp.ne.s32.totalorder %s316, %s318
      %p325 = scmp.eq.s32.totalorder %s30, 1
      %p326 = por %p324, %p325
      %p327 = scmp.ne.s32.totalorder %s318, %s319
      %p328 = scmp.eq.s32.totalorder %s30, 0
      %p329 = por %p327, %p328
      %p330 = scmp.ne.s32.totalorder %s318, %s319
      %p331 = scmp.eq.s32.totalorder %s31, 1
      %p332 = por %p330, %p331
      %p334 = scmp.ne.s32.totalorder %s319, %s333
      %p335 = scmp.eq.s32.totalorder %s31, 0
      %p336 = por %p334, %p335
      %s338 = sadd.s32 %s337, 1
      %p341 = scmp.eq.s32.totalorder %s25, 1
      %p342 = scmp.ne.s32.totalorder %s337, %s339
      %p343 = scmp.eq.s32.totalorder %s25, 0
      %p344 = por %p342, %p343
      %p345 = scmp.ne.s32.totalorder %s337, %s339
      %p346 = scmp.eq.s32.totalorder %s30, 1
      %p347 = por %p345, %p346
      %p348 = scmp.ne.s32.totalorder %s339, %s340
      %p349 = scmp.eq.s32.totalorder %s30, 0
      %p350 = por %p348, %p349
      %p351 = scmp.ne.s32.totalorder %s339, %s340
      %p352 = scmp.eq.s32.totalorder %s31, 1
      %p353 = por %p351, %p352
      %p355 = scmp.ne.s32.totalorder %s340, %s354
      %p356 = scmp.eq.s32.totalorder %s31, 0
      %p357 = por %p355, %p356
      %s359 = sadd.s32 %s358, 1
      %p362 = scmp.eq.s32.totalorder %s25, 1
      %p363 = scmp.ne.s32.totalorder %s358, %s360
      %p364 = scmp.eq.s32.totalorder %s25, 0
      %p365 = por %p363, %p364
      %p366 = scmp.ne.s32.totalorder %s358, %s360
      %p367 = scmp.eq.s32.totalorder %s30, 1
      %p368 = por %p366, %p367
      %p369 = scmp.ne.s32.totalorder %s360, %s361
      %p370 = scmp.eq.s32.totalorder %s30, 0
      %p371 = por %p369, %p370
      %p372 = scmp.ne.s32.totalorder %s360, %s361
      %p373 = scmp.eq.s32.totalorder %s31, 1
      %p374 = por %p372, %p373
      %p376 = scmp.ne.s32.totalorder %s361, %s375
      %p377 = scmp.eq.s32.totalorder %s31, 0
      %p378 = por %p376, %p377
      %s379 = ssub.s32 %s25, %s32
      %p380 = scmp.eq.s32.totalorder %s379, 0
      %s382 = sadd.s32 %s381, 1
      %s383 = scalar_select %p380, %s381, %s382
      %p386 = pneg %p380
      %p387 = scmp.eq.s32.totalorder %s25, 1
      %p388 = por %p386, %p387
      %p389 = scmp.ne.s32.totalorder %s381, %s384
      %p390 = scmp.eq.s32.totalorder %s25, 0
      %p391 = por %p389, %p390
      %p392 = scmp.ne.s32.totalorder %s381, %s384
      %p393 = scmp.eq.s32.totalorder %s30, 1
      %p394 = por %p392, %p393
      %p395 = scmp.ne.s32.totalorder %s384, %s385
      %p396 = scmp.eq.s32.totalorder %s30, 0
      %p397 = por %p395, %p396
      %p398 = scmp.ne.s32.totalorder %s384, %s385
      %p399 = scmp.eq.s32.totalorder %s31, 1
      %p400 = por %p398, %p399
      %p402 = scmp.ne.s32.totalorder %s385, %s401
      %p403 = scmp.eq.s32.totalorder %s31, 0
      %p404 = por %p402, %p403
      %p405 = scmp.le.s32.totalorder 1, %s25
      %p406 = scmp.lt.s32.totalorder %s25, 3
      %p407 = pnand %p405, %p406
      %p408 = pneg %p407
      // Predicated region
      $region9: #{tpu_custom_call.1} parent=5 // pred_check
        _
      $region10: #{tpu_custom_call.1} parent=5 // pred_check_branch
        %410 = sbr.rel (%p407) target = $region12
      $region11: #{tpu_custom_call.1} parent=5 // pred_region
        %s411 = ssub.s32 %s25, 1
        // Predicated region
        $region13: #{tpu_custom_call.1} parent=11 // pred_check
          %p412 = pneg %p98
        $region14: #{tpu_custom_call.1} parent=11 // pred_check_branch
          %414 = sbr.rel (%p412) target = $region16
        $region15: #{tpu_custom_call.1} parent=11 // pred_region
          _
        $region16: #{tpu_custom_call.1} parent=11 // pred_fallthru
          _
        // Predicated region
        $region17: #{tpu_custom_call.1} parent=11 // pred_check
          %p415 = pneg %p119
        $region18: #{tpu_custom_call.1} parent=11 // pred_check_branch
          %417 = sbr.rel (%p415) target = $region20
        $region19: #{tpu_custom_call.1} parent=11 // pred_region
          _
        $region20: #{tpu_custom_call.1} parent=11 // pred_fallthru
          _
        // Predicated region
        $region21: #{tpu_custom_call.1} parent=11 // pred_check
          %p418 = pneg %p140
        $region22: #{tpu_custom_call.1} parent=11 // pred_check_branch
          %420 = sbr.rel (%p418) target = $region24
        $region23: #{tpu_custom_call.1} parent=11 // pred_region
          _
        $region24: #{tpu_custom_call.1} parent=11 // pred_fallthru
          _
        // Predicated region
        $region25: #{tpu_custom_call.1} parent=11 // pred_check
          %p421 = pneg %p161
        $region26: #{tpu_custom_call.1} parent=11 // pred_check_branch
          %423 = sbr.rel (%p421) target = $region28
        $region27: #{tpu_custom_call.1} parent=11 // pred_region
          _
        $region28: #{tpu_custom_call.1} parent=11 // pred_fallthru
          _
        // Predicated region
        $region29: #{tpu_custom_call.1} parent=11 // pred_check
          %p424 = pneg %p182
        $region30: #{tpu_custom_call.1} parent=11 // pred_check_branch
          %426 = sbr.rel (%p424) target = $region32
        $region31: #{tpu_custom_call.1} parent=11 // pred_region
          _
        $region32: #{tpu_custom_call.1} parent=11 // pred_fallthru
          _
        // Predicated region
        $region33: #{tpu_custom_call.1} parent=11 // pred_check
          %p427 = pneg %p203
        $region34: #{tpu_custom_call.1} parent=11 // pred_check_branch
          %429 = sbr.rel (%p427) target = $region36
        $region35: #{tpu_custom_call.1} parent=11 // pred_region
          _
        $region36: #{tpu_custom_call.1} parent=11 // pred_fallthru
          _
        // Predicated region
        $region37: #{tpu_custom_call.1} parent=11 // pred_check
          %p430 = pneg %p224
        $region38: #{tpu_custom_call.1} parent=11 // pred_check_branch
          %432 = sbr.rel (%p430) target = $region40
        $region39: #{tpu_custom_call.1} parent=11 // pred_region
          _
        $region40: #{tpu_custom_call.1} parent=11 // pred_fallthru
          _
        // Predicated region
        $region41: #{tpu_custom_call.1} parent=11 // pred_check
          %p433 = pneg %p245
        $region42: #{tpu_custom_call.1} parent=11 // pred_check_branch
          %435 = sbr.rel (%p433) target = $region44
        $region43: #{tpu_custom_call.1} parent=11 // pred_region
          _
        $region44: #{tpu_custom_call.1} parent=11 // pred_fallthru
          _
        // Predicated region
        $region45: #{tpu_custom_call.1} parent=11 // pred_check
          %p436 = pneg %p266
        $region46: #{tpu_custom_call.1} parent=11 // pred_check_branch
          %438 = sbr.rel (%p436) target = $region48
        $region47: #{tpu_custom_call.1} parent=11 // pred_region
          _
        $region48: #{tpu_custom_call.1} parent=11 // pred_fallthru
          _
        // Predicated region
        $region49: #{tpu_custom_call.1} parent=11 // pred_check
          %p439 = pneg %p287
        $region50: #{tpu_custom_call.1} parent=11 // pred_check_branch
          %441 = sbr.rel (%p439) target = $region52
        $region51: #{tpu_custom_call.1} parent=11 // pred_region
          _
        $region52: #{tpu_custom_call.1} parent=11 // pred_fallthru
          _
        // Predicated region
        $region53: #{tpu_custom_call.1} parent=11 // pred_check
          %p442 = pneg %p308
        $region54: #{tpu_custom_call.1} parent=11 // pred_check_branch
          %444 = sbr.rel (%p442) target = $region56
        $region55: #{tpu_custom_call.1} parent=11 // pred_region
          _
        $region56: #{tpu_custom_call.1} parent=11 // pred_fallthru
          _
        // Predicated region
        $region57: #{tpu_custom_call.1} parent=11 // pred_check
          %p445 = pneg %p329
        $region58: #{tpu_custom_call.1} parent=11 // pred_check_branch
          %447 = sbr.rel (%p445) target = $region60
        $region59: #{tpu_custom_call.1} parent=11 // pred_region
          _
        $region60: #{tpu_custom_call.1} parent=11 // pred_fallthru
          _
        // Predicated region
        $region61: #{tpu_custom_call.1} parent=11 // pred_check
          %p448 = pneg %p350
        $region62: #{tpu_custom_call.1} parent=11 // pred_check_branch
          %450 = sbr.rel (%p448) target = $region64
        $region63: #{tpu_custom_call.1} parent=11 // pred_region
          _
        $region64: #{tpu_custom_call.1} parent=11 // pred_fallthru
          _
        // Predicated region
        $region65: #{tpu_custom_call.1} parent=11 // pred_check
          %p451 = pneg %p371
        $region66: #{tpu_custom_call.1} parent=11 // pred_check_branch
          %453 = sbr.rel (%p451) target = $region68
        $region67: #{tpu_custom_call.1} parent=11 // pred_region
          _
        $region68: #{tpu_custom_call.1} parent=11 // pred_fallthru
          _
      $region12: #{tpu_custom_call.1} parent=5 // pred_fallthru
        _
      %p454 = scmp.lt.s32.totalorder %s25, 2
      // Predicated region
      $region69: #{tpu_custom_call.1} parent=5 // pred_check
        %p455 = pneg %p454
      $region70: #{tpu_custom_call.1} parent=5 // pred_check_branch
        %457 = sbr.rel (%p455) target = $region72
      $region71: #{tpu_custom_call.1} parent=5 // pred_region
        // Predicated region
        $region73: #{tpu_custom_call.1} parent=71 // pred_check
          %p458 = pneg %p45
        $region74: #{tpu_custom_call.1} parent=71 // pred_check_branch
          %460 = sbr.rel (%p458) target = $region76
        $region75: #{tpu_custom_call.1} parent=71 // pred_region
          %p461 = scmp.lt.s32.totalorder %s25, 1
          %s462 = scalar_select %p461, %s25, 1
          %s463 = smul.addr %s462, 8
          %s464 = scalar_lea.vmem %s0, %s463
        $region76: #{tpu_custom_call.1} parent=71 // pred_fallthru
          _
        // Predicated region
        $region77: #{tpu_custom_call.1} parent=71 // pred_check
          %p465 = pneg %p71
        $region78: #{tpu_custom_call.1} parent=71 // pred_check_branch
          %467 = sbr.rel (%p465) target = $region80
        $region79: #{tpu_custom_call.1} parent=71 // pred_region
          %p468 = scmp.lt.s32.totalorder %s25, 1
          %s469 = scalar_select %p468, %s25, 1
          %s470 = scalar_lea.vmem %s1, %s469
        $region80: #{tpu_custom_call.1} parent=71 // pred_fallthru
          _
      $region72: #{tpu_custom_call.1} parent=5 // pred_fallthru
        _
      %p471 = scmp.le.s32.totalorder 1, %s25
      %p472 = scmp.lt.s32.totalorder %s25, 3
      %p473 = pnand %p471, %p472
      %p474 = pneg %p473
      // Predicated region
      $region81: #{tpu_custom_call.1} parent=5 // pred_check
        _
      $region82: #{tpu_custom_call.1} parent=5 // pred_check_branch
        %476 = sbr.rel (%p473) target = $region84
      $region83: #{tpu_custom_call.1} parent=5 // pred_region
        %s477 = ssub.s32 %s25, 1
        %p478 = scmp.lt.s32.totalorder %s30, 1
        %s479 = scalar_select %p478, %s30, 1
        %s480 = smul.addr %s479, 8
        %s481 = scalar_lea.vmem %s0, %s480
        %p482 = pneg %p51
        %p483 = pneg %p48
        %p484 = scmp.lt.s32.totalorder %s30, 1
        %s485 = scalar_select %p484, %s30, 1
        %s486 = scalar_lea.vmem %s1, %s485
        %p487 = pneg %p77
        %p488 = pneg %p74
        %p489 = pneg %p98
        %p490 = pneg %p95
        %p491 = pneg %p119
        %p492 = pneg %p116
        %p493 = pneg %p140
        %p494 = pneg %p137
        %p495 = pneg %p161
        %p496 = pneg %p158
        %p497 = pneg %p182
        %p498 = pneg %p179
        %p499 = pneg %p203
        %p500 = pneg %p200
        %p501 = pneg %p224
        %p502 = pneg %p221
        %p503 = pneg %p245
        %p504 = pneg %p242
        %p505 = pneg %p266
        %p506 = pneg %p263
        %p507 = pneg %p287
        %p508 = pneg %p284
        %p509 = pneg %p308
        %p510 = pneg %p305
        %p511 = pneg %p329
        %p512 = pneg %p326
        %p513 = pneg %p350
        %p514 = pneg %p347
        %p515 = pneg %p371
        %p516 = pneg %p368
        %p517 = pneg %p397
        %p518 = pneg %p394
        %s519 = sand.u32 %s384, 1
        %s520 = scalar_lea.sflag [#allocation3], %s519
        %s521 = sand.u32 %s384, 1
        %s522 = smul.addr %s521, 8
        %s523 = scalar_lea.vmem [#allocation2], %s522
        %p524 = scmp.lt.s32.totalorder %s30, 1
        %s525 = scalar_select %p524, %s30, 1
        %s526 = smul.addr %s525, 8
        %s527 = scalar_lea.vmem %s0, %s526
        %p528 = scmp.lt.s32.totalorder %s30, 1
        %s529 = scalar_select %p528, %s30, 1
        %s530 = scalar_lea.vmem %s1, %s529
        %v531 = vld [vmem:[%s527] sm:$0xff]
        %v532 = vld [vmem:[%s530] sm:$0x1]
        %vm533 = vcmp.eq.f32.partialorder %v532, 0.0
        %v534 = vsel %vm533, -1e+09, 0.0
        %v535 = vld [vmem:[%s2] sm:$0x1]
        %v536 = vld [vmem:[%s3] sm:$0x1]
        %vm537 = vcmask 261120
        %v538 = vsel %vm537, %v531, 0.0
        %539 = vadd.xlane.f32.xlu0 %v538
        %v540 = vpop.xlane.xlu0 %539
        %v541 = vrcp.pop 32.0
        %v542 = vmul.f32 %v540, %v541
        %v543 = vsub.f32 %v531, %v542
        %v544 = vmul.f32 %v543, %v543
        %v545 = vsel %vm537, %v544, 0.0
        %546 = vadd.xlane.f32.xlu0 %v545
        %v547 = vpop.xlane.xlu0 %546
        %v548 = vmul.f32 %v547, 0.032258064
        %v549 = vrsqrt.pop %v548
        %v550 = vmul.f32 %v548, %v549
        %vm551 = vcmp.eq.f32.partialorder %v548, inf
        %v552 = vsel %vm551, %v548, %v550
        %vm553 = vcmp.eq.f32.partialorder %v548, 0.0
        %v554 = vand.u32 %v548, 2147483648
        %v555 = vsel %vm553, %v554, %v552
        %v556 = vadd.f32 %v555, 1e-06
        %v557 = vrcp.pop %v556
        %v558 = vmul.f32 %v543, %v557
        %v560 = vlaneseq
        %v561 = vshrl.u32 %v560, 7
        %v562 = vsub.s32 0, %v561
        %v563 = vrot.slane %v535, %v562
        %v565 = vmul.f32 %v563, %v558
        %v567 = vlaneseq
        %v568 = vshrl.u32 %v567, 7
        %v569 = vsub.s32 0, %v568
        %v570 = vrot.slane %v536, %v569
        %v572 = vadd.f32 %v565, %v570
        %v573 = vld [vmem:[%s4] sm:$0xff]
        %v574 = vld [vmem:[%s4 + $0x8] sm:$0xff]
        %v575 = vld [vmem:[%s4 + $0x10] sm:$0xff]
        %v576 = vld [vmem:[%s4 + $0x18] sm:$0xff]
        %v577 = vld [vmem:[%s4 + $0x20] sm:$0xff]
        %v578 = vld [vmem:[%s4 + $0x28] sm:$0xff]
        %v579 = vld [vmem:[%s4 + $0x30] sm:$0xff]
        %v580 = vld [vmem:[%s4 + $0x38] sm:$0xff]
        %v581 = vld [vmem:[%s4 + $0x40] sm:$0xff]
        %v582 = vld [vmem:[%s4 + $0x48] sm:$0xff]
        %v583 = vld [vmem:[%s4 + $0x50] sm:$0xff]
        %v584 = vld [vmem:[%s4 + $0x58] sm:$0xff]
        %v585 = vld [vmem:[%s4 + $0x60] sm:$0xff]
        %v586 = vld [vmem:[%s4 + $0x68] sm:$0xff]
        %v587 = vld [vmem:[%s4 + $0x70] sm:$0xff]
        %v588 = vld [vmem:[%s4 + $0x78] sm:$0xff]
        %v589 = vld [vmem:[%s4 + $0x80] sm:$0xff]
        %v590 = vld [vmem:[%s4 + $0x88] sm:$0xff]
        %v591 = vld [vmem:[%s4 + $0x90] sm:$0xff]
        %v592 = vld [vmem:[%s4 + $0x98] sm:$0xff]
        %v593 = vld [vmem:[%s4 + $0xa0] sm:$0xff]
        %v594 = vld [vmem:[%s4 + $0xa8] sm:$0xff]
        %v595 = vld [vmem:[%s4 + $0xb0] sm:$0xff]
        %v596 = vld [vmem:[%s4 + $0xb8] sm:$0xff]
        %v597 = vld [vmem:[%s4 + $0xc0] sm:$0xff]
        %v598 = vld [vmem:[%s4 + $0xc8] sm:$0xff]
        %v599 = vld [vmem:[%s4 + $0xd0] sm:$0xff]
        %v600 = vld [vmem:[%s4 + $0xd8] sm:$0xff]
        %v601 = vld [vmem:[%s4 + $0xe0] sm:$0xff]
        %v602 = vld [vmem:[%s4 + $0xe8] sm:$0xff]
        %v603 = vld [vmem:[%s4 + $0xf0] sm:$0xff]
        %v604 = vld [vmem:[%s4 + $0xf8] sm:$0xff]
        %v605 = vld [vmem:[%s4 + $0x100] sm:$0xff]
        %v606 = vld [vmem:[%s4 + $0x108] sm:$0xff]
        %v607 = vld [vmem:[%s4 + $0x110] sm:$0xff]
        %v608 = vld [vmem:[%s4 + $0x118] sm:$0xff]
        %v609 = vld [vmem:[%s4 + $0x120] sm:$0xff]
        %v610 = vld [vmem:[%s4 + $0x128] sm:$0xff]
        %v611 = vld [vmem:[%s4 + $0x130] sm:$0xff]
        %v612 = vld [vmem:[%s4 + $0x138] sm:$0xff]
        %v613 = vld [vmem:[%s4 + $0x140] sm:$0xff]
        %v614 = vld [vmem:[%s4 + $0x148] sm:$0xff]
        %v615 = vld [vmem:[%s4 + $0x150] sm:$0xff]
        %v616 = vld [vmem:[%s4 + $0x158] sm:$0xff]
        %v617 = vld [vmem:[%s4 + $0x160] sm:$0xff]
        %v618 = vld [vmem:[%s4 + $0x168] sm:$0xff]
        %v619 = vld [vmem:[%s4 + $0x170] sm:$0xff]
        %v620 = vld [vmem:[%s4 + $0x178] sm:$0xff]
        %v621 = vld [vmem:[%s5] sm:$0x1]
        %v622 = vld [vmem:[%s5 + $0x1] sm:$0x1]
        %v623 = vld [vmem:[%s5 + $0x2] sm:$0x1]
        %v624 = vld [vmem:[%s5 + $0x3] sm:$0x1]
        %v625 = vld [vmem:[%s5 + $0x4] sm:$0x1]
        %v626 = vld [vmem:[%s5 + $0x5] sm:$0x1]
        %v627 = vld [vmem:[%s5 + $0x6] sm:$0x1]
        %v628 = vld [vmem:[%s5 + $0x7] sm:$0x1]
        %v629 = vld [vmem:[%s5 + $0x8] sm:$0x1]
        %v630 = vld [vmem:[%s5 + $0x9] sm:$0x1]
        %v631 = vld [vmem:[%s5 + $0xa] sm:$0x1]
        %v632 = vld [vmem:[%s5 + $0xb] sm:$0x1]
        %v645 = vlaneseq
        %v646 = vshrl.u32 %v645, 7
        %v647 = vsub.s32 0, %v646
        %v648 = vrot.slane %v621, %v647
        %v649 = vlaneseq
        %v650 = vshrl.u32 %v649, 7
        %v651 = vsub.s32 0, %v650
        %v652 = vrot.slane %v622, %v651
        %v653 = vlaneseq
        %v654 = vshrl.u32 %v653, 7
        %v655 = vsub.s32 0, %v654
        %v656 = vrot.slane %v623, %v655
        %v657 = vlaneseq
        %v658 = vshrl.u32 %v657, 7
        %v659 = vsub.s32 0, %v658
        %v660 = vrot.slane %v624, %v659
        %v661 = vlaneseq
        %v662 = vshrl.u32 %v661, 7
        %v663 = vsub.s32 0, %v662
        %v664 = vrot.slane %v625, %v663
        %v665 = vlaneseq
        %v666 = vshrl.u32 %v665, 7
        %v667 = vsub.s32 0, %v666
        %v668 = vrot.slane %v626, %v667
        %v669 = vlaneseq
        %v670 = vshrl.u32 %v669, 7
        %v671 = vsub.s32 0, %v670
        %v672 = vrot.slane %v627, %v671
        %v673 = vlaneseq
        %v674 = vshrl.u32 %v673, 7
        %v675 = vsub.s32 0, %v674
        %v676 = vrot.slane %v628, %v675
        %v677 = vlaneseq
        %v678 = vshrl.u32 %v677, 7
        %v679 = vsub.s32 0, %v678
        %v680 = vrot.slane %v629, %v679
        %v681 = vlaneseq
        %v682 = vshrl.u32 %v681, 7
        %v683 = vsub.s32 0, %v682
        %v684 = vrot.slane %v630, %v683
        %v685 = vlaneseq
        %v686 = vshrl.u32 %v685, 7
        %v687 = vsub.s32 0, %v686
        %v688 = vrot.slane %v631, %v687
        %v689 = vlaneseq
        %v690 = vshrl.u32 %v689, 7
        %v691 = vsub.s32 0, %v690
        %v692 = vrot.slane %v632, %v691
        %v706 = vsel %vm537, %v572, 0
        %708 = vmatprep.subr.mxu0 0.0
        %709 = vmatpush1.msra.mxu0 %v573
        %710 = vmatprep.subr.mxu0 0.0
        %711 = vmatpush1.msra.mxu0 %v574
        %712 = vmatprep.subr.mxu0 0.0
        %713 = vmatpush1.msra.mxu0 %v575
        %714 = vmatprep.subr.mxu0 0.0
        %715 = vmatpush1.msra.mxu0 %v576
        %716 = vmatprep.subr.mxu0 0.0
        %717 = vmatpush1.msra.mxu0 0.0
        %718 = vmatprep.subr.mxu0 0.0
        %719 = vmatpush1.msra.mxu0 0.0
        %720 = vmatprep.subr.mxu0 0.0
        %721 = vmatpush1.msra.mxu0 0.0
        %722 = vmatprep.subr.mxu0 0.0
        %723 = vmatpush1.msra.mxu0 0.0
        %724 = vmatprep.subr.mxu0 0.0
        %725 = vmatpush1.msra.mxu0 0.0
        %726 = vmatprep.subr.mxu0 0.0
        %727 = vmatpush1.msra.mxu0 0.0
        %728 = vmatprep.subr.mxu0 0.0
        %729 = vmatpush1.msra.mxu0 0.0
        %730 = vmatprep.subr.mxu0 0.0
        %731 = vmatpush1.msra.mxu0 0.0
        %732 = vmatprep.subr.mxu0 0.0
        %733 = vmatpush1.msra.mxu0 0.0
        %734 = vmatprep.subr.mxu0 0.0
        %735 = vmatpush1.msra.mxu0 0.0
        %736 = vmatprep.subr.mxu0 0.0
        %737 = vmatpush1.msra.mxu0 0.0
        %738 = vmatprep.subr.mxu0 0.0
        %739 = vmatpush1.msra.mxu0 0.0
        %740 = vmatprep.subr.mxu0 0.0
        %741 = vmatpush1.msra.mxu0 0.0
        %742 = vmatprep.subr.mxu0 0.0
        %743 = vmatpush1.msra.mxu0 0.0
        %744 = vmatprep.subr.mxu0 0.0
        %745 = vmatpush1.msra.mxu0 0.0
        %746 = vmatprep.subr.mxu0 0.0
        %747 = vmatpush1.msra.mxu0 0.0
        %748 = vmatprep.subr.mxu0 0.0
        %749 = vmatpush1.msra.mxu0 0.0
        %750 = vmatprep.subr.mxu0 0.0
        %751 = vmatpush1.msra.mxu0 0.0
        %752 = vmatprep.subr.mxu0 0.0
        %753 = vmatpush1.msra.mxu0 0.0
        %754 = vmatprep.subr.mxu0 0.0
        %755 = vmatpush1.msra.mxu0 0.0
        %756 = vmatprep.subr.mxu0 0.0
        %757 = vmatpush1.msra.mxu0 0.0
        %758 = vmatprep.subr.mxu0 0.0
        %759 = vmatpush1.msra.mxu0 0.0
        %760 = vmatprep.subr.mxu0 0.0
        %761 = vmatpush1.msra.mxu0 0.0
        %762 = vmatprep.subr.mxu0 0.0
        %763 = vmatpush1.msra.mxu0 0.0
        %764 = vmatprep.subr.mxu0 0.0
        %765 = vmatpush1.msra.mxu0 0.0
        %766 = vmatprep.subr.mxu0 0.0
        %767 = vmatpush1.msra.mxu0 0.0
        %768 = vmatprep.subr.mxu0 0.0
        %769 = vmatpush1.msra.mxu0 0.0
        %770 = vmatprep.subr.mxu0 0.0
        %771 = vmatpush1.msra.mxu0 0.0
        %772 = vmatprep.mubr.f32.mxu0 0.0
        %773 = vmatmul.mubr.f32.gmra.mrb[0].mxu0 %v706
        %v774 = vpop.f32.mrb[0].mxu0
        %v775 = vadd.f32 %v648, %v774
        %v776 = vpop.f32.mrb[0].mxu0
        %777 = vdwg.mxu0
        %778 = vmatprep.subr.mxu0 0.0
        %779 = vmatpush1.msra.mxu0 %v577
        %780 = vmatprep.subr.mxu0 0.0
        %781 = vmatpush1.msra.mxu0 %v578
        %782 = vmatprep.subr.mxu0 0.0
        %783 = vmatpush1.msra.mxu0 %v579
        %784 = vmatprep.subr.mxu0 0.0
        %785 = vmatpush1.msra.mxu0 %v580
        %786 = vmatprep.subr.mxu0 0.0
        %787 = vmatpush1.msra.mxu0 0.0
        %788 = vmatprep.subr.mxu0 0.0
        %789 = vmatpush1.msra.mxu0 0.0
        %790 = vmatprep.subr.mxu0 0.0
        %791 = vmatpush1.msra.mxu0 0.0
        %792 = vmatprep.subr.mxu0 0.0
        %793 = vmatpush1.msra.mxu0 0.0
        %794 = vmatprep.subr.mxu0 0.0
        %795 = vmatpush1.msra.mxu0 0.0
        %796 = vmatprep.subr.mxu0 0.0
        %797 = vmatpush1.msra.mxu0 0.0
        %798 = vmatprep.subr.mxu0 0.0
        %799 = vmatpush1.msra.mxu0 0.0
        %800 = vmatprep.subr.mxu0 0.0
        %801 = vmatpush1.msra.mxu0 0.0
        %802 = vmatprep.subr.mxu0 0.0
        %803 = vmatpush1.msra.mxu0 0.0
        %804 = vmatprep.subr.mxu0 0.0
        %805 = vmatpush1.msra.mxu0 0.0
        %806 = vmatprep.subr.mxu0 0.0
        %807 = vmatpush1.msra.mxu0 0.0
        %808 = vmatprep.subr.mxu0 0.0
        %809 = vmatpush1.msra.mxu0 0.0
        %810 = vmatprep.subr.mxu0 0.0
        %811 = vmatpush1.msra.mxu0 0.0
        %812 = vmatprep.subr.mxu0 0.0
        %813 = vmatpush1.msra.mxu0 0.0
        %814 = vmatprep.subr.mxu0 0.0
        %815 = vmatpush1.msra.mxu0 0.0
        %816 = vmatprep.subr.mxu0 0.0
        %817 = vmatpush1.msra.mxu0 0.0
        %818 = vmatprep.subr.mxu0 0.0
        %819 = vmatpush1.msra.mxu0 0.0
        %820 = vmatprep.subr.mxu0 0.0
        %821 = vmatpush1.msra.mxu0 0.0
        %822 = vmatprep.subr.mxu0 0.0
        %823 = vmatpush1.msra.mxu0 0.0
        %824 = vmatprep.subr.mxu0 0.0
        %825 = vmatpush1.msra.mxu0 0.0
        %826 = vmatprep.subr.mxu0 0.0
        %827 = vmatpush1.msra.mxu0 0.0
        %828 = vmatprep.subr.mxu0 0.0
        %829 = vmatpush1.msra.mxu0 0.0
        %830 = vmatprep.subr.mxu0 0.0
        %831 = vmatpush1.msra.mxu0 0.0
        %832 = vmatprep.subr.mxu0 0.0
        %833 = vmatpush1.msra.mxu0 0.0
        %834 = vmatprep.subr.mxu0 0.0
        %835 = vmatpush1.msra.mxu0 0.0
        %836 = vmatprep.subr.mxu0 0.0
        %837 = vmatpush1.msra.mxu0 0.0
        %838 = vmatprep.subr.mxu0 0.0
        %839 = vmatpush1.msra.mxu0 0.0
        %840 = vmatprep.subr.mxu0 0.0
        %841 = vmatpush1.msra.mxu0 0.0
        %842 = vmatprep.mubr.f32.mxu0 0.0
        %843 = vmatmul.mubr.f32.gmra.mrb[0].mxu0 %v706
        %v844 = vpop.f32.mrb[0].mxu0
        %v845 = vadd.f32 %v652, %v844
        %v846 = vpop.f32.mrb[0].mxu0
        %847 = vdwg.mxu0
        %848 = vmatprep.subr.mxu0 0.0
        %849 = vmatpush1.msra.mxu0 %v581
        %850 = vmatprep.subr.mxu0 0.0
        %851 = vmatpush1.msra.mxu0 %v582
        %852 = vmatprep.subr.mxu0 0.0
        %853 = vmatpush1.msra.mxu0 %v583
        %854 = vmatprep.subr.mxu0 0.0
        %855 = vmatpush1.msra.mxu0 %v584
        %856 = vmatprep.subr.mxu0 0.0
        %857 = vmatpush1.msra.mxu0 0.0
        %858 = vmatprep.subr.mxu0 0.0
        %859 = vmatpush1.msra.mxu0 0.0
        %860 = vmatprep.subr.mxu0 0.0
        %861 = vmatpush1.msra.mxu0 0.0
        %862 = vmatprep.subr.mxu0 0.0
        %863 = vmatpush1.msra.mxu0 0.0
        %864 = vmatprep.subr.mxu0 0.0
        %865 = vmatpush1.msra.mxu0 0.0
        %866 = vmatprep.subr.mxu0 0.0
        %867 = vmatpush1.msra.mxu0 0.0
        %868 = vmatprep.subr.mxu0 0.0
        %869 = vmatpush1.msra.mxu0 0.0
        %870 = vmatprep.subr.mxu0 0.0
        %871 = vmatpush1.msra.mxu0 0.0
        %872 = vmatprep.subr.mxu0 0.0
        %873 = vmatpush1.msra.mxu0 0.0
        %874 = vmatprep.subr.mxu0 0.0
        %875 = vmatpush1.msra.mxu0 0.0
        %876 = vmatprep.subr.mxu0 0.0
        %877 = vmatpush1.msra.mxu0 0.0
        %878 = vmatprep.subr.mxu0 0.0
        %879 = vmatpush1.msra.mxu0 0.0
        %880 = vmatprep.subr.mxu0 0.0
        %881 = vmatpush1.msra.mxu0 0.0
        %882 = vmatprep.subr.mxu0 0.0
        %883 = vmatpush1.msra.mxu0 0.0
        %884 = vmatprep.subr.mxu0 0.0
        %885 = vmatpush1.msra.mxu0 0.0
        %886 = vmatprep.subr.mxu0 0.0
        %887 = vmatpush1.msra.mxu0 0.0
        %888 = vmatprep.subr.mxu0 0.0
        %889 = vmatpush1.msra.mxu0 0.0
        %890 = vmatprep.subr.mxu0 0.0
        %891 = vmatpush1.msra.mxu0 0.0
        %892 = vmatprep.subr.mxu0 0.0
        %893 = vmatpush1.msra.mxu0 0.0
        %894 = vmatprep.subr.mxu0 0.0
        %895 = vmatpush1.msra.mxu0 0.0
        %896 = vmatprep.subr.mxu0 0.0
        %897 = vmatpush1.msra.mxu0 0.0
        %898 = vmatprep.subr.mxu0 0.0
        %899 = vmatpush1.msra.mxu0 0.0
        %900 = vmatprep.subr.mxu0 0.0
        %901 = vmatpush1.msra.mxu0 0.0
        %902 = vmatprep.subr.mxu0 0.0
        %903 = vmatpush1.msra.mxu0 0.0
        %904 = vmatprep.subr.mxu0 0.0
        %905 = vmatpush1.msra.mxu0 0.0
        %906 = vmatprep.subr.mxu0 0.0
        %907 = vmatpush1.msra.mxu0 0.0
        %908 = vmatprep.subr.mxu0 0.0
        %909 = vmatpush1.msra.mxu0 0.0
        %910 = vmatprep.subr.mxu0 0.0
        %911 = vmatpush1.msra.mxu0 0.0
        %912 = vmatprep.mubr.f32.mxu0 0.0
        %913 = vmatmul.mubr.f32.gmra.mrb[0].mxu0 %v706
        %v914 = vpop.f32.mrb[0].mxu0
        %v915 = vadd.f32 %v656, %v914
        %v916 = vpop.f32.mrb[0].mxu0
        %917 = vdwg.mxu0
        %918 = vmatprep.subr.mxu0 0.0
        %919 = vmatpush1.msra.mxu0 %v585
        %920 = vmatprep.subr.mxu0 0.0
        %921 = vmatpush1.msra.mxu0 %v586
        %922 = vmatprep.subr.mxu0 0.0
        %923 = vmatpush1.msra.mxu0 %v587
        %924 = vmatprep.subr.mxu0 0.0
        %925 = vmatpush1.msra.mxu0 %v588
        %926 = vmatprep.subr.mxu0 0.0
        %927 = vmatpush1.msra.mxu0 0.0
        %928 = vmatprep.subr.mxu0 0.0
        %929 = vmatpush1.msra.mxu0 0.0
        %930 = vmatprep.subr.mxu0 0.0
        %931 = vmatpush1.msra.mxu0 0.0
        %932 = vmatprep.subr.mxu0 0.0
        %933 = vmatpush1.msra.mxu0 0.0
        %934 = vmatprep.subr.mxu0 0.0
        %935 = vmatpush1.msra.mxu0 0.0
        %936 = vmatprep.subr.mxu0 0.0
        %937 = vmatpush1.msra.mxu0 0.0
        %938 = vmatprep.subr.mxu0 0.0
        %939 = vmatpush1.msra.mxu0 0.0
        %940 = vmatprep.subr.mxu0 0.0
        %941 = vmatpush1.msra.mxu0 0.0
        %942 = vmatprep.subr.mxu0 0.0
        %943 = vmatpush1.msra.mxu0 0.0
        %944 = vmatprep.subr.mxu0 0.0
        %945 = vmatpush1.msra.mxu0 0.0
        %946 = vmatprep.subr.mxu0 0.0
        %947 = vmatpush1.msra.mxu0 0.0
        %948 = vmatprep.subr.mxu0 0.0
        %949 = vmatpush1.msra.mxu0 0.0
        %950 = vmatprep.subr.mxu0 0.0
        %951 = vmatpush1.msra.mxu0 0.0
        %952 = vmatprep.subr.mxu0 0.0
        %953 = vmatpush1.msra.mxu0 0.0
        %954 = vmatprep.subr.mxu0 0.0
        %955 = vmatpush1.msra.mxu0 0.0
        %956 = vmatprep.subr.mxu0 0.0
        %957 = vmatpush1.msra.mxu0 0.0
        %958 = vmatprep.subr.mxu0 0.0
        %959 = vmatpush1.msra.mxu0 0.0
        %960 = vmatprep.subr.mxu0 0.0
        %961 = vmatpush1.msra.mxu0 0.0
        %962 = vmatprep.subr.mxu0 0.0
        %963 = vmatpush1.msra.mxu0 0.0
        %964 = vmatprep.subr.mxu0 0.0
        %965 = vmatpush1.msra.mxu0 0.0
        %966 = vmatprep.subr.mxu0 0.0
        %967 = vmatpush1.msra.mxu0 0.0
        %968 = vmatprep.subr.mxu0 0.0
        %969 = vmatpush1.msra.mxu0 0.0
        %970 = vmatprep.subr.mxu0 0.0
        %971 = vmatpush1.msra.mxu0 0.0
        %972 = vmatprep.subr.mxu0 0.0
        %973 = vmatpush1.msra.mxu0 0.0
        %974 = vmatprep.subr.mxu0 0.0
        %975 = vmatpush1.msra.mxu0 0.0
        %976 = vmatprep.subr.mxu0 0.0
        %977 = vmatpush1.msra.mxu0 0.0
        %978 = vmatprep.subr.mxu0 0.0
        %979 = vmatpush1.msra.mxu0 0.0
        %980 = vmatprep.subr.mxu0 0.0
        %981 = vmatpush1.msra.mxu0 0.0
        %982 = vmatprep.mubr.f32.mxu0 0.0
        %983 = vmatmul.mubr.f32.gmra.mrb[0].mxu0 %v706
        %v984 = vpop.f32.mrb[0].mxu0
        %v985 = vadd.f32 %v660, %v984
        %v986 = vpop.f32.mrb[0].mxu0
        %987 = vdwg.mxu0
        %988 = vmatprep.subr.mxu0 0.0
        %989 = vmatpush1.msra.mxu0 %v589
        %990 = vmatprep.subr.mxu0 0.0
        %991 = vmatpush1.msra.mxu0 %v590
        %992 = vmatprep.subr.mxu0 0.0
        %993 = vmatpush1.msra.mxu0 %v591
        %994 = vmatprep.subr.mxu0 0.0
        %995 = vmatpush1.msra.mxu0 %v592
        %996 = vmatprep.subr.mxu0 0.0
        %997 = vmatpush1.msra.mxu0 0.0
        %998 = vmatprep.subr.mxu0 0.0
        %999 = vmatpush1.msra.mxu0 0.0
        %1000 = vmatprep.subr.mxu0 0.0
        %1001 = vmatpush1.msra.mxu0 0.0
        %1002 = vmatprep.subr.mxu0 0.0
        %1003 = vmatpush1.msra.mxu0 0.0
        %1004 = vmatprep.subr.mxu0 0.0
        %1005 = vmatpush1.msra.mxu0 0.0
        %1006 = vmatprep.subr.mxu0 0.0
        %1007 = vmatpush1.msra.mxu0 0.0
        %1008 = vmatprep.subr.mxu0 0.0
        %1009 = vmatpush1.msra.mxu0 0.0
        %1010 = vmatprep.subr.mxu0 0.0
        %1011 = vmatpush1.msra.mxu0 0.0
        %1012 = vmatprep.subr.mxu0 0.0
        %1013 = vmatpush1.msra.mxu0 0.0
        %1014 = vmatprep.subr.mxu0 0.0
        %1015 = vmatpush1.msra.mxu0 0.0
        %1016 = vmatprep.subr.mxu0 0.0
        %1017 = vmatpush1.msra.mxu0 0.0
        %1018 = vmatprep.subr.mxu0 0.0
        %1019 = vmatpush1.msra.mxu0 0.0
        %1020 = vmatprep.subr.mxu0 0.0
        %1021 = vmatpush1.msra.mxu0 0.0
        %1022 = vmatprep.subr.mxu0 0.0
        %1023 = vmatpush1.msra.mxu0 0.0
        %1024 = vmatprep.subr.mxu0 0.0
        %1025 = vmatpush1.msra.mxu0 0.0
        %1026 = vmatprep.subr.mxu0 0.0
        %1027 = vmatpush1.msra.mxu0 0.0
        %1028 = vmatprep.subr.mxu0 0.0
        %1029 = vmatpush1.msra.mxu0 0.0
        %1030 = vmatprep.subr.mxu0 0.0
        %1031 = vmatpush1.msra.mxu0 0.0
        %1032 = vmatprep.subr.mxu0 0.0
        %1033 = vmatpush1.msra.mxu0 0.0
        %1034 = vmatprep.subr.mxu0 0.0
        %1035 = vmatpush1.msra.mxu0 0.0
        %1036 = vmatprep.subr.mxu0 0.0
        %1037 = vmatpush1.msra.mxu0 0.0
        %1038 = vmatprep.subr.mxu0 0.0
        %1039 = vmatpush1.msra.mxu0 0.0
        %1040 = vmatprep.subr.mxu0 0.0
        %1041 = vmatpush1.msra.mxu0 0.0
        %1042 = vmatprep.subr.mxu0 0.0
        %1043 = vmatpush1.msra.mxu0 0.0
        %1044 = vmatprep.subr.mxu0 0.0
        %1045 = vmatpush1.msra.mxu0 0.0
        %1046 = vmatprep.subr.mxu0 0.0
        %1047 = vmatpush1.msra.mxu0 0.0
        %1048 = vmatprep.subr.mxu0 0.0
        %1049 = vmatpush1.msra.mxu0 0.0
        %1050 = vmatprep.subr.mxu0 0.0
        %1051 = vmatpush1.msra.mxu0 0.0
        %1052 = vmatprep.mubr.f32.mxu0 0.0
        %1053 = vmatmul.mubr.f32.gmra.mrb[0].mxu0 %v706
        %v1054 = vpop.f32.mrb[0].mxu0
        %v1055 = vadd.f32 %v664, %v1054
        %v1056 = vpop.f32.mrb[0].mxu0
        %1057 = vdwg.mxu0
        %1058 = vmatprep.subr.mxu0 0.0
        %1059 = vmatpush1.msra.mxu0 %v593
        %1060 = vmatprep.subr.mxu0 0.0
        %1061 = vmatpush1.msra.mxu0 %v594
        %1062 = vmatprep.subr.mxu0 0.0
        %1063 = vmatpush1.msra.mxu0 %v595
        %1064 = vmatprep.subr.mxu0 0.0
        %1065 = vmatpush1.msra.mxu0 %v596
        %1066 = vmatprep.subr.mxu0 0.0
        %1067 = vmatpush1.msra.mxu0 0.0
        %1068 = vmatprep.subr.mxu0 0.0
        %1069 = vmatpush1.msra.mxu0 0.0
        %1070 = vmatprep.subr.mxu0 0.0
        %1071 = vmatpush1.msra.mxu0 0.0
        %1072 = vmatprep.subr.mxu0 0.0
        %1073 = vmatpush1.msra.mxu0 0.0
        %1074 = vmatprep.subr.mxu0 0.0
        %1075 = vmatpush1.msra.mxu0 0.0
        %1076 = vmatprep.subr.mxu0 0.0
        %1077 = vmatpush1.msra.mxu0 0.0
        %1078 = vmatprep.subr.mxu0 0.0
        %1079 = vmatpush1.msra.mxu0 0.0
        %1080 = vmatprep.subr.mxu0 0.0
        %1081 = vmatpush1.msra.mxu0 0.0
        %1082 = vmatprep.subr.mxu0 0.0
        %1083 = vmatpush1.msra.mxu0 0.0
        %1084 = vmatprep.subr.mxu0 0.0
        %1085 = vmatpush1.msra.mxu0 0.0
        %1086 = vmatprep.subr.mxu0 0.0
        %1087 = vmatpush1.msra.mxu0 0.0
        %1088 = vmatprep.subr.mxu0 0.0
        %1089 = vmatpush1.msra.mxu0 0.0
        %1090 = vmatprep.subr.mxu0 0.0
        %1091 = vmatpush1.msra.mxu0 0.0
        %1092 = vmatprep.subr.mxu0 0.0
        %1093 = vmatpush1.msra.mxu0 0.0
        %1094 = vmatprep.subr.mxu0 0.0
        %1095 = vmatpush1.msra.mxu0 0.0
        %1096 = vmatprep.subr.mxu0 0.0
        %1097 = vmatpush1.msra.mxu0 0.0
        %1098 = vmatprep.subr.mxu0 0.0
        %1099 = vmatpush1.msra.mxu0 0.0
        %1100 = vmatprep.subr.mxu0 0.0
        %1101 = vmatpush1.msra.mxu0 0.0
        %1102 = vmatprep.subr.mxu0 0.0
        %1103 = vmatpush1.msra.mxu0 0.0
        %1104 = vmatprep.subr.mxu0 0.0
        %1105 = vmatpush1.msra.mxu0 0.0
        %1106 = vmatprep.subr.mxu0 0.0
        %1107 = vmatpush1.msra.mxu0 0.0
        %1108 = vmatprep.subr.mxu0 0.0
        %1109 = vmatpush1.msra.mxu0 0.0
        %1110 = vmatprep.subr.mxu0 0.0
        %1111 = vmatpush1.msra.mxu0 0.0
        %1112 = vmatprep.subr.mxu0 0.0
        %1113 = vmatpush1.msra.mxu0 0.0
        %1114 = vmatprep.subr.mxu0 0.0
        %1115 = vmatpush1.msra.mxu0 0.0
        %1116 = vmatprep.subr.mxu0 0.0
        %1117 = vmatpush1.msra.mxu0 0.0
        %1118 = vmatprep.subr.mxu0 0.0
        %1119 = vmatpush1.msra.mxu0 0.0
        %1120 = vmatprep.subr.mxu0 0.0
        %1121 = vmatpush1.msra.mxu0 0.0
        %1122 = vmatprep.mubr.f32.mxu0 0.0
        %1123 = vmatmul.mubr.f32.gmra.mrb[0].mxu0 %v706
        %v1124 = vpop.f32.mrb[0].mxu0
        %v1125 = vadd.f32 %v668, %v1124
        %v1126 = vpop.f32.mrb[0].mxu0
        %1127 = vdwg.mxu0
        %1128 = vmatprep.subr.mxu0 0.0
        %1129 = vmatpush1.msra.mxu0 %v597
        %1130 = vmatprep.subr.mxu0 0.0
        %1131 = vmatpush1.msra.mxu0 %v598
        %1132 = vmatprep.subr.mxu0 0.0
        %1133 = vmatpush1.msra.mxu0 %v599
        %1134 = vmatprep.subr.mxu0 0.0
        %1135 = vmatpush1.msra.mxu0 %v600
        %1136 = vmatprep.subr.mxu0 0.0
        %1137 = vmatpush1.msra.mxu0 0.0
        %1138 = vmatprep.subr.mxu0 0.0
        %1139 = vmatpush1.msra.mxu0 0.0
        %1140 = vmatprep.subr.mxu0 0.0
        %1141 = vmatpush1.msra.mxu0 0.0
        %1142 = vmatprep.subr.mxu0 0.0
        %1143 = vmatpush1.msra.mxu0 0.0
        %1144 = vmatprep.subr.mxu0 0.0
        %1145 = vmatpush1.msra.mxu0 0.0
        %1146 = vmatprep.subr.mxu0 0.0
        %1147 = vmatpush1.msra.mxu0 0.0
        %1148 = vmatprep.subr.mxu0 0.0
        %1149 = vmatpush1.msra.mxu0 0.0
        %1150 = vmatprep.subr.mxu0 0.0
        %1151 = vmatpush1.msra.mxu0 0.0
        %1152 = vmatprep.subr.mxu0 0.0
        %1153 = vmatpush1.msra.mxu0 0.0
        %1154 = vmatprep.subr.mxu0 0.0
        %1155 = vmatpush1.msra.mxu0 0.0
        %1156 = vmatprep.subr.mxu0 0.0
        %1157 = vmatpush1.msra.mxu0 0.0
        %1158 = vmatprep.subr.mxu0 0.0
        %1159 = vmatpush1.msra.mxu0 0.0
        %1160 = vmatprep.subr.mxu0 0.0
        %1161 = vmatpush1.msra.mxu0 0.0
        %1162 = vmatprep.subr.mxu0 0.0
        %1163 = vmatpush1.msra.mxu0 0.0
        %1164 = vmatprep.subr.mxu0 0.0
        %1165 = vmatpush1.msra.mxu0 0.0
        %1166 = vmatprep.subr.mxu0 0.0
        %1167 = vmatpush1.msra.mxu0 0.0
        %1168 = vmatprep.subr.mxu0 0.0
        %1169 = vmatpush1.msra.mxu0 0.0
        %1170 = vmatprep.subr.mxu0 0.0
        %1171 = vmatpush1.msra.mxu0 0.0
        %1172 = vmatprep.subr.mxu0 0.0
        %1173 = vmatpush1.msra.mxu0 0.0
        %1174 = vmatprep.subr.mxu0 0.0
        %1175 = vmatpush1.msra.mxu0 0.0
        %1176 = vmatprep.subr.mxu0 0.0
        %1177 = vmatpush1.msra.mxu0 0.0
        %1178 = vmatprep.subr.mxu0 0.0
        %1179 = vmatpush1.msra.mxu0 0.0
        %1180 = vmatprep.subr.mxu0 0.0
        %1181 = vmatpush1.msra.mxu0 0.0
        %1182 = vmatprep.subr.mxu0 0.0
        %1183 = vmatpush1.msra.mxu0 0.0
        %1184 = vmatprep.subr.mxu0 0.0
        %1185 = vmatpush1.msra.mxu0 0.0
        %1186 = vmatprep.subr.mxu0 0.0
        %1187 = vmatpush1.msra.mxu0 0.0
        %1188 = vmatprep.subr.mxu0 0.0
        %1189 = vmatpush1.msra.mxu0 0.0
        %1190 = vmatprep.subr.mxu0 0.0
        %1191 = vmatpush1.msra.mxu0 0.0
        %1192 = vmatprep.mubr.f32.mxu0 0.0
        %1193 = vmatmul.mubr.f32.gmra.mrb[0].mxu0 %v706
        %v1194 = vpop.f32.mrb[0].mxu0
        %v1195 = vadd.f32 %v672, %v1194
        %v1196 = vpop.f32.mrb[0].mxu0
        %1197 = vdwg.mxu0
        %1198 = vmatprep.subr.mxu0 0.0
        %1199 = vmatpush1.msra.mxu0 %v601
        %1200 = vmatprep.subr.mxu0 0.0
        %1201 = vmatpush1.msra.mxu0 %v602
        %1202 = vmatprep.subr.mxu0 0.0
        %1203 = vmatpush1.msra.mxu0 %v603
        %1204 = vmatprep.subr.mxu0 0.0
        %1205 = vmatpush1.msra.mxu0 %v604
        %1206 = vmatprep.subr.mxu0 0.0
        %1207 = vmatpush1.msra.mxu0 0.0
        %1208 = vmatprep.subr.mxu0 0.0
        %1209 = vmatpush1.msra.mxu0 0.0
        %1210 = vmatprep.subr.mxu0 0.0
        %1211 = vmatpush1.msra.mxu0 0.0
        %1212 = vmatprep.subr.mxu0 0.0
        %1213 = vmatpush1.msra.mxu0 0.0
        %1214 = vmatprep.subr.mxu0 0.0
        %1215 = vmatpush1.msra.mxu0 0.0
        %1216 = vmatprep.subr.mxu0 0.0
        %1217 = vmatpush1.msra.mxu0 0.0
        %1218 = vmatprep.subr.mxu0 0.0
        %1219 = vmatpush1.msra.mxu0 0.0
        %1220 = vmatprep.subr.mxu0 0.0
        %1221 = vmatpush1.msra.mxu0 0.0
        %1222 = vmatprep.subr.mxu0 0.0
        %1223 = vmatpush1.msra.mxu0 0.0
        %1224 = vmatprep.subr.mxu0 0.0
        %1225 = vmatpush1.msra.mxu0 0.0
        %1226 = vmatprep.subr.mxu0 0.0
        %1227 = vmatpush1.msra.mxu0 0.0
        %1228 = vmatprep.subr.mxu0 0.0
        %1229 = vmatpush1.msra.mxu0 0.0
        %1230 = vmatprep.subr.mxu0 0.0
        %1231 = vmatpush1.msra.mxu0 0.0
        %1232 = vmatprep.subr.mxu0 0.0
        %1233 = vmatpush1.msra.mxu0 0.0
        %1234 = vmatprep.subr.mxu0 0.0
        %1235 = vmatpush1.msra.mxu0 0.0
        %1236 = vmatprep.subr.mxu0 0.0
        %1237 = vmatpush1.msra.mxu0 0.0
        %1238 = vmatprep.subr.mxu0 0.0
        %1239 = vmatpush1.msra.mxu0 0.0
        %1240 = vmatprep.subr.mxu0 0.0
        %1241 = vmatpush1.msra.mxu0 0.0
        %1242 = vmatprep.subr.mxu0 0.0
        %1243 = vmatpush1.msra.mxu0 0.0
        %1244 = vmatprep.subr.mxu0 0.0
        %1245 = vmatpush1.msra.mxu0 0.0
        %1246 = vmatprep.subr.mxu0 0.0
        %1247 = vmatpush1.msra.mxu0 0.0
        %1248 = vmatprep.subr.mxu0 0.0
        %1249 = vmatpush1.msra.mxu0 0.0
        %1250 = vmatprep.subr.mxu0 0.0
        %1251 = vmatpush1.msra.mxu0 0.0
        %1252 = vmatprep.subr.mxu0 0.0
        %1253 = vmatpush1.msra.mxu0 0.0
        %1254 = vmatprep.subr.mxu0 0.0
        %1255 = vmatpush1.msra.mxu0 0.0
        %1256 = vmatprep.subr.mxu0 0.0
        %1257 = vmatpush1.msra.mxu0 0.0
        %1258 = vmatprep.subr.mxu0 0.0
        %1259 = vmatpush1.msra.mxu0 0.0
        %1260 = vmatprep.subr.mxu0 0.0
        %1261 = vmatpush1.msra.mxu0 0.0
        %1262 = vmatprep.mubr.f32.mxu0 0.0
        %1263 = vmatmul.mubr.f32.gmra.mrb[0].mxu0 %v706
        %v1264 = vpop.f32.mrb[0].mxu0
        %v1265 = vadd.f32 %v676, %v1264
        %v1266 = vpop.f32.mrb[0].mxu0
        %1267 = vdwg.mxu0
        %1268 = vmatprep.subr.mxu0 0.0
        %1269 = vmatpush1.msra.mxu0 %v605
        %1270 = vmatprep.subr.mxu0 0.0
        %1271 = vmatpush1.msra.mxu0 %v606
        %1272 = vmatprep.subr.mxu0 0.0
        %1273 = vmatpush1.msra.mxu0 %v607
        %1274 = vmatprep.subr.mxu0 0.0
        %1275 = vmatpush1.msra.mxu0 %v608
        %1276 = vmatprep.subr.mxu0 0.0
        %1277 = vmatpush1.msra.mxu0 0.0
        %1278 = vmatprep.subr.mxu0 0.0
        %1279 = vmatpush1.msra.mxu0 0.0
        %1280 = vmatprep.subr.mxu0 0.0
        %1281 = vmatpush1.msra.mxu0 0.0
        %1282 = vmatprep.subr.mxu0 0.0
        %1283 = vmatpush1.msra.mxu0 0.0
        %1284 = vmatprep.subr.mxu0 0.0
        %1285 = vmatpush1.msra.mxu0 0.0
        %1286 = vmatprep.subr.mxu0 0.0
        %1287 = vmatpush1.msra.mxu0 0.0
        %1288 = vmatprep.subr.mxu0 0.0
        %1289 = vmatpush1.msra.mxu0 0.0
        %1290 = vmatprep.subr.mxu0 0.0
        %1291 = vmatpush1.msra.mxu0 0.0
        %1292 = vmatprep.subr.mxu0 0.0
        %1293 = vmatpush1.msra.mxu0 0.0
        %1294 = vmatprep.subr.mxu0 0.0
        %1295 = vmatpush1.msra.mxu0 0.0
        %1296 = vmatprep.subr.mxu0 0.0
        %1297 = vmatpush1.msra.mxu0 0.0
        %1298 = vmatprep.subr.mxu0 0.0
        %1299 = vmatpush1.msra.mxu0 0.0
        %1300 = vmatprep.subr.mxu0 0.0
        %1301 = vmatpush1.msra.mxu0 0.0
        %1302 = vmatprep.subr.mxu0 0.0
        %1303 = vmatpush1.msra.mxu0 0.0
        %1304 = vmatprep.subr.mxu0 0.0
        %1305 = vmatpush1.msra.mxu0 0.0
        %1306 = vmatprep.subr.mxu0 0.0
        %1307 = vmatpush1.msra.mxu0 0.0
        %1308 = vmatprep.subr.mxu0 0.0
        %1309 = vmatpush1.msra.mxu0 0.0
        %1310 = vmatprep.subr.mxu0 0.0
        %1311 = vmatpush1.msra.mxu0 0.0
        %1312 = vmatprep.subr.mxu0 0.0
        %1313 = vmatpush1.msra.mxu0 0.0
        %1314 = vmatprep.subr.mxu0 0.0
        %1315 = vmatpush1.msra.mxu0 0.0
        %1316 = vmatprep.subr.mxu0 0.0
        %1317 = vmatpush1.msra.mxu0 0.0
        %1318 = vmatprep.subr.mxu0 0.0
        %1319 = vmatpush1.msra.mxu0 0.0
        %1320 = vmatprep.subr.mxu0 0.0
        %1321 = vmatpush1.msra.mxu0 0.0
        %1322 = vmatprep.subr.mxu0 0.0
        %1323 = vmatpush1.msra.mxu0 0.0
        %1324 = vmatprep.subr.mxu0 0.0
        %1325 = vmatpush1.msra.mxu0 0.0
        %1326 = vmatprep.subr.mxu0 0.0
        %1327 = vmatpush1.msra.mxu0 0.0
        %1328 = vmatprep.subr.mxu0 0.0
        %1329 = vmatpush1.msra.mxu0 0.0
        %1330 = vmatprep.subr.mxu0 0.0
        %1331 = vmatpush1.msra.mxu0 0.0
        %1332 = vmatprep.mubr.f32.mxu0 0.0
        %1333 = vmatmul.mubr.f32.gmra.mrb[0].mxu0 %v706
        %v1334 = vpop.f32.mrb[0].mxu0
        %v1335 = vadd.f32 %v680, %v1334
        %v1336 = vpop.f32.mrb[0].mxu0
        %1337 = vdwg.mxu0
        %1338 = vmatprep.subr.mxu0 0.0
        %1339 = vmatpush1.msra.mxu0 %v609
        %1340 = vmatprep.subr.mxu0 0.0
        %1341 = vmatpush1.msra.mxu0 %v610
        %1342 = vmatprep.subr.mxu0 0.0
        %1343 = vmatpush1.msra.mxu0 %v611
        %1344 = vmatprep.subr.mxu0 0.0
        %1345 = vmatpush1.msra.mxu0 %v612
        %1346 = vmatprep.subr.mxu0 0.0
        %1347 = vmatpush1.msra.mxu0 0.0
        %1348 = vmatprep.subr.mxu0 0.0
        %1349 = vmatpush1.msra.mxu0 0.0
        %1350 = vmatprep.subr.mxu0 0.0
        %1351 = vmatpush1.msra.mxu0 0.0
        %1352 = vmatprep.subr.mxu0 0.0
        %1353 = vmatpush1.msra.mxu0 0.0
        %1354 = vmatprep.subr.mxu0 0.0
        %1355 = vmatpush1.msra.mxu0 0.0
        %1356 = vmatprep.subr.mxu0 0.0
        %1357 = vmatpush1.msra.mxu0 0.0
        %1358 = vmatprep.subr.mxu0 0.0
        %1359 = vmatpush1.msra.mxu0 0.0
        %1360 = vmatprep.subr.mxu0 0.0
        %1361 = vmatpush1.msra.mxu0 0.0
        %1362 = vmatprep.subr.mxu0 0.0
        %1363 = vmatpush1.msra.mxu0 0.0
        %1364 = vmatprep.subr.mxu0 0.0
        %1365 = vmatpush1.msra.mxu0 0.0
        %1366 = vmatprep.subr.mxu0 0.0
        %1367 = vmatpush1.msra.mxu0 0.0
        %1368 = vmatprep.subr.mxu0 0.0
        %1369 = vmatpush1.msra.mxu0 0.0
        %1370 = vmatprep.subr.mxu0 0.0
        %1371 = vmatpush1.msra.mxu0 0.0
        %1372 = vmatprep.subr.mxu0 0.0
        %1373 = vmatpush1.msra.mxu0 0.0
        %1374 = vmatprep.subr.mxu0 0.0
        %1375 = vmatpush1.msra.mxu0 0.0
        %1376 = vmatprep.subr.mxu0 0.0
        %1377 = vmatpush1.msra.mxu0 0.0
        %1378 = vmatprep.subr.mxu0 0.0
        %1379 = vmatpush1.msra.mxu0 0.0
        %1380 = vmatprep.subr.mxu0 0.0
        %1381 = vmatpush1.msra.mxu0 0.0
        %1382 = vmatprep.subr.mxu0 0.0
        %1383 = vmatpush1.msra.mxu0 0.0
        %1384 = vmatprep.subr.mxu0 0.0
        %1385 = vmatpush1.msra.mxu0 0.0
        %1386 = vmatprep.subr.mxu0 0.0
        %1387 = vmatpush1.msra.mxu0 0.0
        %1388 = vmatprep.subr.mxu0 0.0
        %1389 = vmatpush1.msra.mxu0 0.0
        %1390 = vmatprep.subr.mxu0 0.0
        %1391 = vmatpush1.msra.mxu0 0.0
        %1392 = vmatprep.subr.mxu0 0.0
        %1393 = vmatpush1.msra.mxu0 0.0
        %1394 = vmatprep.subr.mxu0 0.0
        %1395 = vmatpush1.msra.mxu0 0.0
        %1396 = vmatprep.subr.mxu0 0.0
        %1397 = vmatpush1.msra.mxu0 0.0
        %1398 = vmatprep.subr.mxu0 0.0
        %1399 = vmatpush1.msra.mxu0 0.0
        %1400 = vmatprep.subr.mxu0 0.0
        %1401 = vmatpush1.msra.mxu0 0.0
        %1402 = vmatprep.mubr.f32.mxu0 0.0
        %1403 = vmatmul.mubr.f32.gmra.mrb[0].mxu0 %v706
        %v1404 = vpop.f32.mrb[0].mxu0
        %v1405 = vadd.f32 %v684, %v1404
        %v1406 = vpop.f32.mrb[0].mxu0
        %1407 = vdwg.mxu0
        %1408 = vmatprep.subr.mxu0 0.0
        %1409 = vmatpush1.msra.mxu0 %v613
        %1410 = vmatprep.subr.mxu0 0.0
        %1411 = vmatpush1.msra.mxu0 %v614
        %1412 = vmatprep.subr.mxu0 0.0
        %1413 = vmatpush1.msra.mxu0 %v615
        %1414 = vmatprep.subr.mxu0 0.0
        %1415 = vmatpush1.msra.mxu0 %v616
        %1416 = vmatprep.subr.mxu0 0.0
        %1417 = vmatpush1.msra.mxu0 0.0
        %1418 = vmatprep.subr.mxu0 0.0
        %1419 = vmatpush1.msra.mxu0 0.0
        %1420 = vmatprep.subr.mxu0 0.0
        %1421 = vmatpush1.msra.mxu0 0.0
        %1422 = vmatprep.subr.mxu0 0.0
        %1423 = vmatpush1.msra.mxu0 0.0
        %1424 = vmatprep.subr.mxu0 0.0
        %1425 = vmatpush1.msra.mxu0 0.0
        %1426 = vmatprep.subr.mxu0 0.0
        %1427 = vmatpush1.msra.mxu0 0.0
        %1428 = vmatprep.subr.mxu0 0.0
        %1429 = vmatpush1.msra.mxu0 0.0
        %1430 = vmatprep.subr.mxu0 0.0
        %1431 = vmatpush1.msra.mxu0 0.0
        %1432 = vmatprep.subr.mxu0 0.0
        %1433 = vmatpush1.msra.mxu0 0.0
        %1434 = vmatprep.subr.mxu0 0.0
        %1435 = vmatpush1.msra.mxu0 0.0
        %1436 = vmatprep.subr.mxu0 0.0
        %1437 = vmatpush1.msra.mxu0 0.0
        %1438 = vmatprep.subr.mxu0 0.0
        %1439 = vmatpush1.msra.mxu0 0.0
        %1440 = vmatprep.subr.mxu0 0.0
        %1441 = vmatpush1.msra.mxu0 0.0
        %1442 = vmatprep.subr.mxu0 0.0
        %1443 = vmatpush1.msra.mxu0 0.0
        %1444 = vmatprep.subr.mxu0 0.0
        %1445 = vmatpush1.msra.mxu0 0.0
        %1446 = vmatprep.subr.mxu0 0.0
        %1447 = vmatpush1.msra.mxu0 0.0
        %1448 = vmatprep.subr.mxu0 0.0
        %1449 = vmatpush1.msra.mxu0 0.0
        %1450 = vmatprep.subr.mxu0 0.0
        %1451 = vmatpush1.msra.mxu0 0.0
        %1452 = vmatprep.subr.mxu0 0.0
        %1453 = vmatpush1.msra.mxu0 0.0
        %1454 = vmatprep.subr.mxu0 0.0
        %1455 = vmatpush1.msra.mxu0 0.0
        %1456 = vmatprep.subr.mxu0 0.0
        %1457 = vmatpush1.msra.mxu0 0.0
        %1458 = vmatprep.subr.mxu0 0.0
        %1459 = vmatpush1.msra.mxu0 0.0
        %1460 = vmatprep.subr.mxu0 0.0
        %1461 = vmatpush1.msra.mxu0 0.0
        %1462 = vmatprep.subr.mxu0 0.0
        %1463 = vmatpush1.msra.mxu0 0.0
        %1464 = vmatprep.subr.mxu0 0.0
        %1465 = vmatpush1.msra.mxu0 0.0
        %1466 = vmatprep.subr.mxu0 0.0
        %1467 = vmatpush1.msra.mxu0 0.0
        %1468 = vmatprep.subr.mxu0 0.0
        %1469 = vmatpush1.msra.mxu0 0.0
        %1470 = vmatprep.subr.mxu0 0.0
        %1471 = vmatpush1.msra.mxu0 0.0
        %1472 = vmatprep.mubr.f32.mxu0 0.0
        %1473 = vmatmul.mubr.f32.gmra.mrb[0].mxu0 %v706
        %v1474 = vpop.f32.mrb[0].mxu0
        %v1475 = vadd.f32 %v688, %v1474
        %v1476 = vpop.f32.mrb[0].mxu0
        %1477 = vdwg.mxu0
        %1478 = vmatprep.subr.mxu0 0.0
        %1479 = vmatpush1.msra.mxu0 %v617
        %1480 = vmatprep.subr.mxu0 0.0
        %1481 = vmatpush1.msra.mxu0 %v618
        %1482 = vmatprep.subr.mxu0 0.0
        %1483 = vmatpush1.msra.mxu0 %v619
        %1484 = vmatprep.subr.mxu0 0.0
        %1485 = vmatpush1.msra.mxu0 %v620
        %1486 = vmatprep.subr.mxu0 0.0
        %1487 = vmatpush1.msra.mxu0 0.0
        %1488 = vmatprep.subr.mxu0 0.0
        %1489 = vmatpush1.msra.mxu0 0.0
        %1490 = vmatprep.subr.mxu0 0.0
        %1491 = vmatpush1.msra.mxu0 0.0
        %1492 = vmatprep.subr.mxu0 0.0
        %1493 = vmatpush1.msra.mxu0 0.0
        %1494 = vmatprep.subr.mxu0 0.0
        %1495 = vmatpush1.msra.mxu0 0.0
        %1496 = vmatprep.subr.mxu0 0.0
        %1497 = vmatpush1.msra.mxu0 0.0
        %1498 = vmatprep.subr.mxu0 0.0
        %1499 = vmatpush1.msra.mxu0 0.0
        %1500 = vmatprep.subr.mxu0 0.0
        %1501 = vmatpush1.msra.mxu0 0.0
        %1502 = vmatprep.subr.mxu0 0.0
        %1503 = vmatpush1.msra.mxu0 0.0
        %1504 = vmatprep.subr.mxu0 0.0
        %1505 = vmatpush1.msra.mxu0 0.0
        %1506 = vmatprep.subr.mxu0 0.0
        %1507 = vmatpush1.msra.mxu0 0.0
        %1508 = vmatprep.subr.mxu0 0.0
        %1509 = vmatpush1.msra.mxu0 0.0
        %1510 = vmatprep.subr.mxu0 0.0
        %1511 = vmatpush1.msra.mxu0 0.0
        %1512 = vmatprep.subr.mxu0 0.0
        %1513 = vmatpush1.msra.mxu0 0.0
        %1514 = vmatprep.subr.mxu0 0.0
        %1515 = vmatpush1.msra.mxu0 0.0
        %1516 = vmatprep.subr.mxu0 0.0
        %1517 = vmatpush1.msra.mxu0 0.0
        %1518 = vmatprep.subr.mxu0 0.0
        %1519 = vmatpush1.msra.mxu0 0.0
        %1520 = vmatprep.subr.mxu0 0.0
        %1521 = vmatpush1.msra.mxu0 0.0
        %1522 = vmatprep.subr.mxu0 0.0
        %1523 = vmatpush1.msra.mxu0 0.0
        %1524 = vmatprep.subr.mxu0 0.0
        %1525 = vmatpush1.msra.mxu0 0.0
        %1526 = vmatprep.subr.mxu0 0.0
        %1527 = vmatpush1.msra.mxu0 0.0
        %1528 = vmatprep.subr.mxu0 0.0
        %1529 = vmatpush1.msra.mxu0 0.0
        %1530 = vmatprep.subr.mxu0 0.0
        %1531 = vmatpush1.msra.mxu0 0.0
        %1532 = vmatprep.subr.mxu0 0.0
        %1533 = vmatpush1.msra.mxu0 0.0
        %1534 = vmatprep.subr.mxu0 0.0
        %1535 = vmatpush1.msra.mxu0 0.0
        %1536 = vmatprep.subr.mxu0 0.0
        %1537 = vmatpush1.msra.mxu0 0.0
        %1538 = vmatprep.subr.mxu0 0.0
        %1539 = vmatpush1.msra.mxu0 0.0
        %1540 = vmatprep.subr.mxu0 0.0
        %1541 = vmatpush1.msra.mxu0 0.0
        %1542 = vmatprep.mubr.f32.mxu0 0.0
        %1543 = vmatmul.mubr.f32.gmra.mrb[0].mxu0 %v706
        %v1544 = vpop.f32.mrb[0].mxu0
        %v1545 = vadd.f32 %v692, %v1544
        %v1546 = vpop.f32.mrb[0].mxu0
        %1547 = vdwg.mxu0
        %v1549 = vlaneseq
        %v1550 = vshrl.u32 %v1549, 7
        %v1551 = vsub.s32 0, %v1550
        %v1552 = vrot.slane %v534, %v1551
        %vm1554 = vcmask 64512
        %v1556 = vsel %vm1554, %v775, 0
        %v1559 = vsel %vm1554, %v1055, 0
        %1561 = vmatprep.subr.mxu0 0.0
        %1562 = vmatpush1.xpose.msra.mxu0 %v1559
        %1563 = vmatprep.subr.mxu0 0.0
        %1564 = vmatpush1.xpose.msra.mxu0 0.0
        %1565 = vmatprep.subr.mxu0 0.0
        %1566 = vmatpush1.xpose.msra.mxu0 0.0
        %1567 = vmatprep.subr.mxu0 0.0
        %1568 = vmatpush1.xpose.msra.mxu0 0.0
        %1569 = vmatprep.subr.mxu0 0.0
        %1570 = vmatpush1.xpose.msra.mxu0 0.0
        %1571 = vmatprep.subr.mxu0 0.0
        %1572 = vmatpush1.xpose.msra.mxu0 0.0
        %1573 = vmatprep.subr.mxu0 0.0
        %1574 = vmatpush1.xpose.msra.mxu0 0.0
        %1575 = vmatprep.subr.mxu0 0.0
        %1576 = vmatpush1.xpose.msra.mxu0 0.0
        %1577 = vmatprep.subr.mxu0 0.0
        %1578 = vmatpush1.xpose.msra.mxu0 0.0
        %1579 = vmatprep.subr.mxu0 0.0
        %1580 = vmatpush1.xpose.msra.mxu0 0.0
        %1581 = vmatprep.subr.mxu0 0.0
        %1582 = vmatpush1.xpose.msra.mxu0 0.0
        %1583 = vmatprep.subr.mxu0 0.0
        %1584 = vmatpush1.xpose.msra.mxu0 0.0
        %1585 = vmatprep.subr.mxu0 0.0
        %1586 = vmatpush1.xpose.msra.mxu0 0.0
        %1587 = vmatprep.subr.mxu0 0.0
        %1588 = vmatpush1.xpose.msra.mxu0 0.0
        %1589 = vmatprep.subr.mxu0 0.0
        %1590 = vmatpush1.xpose.msra.mxu0 0.0
        %1591 = vmatprep.subr.mxu0 0.0
        %1592 = vmatpush1.xpose.msra.mxu0 0.0
        %1593 = vmatprep.subr.mxu0 0.0
        %1594 = vmatpush1.xpose.msra.mxu0 0.0
        %1595 = vmatprep.subr.mxu0 0.0
        %1596 = vmatpush1.xpose.msra.mxu0 0.0
        %1597 = vmatprep.subr.mxu0 0.0
        %1598 = vmatpush1.xpose.msra.mxu0 0.0
        %1599 = vmatprep.subr.mxu0 0.0
        %1600 = vmatpush1.xpose.msra.mxu0 0.0
        %1601 = vmatprep.subr.mxu0 0.0
        %1602 = vmatpush1.xpose.msra.mxu0 0.0
        %1603 = vmatprep.subr.mxu0 0.0
        %1604 = vmatpush1.xpose.msra.mxu0 0.0
        %1605 = vmatprep.subr.mxu0 0.0
        %1606 = vmatpush1.xpose.msra.mxu0 0.0
        %1607 = vmatprep.subr.mxu0 0.0
        %1608 = vmatpush1.xpose.msra.mxu0 0.0
        %1609 = vmatprep.subr.mxu0 0.0
        %1610 = vmatpush1.xpose.msra.mxu0 0.0
        %1611 = vmatprep.subr.mxu0 0.0
        %1612 = vmatpush1.xpose.msra.mxu0 0.0
        %1613 = vmatprep.subr.mxu0 0.0
        %1614 = vmatpush1.xpose.msra.mxu0 0.0
        %1615 = vmatprep.subr.mxu0 0.0
        %1616 = vmatpush1.xpose.msra.mxu0 0.0
        %1617 = vmatprep.subr.mxu0 0.0
        %1618 = vmatpush1.xpose.msra.mxu0 0.0
        %1619 = vmatprep.subr.mxu0 0.0
        %1620 = vmatpush1.xpose.msra.mxu0 0.0
        %1621 = vmatprep.subr.mxu0 0.0
        %1622 = vmatpush1.xpose.msra.mxu0 0.0
        %1623 = vmatprep.subr.mxu0 0.0
        %1624 = vmatpush1.xpose.msra.mxu0 0.0
        %1625 = vmatprep.mubr.f32.mxu0 0.0
        %1626 = vmatmul.mubr.f32.gmra.mrb[0].mxu0 %v1556
        %v1627 = vpop.f32.mrb[0].mxu0
        %v1628 = vadd.f32 %v1552, %v1627
        %v1629 = vpop.f32.mrb[0].mxu0
        %1630 = vdwg.mxu0
        %v1632 = vsel %vm1554, %v845, 0
        %v1635 = vsel %vm1554, %v1125, 0
        %1637 = vmatprep.subr.mxu0 0.0
        %1638 = vmatpush1.xpose.msra.mxu0 %v1635
        %1639 = vmatprep.subr.mxu0 0.0
        %1640 = vmatpush1.xpose.msra.mxu0 0.0
        %1641 = vmatprep.subr.mxu0 0.0
        %1642 = vmatpush1.xpose.msra.mxu0 0.0
        %1643 = vmatprep.subr.mxu0 0.0
        %1644 = vmatpush1.xpose.msra.mxu0 0.0
        %1645 = vmatprep.subr.mxu0 0.0
        %1646 = vmatpush1.xpose.msra.mxu0 0.0
        %1647 = vmatprep.subr.mxu0 0.0
        %1648 = vmatpush1.xpose.msra.mxu0 0.0
        %1649 = vmatprep.subr.mxu0 0.0
        %1650 = vmatpush1.xpose.msra.mxu0 0.0
        %1651 = vmatprep.subr.mxu0 0.0
        %1652 = vmatpush1.xpose.msra.mxu0 0.0
        %1653 = vmatprep.subr.mxu0 0.0
        %1654 = vmatpush1.xpose.msra.mxu0 0.0
        %1655 = vmatprep.subr.mxu0 0.0
        %1656 = vmatpush1.xpose.msra.mxu0 0.0
        %1657 = vmatprep.subr.mxu0 0.0
        %1658 = vmatpush1.xpose.msra.mxu0 0.0
        %1659 = vmatprep.subr.mxu0 0.0
        %1660 = vmatpush1.xpose.msra.mxu0 0.0
        %1661 = vmatprep.subr.mxu0 0.0
        %1662 = vmatpush1.xpose.msra.mxu0 0.0
        %1663 = vmatprep.subr.mxu0 0.0
        %1664 = vmatpush1.xpose.msra.mxu0 0.0
        %1665 = vmatprep.subr.mxu0 0.0
        %1666 = vmatpush1.xpose.msra.mxu0 0.0
        %1667 = vmatprep.subr.mxu0 0.0
        %1668 = vmatpush1.xpose.msra.mxu0 0.0
        %1669 = vmatprep.subr.mxu0 0.0
        %1670 = vmatpush1.xpose.msra.mxu0 0.0
        %1671 = vmatprep.subr.mxu0 0.0
        %1672 = vmatpush1.xpose.msra.mxu0 0.0
        %1673 = vmatprep.subr.mxu0 0.0
        %1674 = vmatpush1.xpose.msra.mxu0 0.0
        %1675 = vmatprep.subr.mxu0 0.0
        %1676 = vmatpush1.xpose.msra.mxu0 0.0
        %1677 = vmatprep.subr.mxu0 0.0
        %1678 = vmatpush1.xpose.msra.mxu0 0.0
        %1679 = vmatprep.subr.mxu0 0.0
        %1680 = vmatpush1.xpose.msra.mxu0 0.0
        %1681 = vmatprep.subr.mxu0 0.0
        %1682 = vmatpush1.xpose.msra.mxu0 0.0
        %1683 = vmatprep.subr.mxu0 0.0
        %1684 = vmatpush1.xpose.msra.mxu0 0.0
        %1685 = vmatprep.subr.mxu0 0.0
        %1686 = vmatpush1.xpose.msra.mxu0 0.0
        %1687 = vmatprep.subr.mxu0 0.0
        %1688 = vmatpush1.xpose.msra.mxu0 0.0
        %1689 = vmatprep.subr.mxu0 0.0
        %1690 = vmatpush1.xpose.msra.mxu0 0.0
        %1691 = vmatprep.subr.mxu0 0.0
        %1692 = vmatpush1.xpose.msra.mxu0 0.0
        %1693 = vmatprep.subr.mxu0 0.0
        %1694 = vmatpush1.xpose.msra.mxu0 0.0
        %1695 = vmatprep.subr.mxu0 0.0
        %1696 = vmatpush1.xpose.msra.mxu0 0.0
        %1697 = vmatprep.subr.mxu0 0.0
        %1698 = vmatpush1.xpose.msra.mxu0 0.0
        %1699 = vmatprep.subr.mxu0 0.0
        %1700 = vmatpush1.xpose.msra.mxu0 0.0
        %1701 = vmatprep.mubr.f32.mxu0 0.0
        %1702 = vmatmul.mubr.f32.gmra.mrb[0].mxu0 %v1632
        %v1703 = vpop.f32.mrb[0].mxu0
        %v1704 = vadd.f32 %v1552, %v1703
        %v1705 = vpop.f32.mrb[0].mxu0
        %1706 = vdwg.mxu0
        %v1708 = vsel %vm1554, %v915, 0
        %v1711 = vsel %vm1554, %v1195, 0
        %1713 = vmatprep.subr.mxu0 0.0
        %1714 = vmatpush1.xpose.msra.mxu0 %v1711
        %1715 = vmatprep.subr.mxu0 0.0
        %1716 = vmatpush1.xpose.msra.mxu0 0.0
        %1717 = vmatprep.subr.mxu0 0.0
        %1718 = vmatpush1.xpose.msra.mxu0 0.0
        %1719 = vmatprep.subr.mxu0 0.0
        %1720 = vmatpush1.xpose.msra.mxu0 0.0
        %1721 = vmatprep.subr.mxu0 0.0
        %1722 = vmatpush1.xpose.msra.mxu0 0.0
        %1723 = vmatprep.subr.mxu0 0.0
        %1724 = vmatpush1.xpose.msra.mxu0 0.0
        %1725 = vmatprep.subr.mxu0 0.0
        %1726 = vmatpush1.xpose.msra.mxu0 0.0
        %1727 = vmatprep.subr.mxu0 0.0
        %1728 = vmatpush1.xpose.msra.mxu0 0.0
        %1729 = vmatprep.subr.mxu0 0.0
        %1730 = vmatpush1.xpose.msra.mxu0 0.0
        %1731 = vmatprep.subr.mxu0 0.0
        %1732 = vmatpush1.xpose.msra.mxu0 0.0
        %1733 = vmatprep.subr.mxu0 0.0
        %1734 = vmatpush1.xpose.msra.mxu0 0.0
        %1735 = vmatprep.subr.mxu0 0.0
        %1736 = vmatpush1.xpose.msra.mxu0 0.0
        %1737 = vmatprep.subr.mxu0 0.0
        %1738 = vmatpush1.xpose.msra.mxu0 0.0
        %1739 = vmatprep.subr.mxu0 0.0
        %1740 = vmatpush1.xpose.msra.mxu0 0.0
        %1741 = vmatprep.subr.mxu0 0.0
        %1742 = vmatpush1.xpose.msra.mxu0 0.0
        %1743 = vmatprep.subr.mxu0 0.0
        %1744 = vmatpush1.xpose.msra.mxu0 0.0
        %1745 = vmatprep.subr.mxu0 0.0
        %1746 = vmatpush1.xpose.msra.mxu0 0.0
        %1747 = vmatprep.subr.mxu0 0.0
        %1748 = vmatpush1.xpose.msra.mxu0 0.0
        %1749 = vmatprep.subr.mxu0 0.0
        %1750 = vmatpush1.xpose.msra.mxu0 0.0
        %1751 = vmatprep.subr.mxu0 0.0
        %1752 = vmatpush1.xpose.msra.mxu0 0.0
        %1753 = vmatprep.subr.mxu0 0.0
        %1754 = vmatpush1.xpose.msra.mxu0 0.0
        %1755 = vmatprep.subr.mxu0 0.0
        %1756 = vmatpush1.xpose.msra.mxu0 0.0
        %1757 = vmatprep.subr.mxu0 0.0
        %1758 = vmatpush1.xpose.msra.mxu0 0.0
        %1759 = vmatprep.subr.mxu0 0.0
        %1760 = vmatpush1.xpose.msra.mxu0 0.0
        %1761 = vmatprep.subr.mxu0 0.0
        %1762 = vmatpush1.xpose.msra.mxu0 0.0
        %1763 = vmatprep.subr.mxu0 0.0
        %1764 = vmatpush1.xpose.msra.mxu0 0.0
        %1765 = vmatprep.subr.mxu0 0.0
        %1766 = vmatpush1.xpose.msra.mxu0 0.0
        %1767 = vmatprep.subr.mxu0 0.0
        %1768 = vmatpush1.xpose.msra.mxu0 0.0
        %1769 = vmatprep.subr.mxu0 0.0
        %1770 = vmatpush1.xpose.msra.mxu0 0.0
        %1771 = vmatprep.subr.mxu0 0.0
        %1772 = vmatpush1.xpose.msra.mxu0 0.0
        %1773 = vmatprep.subr.mxu0 0.0
        %1774 = vmatpush1.xpose.msra.mxu0 0.0
        %1775 = vmatprep.subr.mxu0 0.0
        %1776 = vmatpush1.xpose.msra.mxu0 0.0
        %1777 = vmatprep.mubr.f32.mxu0 0.0
        %1778 = vmatmul.mubr.f32.gmra.mrb[0].mxu0 %v1708
        %v1779 = vpop.f32.mrb[0].mxu0
        %v1780 = vadd.f32 %v1552, %v1779
        %v1781 = vpop.f32.mrb[0].mxu0
        %1782 = vdwg.mxu0
        %v1784 = vsel %vm1554, %v985, 0
        %v1787 = vsel %vm1554, %v1265, 0
        %1789 = vmatprep.subr.mxu0 0.0
        %1790 = vmatpush1.xpose.msra.mxu0 %v1787
        %1791 = vmatprep.subr.mxu0 0.0
        %1792 = vmatpush1.xpose.msra.mxu0 0.0
        %1793 = vmatprep.subr.mxu0 0.0
        %1794 = vmatpush1.xpose.msra.mxu0 0.0
        %1795 = vmatprep.subr.mxu0 0.0
        %1796 = vmatpush1.xpose.msra.mxu0 0.0
        %1797 = vmatprep.subr.mxu0 0.0
        %1798 = vmatpush1.xpose.msra.mxu0 0.0
        %1799 = vmatprep.subr.mxu0 0.0
        %1800 = vmatpush1.xpose.msra.mxu0 0.0
        %1801 = vmatprep.subr.mxu0 0.0
        %1802 = vmatpush1.xpose.msra.mxu0 0.0
        %1803 = vmatprep.subr.mxu0 0.0
        %1804 = vmatpush1.xpose.msra.mxu0 0.0
        %1805 = vmatprep.subr.mxu0 0.0
        %1806 = vmatpush1.xpose.msra.mxu0 0.0
        %1807 = vmatprep.subr.mxu0 0.0
        %1808 = vmatpush1.xpose.msra.mxu0 0.0
        %1809 = vmatprep.subr.mxu0 0.0
        %1810 = vmatpush1.xpose.msra.mxu0 0.0
        %1811 = vmatprep.subr.mxu0 0.0
        %1812 = vmatpush1.xpose.msra.mxu0 0.0
        %1813 = vmatprep.subr.mxu0 0.0
        %1814 = vmatpush1.xpose.msra.mxu0 0.0
        %1815 = vmatprep.subr.mxu0 0.0
        %1816 = vmatpush1.xpose.msra.mxu0 0.0
        %1817 = vmatprep.subr.mxu0 0.0
        %1818 = vmatpush1.xpose.msra.mxu0 0.0
        %1819 = vmatprep.subr.mxu0 0.0
        %1820 = vmatpush1.xpose.msra.mxu0 0.0
        %1821 = vmatprep.subr.mxu0 0.0
        %1822 = vmatpush1.xpose.msra.mxu0 0.0
        %1823 = vmatprep.subr.mxu0 0.0
        %1824 = vmatpush1.xpose.msra.mxu0 0.0
        %1825 = vmatprep.subr.mxu0 0.0
        %1826 = vmatpush1.xpose.msra.mxu0 0.0
        %1827 = vmatprep.subr.mxu0 0.0
        %1828 = vmatpush1.xpose.msra.mxu0 0.0
        %1829 = vmatprep.subr.mxu0 0.0
        %1830 = vmatpush1.xpose.msra.mxu0 0.0
        %1831 = vmatprep.subr.mxu0 0.0
        %1832 = vmatpush1.xpose.msra.mxu0 0.0
        %1833 = vmatprep.subr.mxu0 0.0
        %1834 = vmatpush1.xpose.msra.mxu0 0.0
        %1835 = vmatprep.subr.mxu0 0.0
        %1836 = vmatpush1.xpose.msra.mxu0 0.0
        %1837 = vmatprep.subr.mxu0 0.0
        %1838 = vmatpush1.xpose.msra.mxu0 0.0
        %1839 = vmatprep.subr.mxu0 0.0
        %1840 = vmatpush1.xpose.msra.mxu0 0.0
        %1841 = vmatprep.subr.mxu0 0.0
        %1842 = vmatpush1.xpose.msra.mxu0 0.0
        %1843 = vmatprep.subr.mxu0 0.0
        %1844 = vmatpush1.xpose.msra.mxu0 0.0
        %1845 = vmatprep.subr.mxu0 0.0
        %1846 = vmatpush1.xpose.msra.mxu0 0.0
        %1847 = vmatprep.subr.mxu0 0.0
        %1848 = vmatpush1.xpose.msra.mxu0 0.0
        %1849 = vmatprep.subr.mxu0 0.0
        %1850 = vmatpush1.xpose.msra.mxu0 0.0
        %1851 = vmatprep.subr.mxu0 0.0
        %1852 = vmatpush1.xpose.msra.mxu0 0.0
        %1853 = vmatprep.mubr.f32.mxu0 0.0
        %1854 = vmatmul.mubr.f32.gmra.mrb[0].mxu0 %v1784
        %v1855 = vpop.f32.mrb[0].mxu0
        %v1856 = vadd.f32 %v1552, %v1855
        %v1857 = vpop.f32.mrb[0].mxu0
        %1858 = vdwg.mxu0
        %v1859 = vsel %vm1554, %v1628, -inf
        %1860 = vmax.xlane.f32.xlu0 %v1859
        %v1861 = vpop.xlane.xlu0 %1860
        %v1862 = vsel %vm1554, %v1704, -inf
        %1863 = vmax.xlane.f32.xlu0 %v1862
        %v1864 = vpop.xlane.xlu0 %1863
        %v1865 = vsel %vm1554, %v1780, -inf
        %1866 = vmax.xlane.f32.xlu0 %v1865
        %v1867 = vpop.xlane.xlu0 %1866
        %v1868 = vsel %vm1554, %v1856, -inf
        %1869 = vmax.xlane.f32.xlu0 %v1868
        %v1870 = vpop.xlane.xlu0 %1869
        %v1871 = vsub.f32 %v1628, %v1861
        %v1872 = vsub.f32 %v1704, %v1864
        %v1873 = vsub.f32 %v1780, %v1867
        %v1874 = vsub.f32 %v1856, %v1870
        %v1875 = vmul.f32 %v1871, 1.442695
        %v1876 = vpow.pop %v1875
        %v1877 = vmul.f32 %v1872, 1.442695
        %v1878 = vpow.pop %v1877
        %v1879 = vmul.f32 %v1873, 1.442695
        %v1880 = vpow.pop %v1879
        %v1881 = vmul.f32 %v1874, 1.442695
        %v1882 = vpow.pop %v1881
        %v1883 = vsel %vm1554, %v1876, 0.0
        %1884 = vadd.xlane.f32.xlu0 %v1883
        %v1885 = vpop.xlane.xlu0 %1884
        %v1886 = vsel %vm1554, %v1878, 0.0
        %1887 = vadd.xlane.f32.xlu0 %v1886
        %v1888 = vpop.xlane.xlu0 %1887
        %v1889 = vsel %vm1554, %v1880, 0.0
        %1890 = vadd.xlane.f32.xlu0 %v1889
        %v1891 = vpop.xlane.xlu0 %1890
        %v1892 = vsel %vm1554, %v1882, 0.0
        %1893 = vadd.xlane.f32.xlu0 %v1892
        %v1894 = vpop.xlane.xlu0 %1893
        %v1895 = vrcp.pop %v1885
        %v1896 = vrcp.pop %v1888
        %v1897 = vrcp.pop %v1891
        %v1898 = vrcp.pop %v1894
        %v1899 = vmul.f32 %v1876, %v1895
        %v1900 = vmul.f32 %v1878, %v1896
        %v1901 = vmul.f32 %v1880, %v1897
        %v1902 = vmul.f32 %v1882, %v1898
        %v1904 = vsel %vm1554, %v1899, 0
        %1906 = vmatprep.subr.mxu0 0.0
        %1907 = vmatpush1.msra.mxu0 %v1335
        %1908 = vmatprep.subr.mxu0 0.0
        %1909 = vmatpush1.msra.mxu0 0.0
        %1910 = vmatprep.subr.mxu0 0.0
        %1911 = vmatpush1.msra.mxu0 0.0
        %1912 = vmatprep.subr.mxu0 0.0
        %1913 = vmatpush1.msra.mxu0 0.0
        %1914 = vmatprep.subr.mxu0 0.0
        %1915 = vmatpush1.msra.mxu0 0.0
        %1916 = vmatprep.subr.mxu0 0.0
        %1917 = vmatpush1.msra.mxu0 0.0
        %1918 = vmatprep.subr.mxu0 0.0
        %1919 = vmatpush1.msra.mxu0 0.0
        %1920 = vmatprep.subr.mxu0 0.0
        %1921 = vmatpush1.msra.mxu0 0.0
        %1922 = vmatprep.subr.mxu0 0.0
        %1923 = vmatpush1.msra.mxu0 0.0
        %1924 = vmatprep.subr.mxu0 0.0
        %1925 = vmatpush1.msra.mxu0 0.0
        %1926 = vmatprep.subr.mxu0 0.0
        %1927 = vmatpush1.msra.mxu0 0.0
        %1928 = vmatprep.subr.mxu0 0.0
        %1929 = vmatpush1.msra.mxu0 0.0
        %1930 = vmatprep.subr.mxu0 0.0
        %1931 = vmatpush1.msra.mxu0 0.0
        %1932 = vmatprep.subr.mxu0 0.0
        %1933 = vmatpush1.msra.mxu0 0.0
        %1934 = vmatprep.subr.mxu0 0.0
        %1935 = vmatpush1.msra.mxu0 0.0
        %1936 = vmatprep.subr.mxu0 0.0
        %1937 = vmatpush1.msra.mxu0 0.0
        %1938 = vmatprep.subr.mxu0 0.0
        %1939 = vmatpush1.msra.mxu0 0.0
        %1940 = vmatprep.subr.mxu0 0.0
        %1941 = vmatpush1.msra.mxu0 0.0
        %1942 = vmatprep.subr.mxu0 0.0
        %1943 = vmatpush1.msra.mxu0 0.0
        %1944 = vmatprep.subr.mxu0 0.0
        %1945 = vmatpush1.msra.mxu0 0.0
        %1946 = vmatprep.subr.mxu0 0.0
        %1947 = vmatpush1.msra.mxu0 0.0
        %1948 = vmatprep.subr.mxu0 0.0
        %1949 = vmatpush1.msra.mxu0 0.0
        %1950 = vmatprep.subr.mxu0 0.0
        %1951 = vmatpush1.msra.mxu0 0.0
        %1952 = vmatprep.subr.mxu0 0.0
        %1953 = vmatpush1.msra.mxu0 0.0
        %1954 = vmatprep.subr.mxu0 0.0
        %1955 = vmatpush1.msra.mxu0 0.0
        %1956 = vmatprep.subr.mxu0 0.0
        %1957 = vmatpush1.msra.mxu0 0.0
        %1958 = vmatprep.subr.mxu0 0.0
        %1959 = vmatpush1.msra.mxu0 0.0
        %1960 = vmatprep.subr.mxu0 0.0
        %1961 = vmatpush1.msra.mxu0 0.0
        %1962 = vmatprep.subr.mxu0 0.0
        %1963 = vmatpush1.msra.mxu0 0.0
        %1964 = vmatprep.subr.mxu0 0.0
        %1965 = vmatpush1.msra.mxu0 0.0
        %1966 = vmatprep.subr.mxu0 0.0
        %1967 = vmatpush1.msra.mxu0 0.0
        %1968 = vmatprep.subr.mxu0 0.0
        %1969 = vmatpush1.msra.mxu0 0.0
        %1970 = vmatprep.mubr.f32.mxu0 0.0
        %1971 = vmatmul.mubr.f32.gmra.mrb[0].mxu0 %v1904
        %v1972 = vpop.f32.mrb[0].mxu0
        %v1973 = vadd.f32 0.0, %v1972
        %v1974 = vpop.f32.mrb[0].mxu0
        %1975 = vdwg.mxu0
        %v1977 = vsel %vm1554, %v1900, 0
        %1979 = vmatprep.subr.mxu0 0.0
        %1980 = vmatpush1.msra.mxu0 %v1405
        %1981 = vmatprep.subr.mxu0 0.0
        %1982 = vmatpush1.msra.mxu0 0.0
        %1983 = vmatprep.subr.mxu0 0.0
        %1984 = vmatpush1.msra.mxu0 0.0
        %1985 = vmatprep.subr.mxu0 0.0
        %1986 = vmatpush1.msra.mxu0 0.0
        %1987 = vmatprep.subr.mxu0 0.0
        %1988 = vmatpush1.msra.mxu0 0.0
        %1989 = vmatprep.subr.mxu0 0.0
        %1990 = vmatpush1.msra.mxu0 0.0
        %1991 = vmatprep.subr.mxu0 0.0
        %1992 = vmatpush1.msra.mxu0 0.0
        %1993 = vmatprep.subr.mxu0 0.0
        %1994 = vmatpush1.msra.mxu0 0.0
        %1995 = vmatprep.subr.mxu0 0.0
        %1996 = vmatpush1.msra.mxu0 0.0
        %1997 = vmatprep.subr.mxu0 0.0
        %1998 = vmatpush1.msra.mxu0 0.0
        %1999 = vmatprep.subr.mxu0 0.0
        %2000 = vmatpush1.msra.mxu0 0.0
        %2001 = vmatprep.subr.mxu0 0.0
        %2002 = vmatpush1.msra.mxu0 0.0
        %2003 = vmatprep.subr.mxu0 0.0
        %2004 = vmatpush1.msra.mxu0 0.0
        %2005 = vmatprep.subr.mxu0 0.0
        %2006 = vmatpush1.msra.mxu0 0.0
        %2007 = vmatprep.subr.mxu0 0.0
        %2008 = vmatpush1.msra.mxu0 0.0
        %2009 = vmatprep.subr.mxu0 0.0
        %2010 = vmatpush1.msra.mxu0 0.0
        %2011 = vmatprep.subr.mxu0 0.0
        %2012 = vmatpush1.msra.mxu0 0.0
        %2013 = vmatprep.subr.mxu0 0.0
        %2014 = vmatpush1.msra.mxu0 0.0
        %2015 = vmatprep.subr.mxu0 0.0
        %2016 = vmatpush1.msra.mxu0 0.0
        %2017 = vmatprep.subr.mxu0 0.0
        %2018 = vmatpush1.msra.mxu0 0.0
        %2019 = vmatprep.subr.mxu0 0.0
        %2020 = vmatpush1.msra.mxu0 0.0
        %2021 = vmatprep.subr.mxu0 0.0
        %2022 = vmatpush1.msra.mxu0 0.0
        %2023 = vmatprep.subr.mxu0 0.0
        %2024 = vmatpush1.msra.mxu0 0.0
        %2025 = vmatprep.subr.mxu0 0.0
        %2026 = vmatpush1.msra.mxu0 0.0
        %2027 = vmatprep.subr.mxu0 0.0
        %2028 = vmatpush1.msra.mxu0 0.0
        %2029 = vmatprep.subr.mxu0 0.0
        %2030 = vmatpush1.msra.mxu0 0.0
        %2031 = vmatprep.subr.mxu0 0.0
        %2032 = vmatpush1.msra.mxu0 0.0
        %2033 = vmatprep.subr.mxu0 0.0
        %2034 = vmatpush1.msra.mxu0 0.0
        %2035 = vmatprep.subr.mxu0 0.0
        %2036 = vmatpush1.msra.mxu0 0.0
        %2037 = vmatprep.subr.mxu0 0.0
        %2038 = vmatpush1.msra.mxu0 0.0
        %2039 = vmatprep.subr.mxu0 0.0
        %2040 = vmatpush1.msra.mxu0 0.0
        %2041 = vmatprep.subr.mxu0 0.0
        %2042 = vmatpush1.msra.mxu0 0.0
        %2043 = vmatprep.mubr.f32.mxu0 0.0
        %2044 = vmatmul.mubr.f32.gmra.mrb[0].mxu0 %v1977
        %v2045 = vpop.f32.mrb[0].mxu0
        %v2046 = vadd.f32 0.0, %v2045
        %v2047 = vpop.f32.mrb[0].mxu0
        %2048 = vdwg.mxu0
        %v2050 = vsel %vm1554, %v1901, 0
        %2052 = vmatprep.subr.mxu0 0.0
        %2053 = vmatpush1.msra.mxu0 %v1475
        %2054 = vmatprep.subr.mxu0 0.0
        %2055 = vmatpush1.msra.mxu0 0.0
        %2056 = vmatprep.subr.mxu0 0.0
        %2057 = vmatpush1.msra.mxu0 0.0
        %2058 = vmatprep.subr.mxu0 0.0
        %2059 = vmatpush1.msra.mxu0 0.0
        %2060 = vmatprep.subr.mxu0 0.0
        %2061 = vmatpush1.msra.mxu0 0.0
        %2062 = vmatprep.subr.mxu0 0.0
        %2063 = vmatpush1.msra.mxu0 0.0
        %2064 = vmatprep.subr.mxu0 0.0
        %2065 = vmatpush1.msra.mxu0 0.0
        %2066 = vmatprep.subr.mxu0 0.0
        %2067 = vmatpush1.msra.mxu0 0.0
        %2068 = vmatprep.subr.mxu0 0.0
        %2069 = vmatpush1.msra.mxu0 0.0
        %2070 = vmatprep.subr.mxu0 0.0
        %2071 = vmatpush1.msra.mxu0 0.0
        %2072 = vmatprep.subr.mxu0 0.0
        %2073 = vmatpush1.msra.mxu0 0.0
        %2074 = vmatprep.subr.mxu0 0.0
        %2075 = vmatpush1.msra.mxu0 0.0
        %2076 = vmatprep.subr.mxu0 0.0
        %2077 = vmatpush1.msra.mxu0 0.0
        %2078 = vmatprep.subr.mxu0 0.0
        %2079 = vmatpush1.msra.mxu0 0.0
        %2080 = vmatprep.subr.mxu0 0.0
        %2081 = vmatpush1.msra.mxu0 0.0
        %2082 = vmatprep.subr.mxu0 0.0
        %2083 = vmatpush1.msra.mxu0 0.0
        %2084 = vmatprep.subr.mxu0 0.0
        %2085 = vmatpush1.msra.mxu0 0.0
        %2086 = vmatprep.subr.mxu0 0.0
        %2087 = vmatpush1.msra.mxu0 0.0
        %2088 = vmatprep.subr.mxu0 0.0
        %2089 = vmatpush1.msra.mxu0 0.0
        %2090 = vmatprep.subr.mxu0 0.0
        %2091 = vmatpush1.msra.mxu0 0.0
        %2092 = vmatprep.subr.mxu0 0.0
        %2093 = vmatpush1.msra.mxu0 0.0
        %2094 = vmatprep.subr.mxu0 0.0
        %2095 = vmatpush1.msra.mxu0 0.0
        %2096 = vmatprep.subr.mxu0 0.0
        %2097 = vmatpush1.msra.mxu0 0.0
        %2098 = vmatprep.subr.mxu0 0.0
        %2099 = vmatpush1.msra.mxu0 0.0
        %2100 = vmatprep.subr.mxu0 0.0
        %2101 = vmatpush1.msra.mxu0 0.0
        %2102 = vmatprep.subr.mxu0 0.0
        %2103 = vmatpush1.msra.mxu0 0.0
        %2104 = vmatprep.subr.mxu0 0.0
        %2105 = vmatpush1.msra.mxu0 0.0
        %2106 = vmatprep.subr.mxu0 0.0
        %2107 = vmatpush1.msra.mxu0 0.0
        %2108 = vmatprep.subr.mxu0 0.0
        %2109 = vmatpush1.msra.mxu0 0.0
        %2110 = vmatprep.subr.mxu0 0.0
        %2111 = vmatpush1.msra.mxu0 0.0
        %2112 = vmatprep.subr.mxu0 0.0
        %2113 = vmatpush1.msra.mxu0 0.0
        %2114 = vmatprep.subr.mxu0 0.0
        %2115 = vmatpush1.msra.mxu0 0.0
        %2116 = vmatprep.mubr.f32.mxu0 0.0
        %2117 = vmatmul.mubr.f32.gmra.mrb[0].mxu0 %v2050
        %v2118 = vpop.f32.mrb[0].mxu0
        %v2119 = vadd.f32 0.0, %v2118
        %v2120 = vpop.f32.mrb[0].mxu0
        %2121 = vdwg.mxu0
        %v2123 = vsel %vm1554, %v1902, 0
        %2125 = vmatprep.subr.mxu0 0.0
        %2126 = vmatpush1.msra.mxu0 %v1545
        %2127 = vmatprep.subr.mxu0 0.0
        %2128 = vmatpush1.msra.mxu0 0.0
        %2129 = vmatprep.subr.mxu0 0.0
        %2130 = vmatpush1.msra.mxu0 0.0
        %2131 = vmatprep.subr.mxu0 0.0
        %2132 = vmatpush1.msra.mxu0 0.0
        %2133 = vmatprep.subr.mxu0 0.0
        %2134 = vmatpush1.msra.mxu0 0.0
        %2135 = vmatprep.subr.mxu0 0.0
        %2136 = vmatpush1.msra.mxu0 0.0
        %2137 = vmatprep.subr.mxu0 0.0
        %2138 = vmatpush1.msra.mxu0 0.0
        %2139 = vmatprep.subr.mxu0 0.0
        %2140 = vmatpush1.msra.mxu0 0.0
        %2141 = vmatprep.subr.mxu0 0.0
        %2142 = vmatpush1.msra.mxu0 0.0
        %2143 = vmatprep.subr.mxu0 0.0
        %2144 = vmatpush1.msra.mxu0 0.0
        %2145 = vmatprep.subr.mxu0 0.0
        %2146 = vmatpush1.msra.mxu0 0.0
        %2147 = vmatprep.subr.mxu0 0.0
        %2148 = vmatpush1.msra.mxu0 0.0
        %2149 = vmatprep.subr.mxu0 0.0
        %2150 = vmatpush1.msra.mxu0 0.0
        %2151 = vmatprep.subr.mxu0 0.0
        %2152 = vmatpush1.msra.mxu0 0.0
        %2153 = vmatprep.subr.mxu0 0.0
        %2154 = vmatpush1.msra.mxu0 0.0
        %2155 = vmatprep.subr.mxu0 0.0
        %2156 = vmatpush1.msra.mxu0 0.0
        %2157 = vmatprep.subr.mxu0 0.0
        %2158 = vmatpush1.msra.mxu0 0.0
        %2159 = vmatprep.subr.mxu0 0.0
        %2160 = vmatpush1.msra.mxu0 0.0
        %2161 = vmatprep.subr.mxu0 0.0
        %2162 = vmatpush1.msra.mxu0 0.0
        %2163 = vmatprep.subr.mxu0 0.0
        %2164 = vmatpush1.msra.mxu0 0.0
        %2165 = vmatprep.subr.mxu0 0.0
        %2166 = vmatpush1.msra.mxu0 0.0
        %2167 = vmatprep.subr.mxu0 0.0
        %2168 = vmatpush1.msra.mxu0 0.0
        %2169 = vmatprep.subr.mxu0 0.0
        %2170 = vmatpush1.msra.mxu0 0.0
        %2171 = vmatprep.subr.mxu0 0.0
        %2172 = vmatpush1.msra.mxu0 0.0
        %2173 = vmatprep.subr.mxu0 0.0
        %2174 = vmatpush1.msra.mxu0 0.0
        %2175 = vmatprep.subr.mxu0 0.0
        %2176 = vmatpush1.msra.mxu0 0.0
        %2177 = vmatprep.subr.mxu0 0.0
        %2178 = vmatpush1.msra.mxu0 0.0
        %2179 = vmatprep.subr.mxu0 0.0
        %2180 = vmatpush1.msra.mxu0 0.0
        %2181 = vmatprep.subr.mxu0 0.0
        %2182 = vmatpush1.msra.mxu0 0.0
        %2183 = vmatprep.subr.mxu0 0.0
        %2184 = vmatpush1.msra.mxu0 0.0
        %2185 = vmatprep.subr.mxu0 0.0
        %2186 = vmatpush1.msra.mxu0 0.0
        %2187 = vmatprep.subr.mxu0 0.0
        %2188 = vmatpush1.msra.mxu0 0.0
        %2189 = vmatprep.mubr.f32.mxu0 0.0
        %2190 = vmatmul.mubr.f32.gmra.mrb[0].mxu0 %v2123
        %v2191 = vpop.f32.mrb[0].mxu0
        %v2192 = vadd.f32 0.0, %v2191
        %v2193 = vpop.f32.mrb[0].mxu0
        %2194 = vdwg.mxu0
        %v2195 = vld [vmem:[%s6] sm:$0xff]
        %v2196 = vld [vmem:[%s6 + $0x8] sm:$0xff]
        %v2197 = vld [vmem:[%s6 + $0x10] sm:$0xff]
        %v2198 = vld [vmem:[%s6 + $0x18] sm:$0xff]
        %v2200 = vsel %vm1554, %v1973, 0
        %2202 = vmatprep.subr.mxu0 0.0
        %2203 = vmatpush1.msra.mxu0 %v2195
        %2204 = vmatprep.subr.mxu0 0.0
        %2205 = vmatpush1.msra.mxu0 0.0
        %2206 = vmatprep.subr.mxu0 0.0
        %2207 = vmatpush1.msra.mxu0 0.0
        %2208 = vmatprep.subr.mxu0 0.0
        %2209 = vmatpush1.msra.mxu0 0.0
        %2210 = vmatprep.subr.mxu0 0.0
        %2211 = vmatpush1.msra.mxu0 0.0
        %2212 = vmatprep.subr.mxu0 0.0
        %2213 = vmatpush1.msra.mxu0 0.0
        %2214 = vmatprep.subr.mxu0 0.0
        %2215 = vmatpush1.msra.mxu0 0.0
        %2216 = vmatprep.subr.mxu0 0.0
        %2217 = vmatpush1.msra.mxu0 0.0
        %2218 = vmatprep.subr.mxu0 0.0
        %2219 = vmatpush1.msra.mxu0 0.0
        %2220 = vmatprep.subr.mxu0 0.0
        %2221 = vmatpush1.msra.mxu0 0.0
        %2222 = vmatprep.subr.mxu0 0.0
        %2223 = vmatpush1.msra.mxu0 0.0
        %2224 = vmatprep.subr.mxu0 0.0
        %2225 = vmatpush1.msra.mxu0 0.0
        %2226 = vmatprep.subr.mxu0 0.0
        %2227 = vmatpush1.msra.mxu0 0.0
        %2228 = vmatprep.subr.mxu0 0.0
        %2229 = vmatpush1.msra.mxu0 0.0
        %2230 = vmatprep.subr.mxu0 0.0
        %2231 = vmatpush1.msra.mxu0 0.0
        %2232 = vmatprep.subr.mxu0 0.0
        %2233 = vmatpush1.msra.mxu0 0.0
        %2234 = vmatprep.subr.mxu0 0.0
        %2235 = vmatpush1.msra.mxu0 0.0
        %2236 = vmatprep.subr.mxu0 0.0
        %2237 = vmatpush1.msra.mxu0 0.0
        %2238 = vmatprep.subr.mxu0 0.0
        %2239 = vmatpush1.msra.mxu0 0.0
        %2240 = vmatprep.subr.mxu0 0.0
        %2241 = vmatpush1.msra.mxu0 0.0
        %2242 = vmatprep.subr.mxu0 0.0
        %2243 = vmatpush1.msra.mxu0 0.0
        %2244 = vmatprep.subr.mxu0 0.0
        %2245 = vmatpush1.msra.mxu0 0.0
        %2246 = vmatprep.subr.mxu0 0.0
        %2247 = vmatpush1.msra.mxu0 0.0
        %2248 = vmatprep.subr.mxu0 0.0
        %2249 = vmatpush1.msra.mxu0 0.0
        %2250 = vmatprep.subr.mxu0 0.0
        %2251 = vmatpush1.msra.mxu0 0.0
        %2252 = vmatprep.subr.mxu0 0.0
        %2253 = vmatpush1.msra.mxu0 0.0
        %2254 = vmatprep.subr.mxu0 0.0
        %2255 = vmatpush1.msra.mxu0 0.0
        %2256 = vmatprep.subr.mxu0 0.0
        %2257 = vmatpush1.msra.mxu0 0.0
        %2258 = vmatprep.subr.mxu0 0.0
        %2259 = vmatpush1.msra.mxu0 0.0
        %2260 = vmatprep.subr.mxu0 0.0
        %2261 = vmatpush1.msra.mxu0 0.0
        %2262 = vmatprep.subr.mxu0 0.0
        %2263 = vmatpush1.msra.mxu0 0.0
        %2264 = vmatprep.subr.mxu0 0.0
        %2265 = vmatpush1.msra.mxu0 0.0
        %2266 = vmatprep.mubr.f32.mxu0 0.0
        %2267 = vmatmul.mubr.f32.gmra.mrb[0].mxu0 %v2200
        %v2268 = vpop.f32.mrb[0].mxu0
        %v2269 = vadd.f32 0.0, %v2268
        %v2270 = vpop.f32.mrb[0].mxu0
        %2271 = vdwg.mxu0
        %v2273 = vsel %vm1554, %v2046, 0
        %2275 = vmatprep.subr.mxu0 0.0
        %2276 = vmatpush1.msra.mxu0 %v2196
        %2277 = vmatprep.subr.mxu0 0.0
        %2278 = vmatpush1.msra.mxu0 0.0
        %2279 = vmatprep.subr.mxu0 0.0
        %2280 = vmatpush1.msra.mxu0 0.0
        %2281 = vmatprep.subr.mxu0 0.0
        %2282 = vmatpush1.msra.mxu0 0.0
        %2283 = vmatprep.subr.mxu0 0.0
        %2284 = vmatpush1.msra.mxu0 0.0
        %2285 = vmatprep.subr.mxu0 0.0
        %2286 = vmatpush1.msra.mxu0 0.0
        %2287 = vmatprep.subr.mxu0 0.0
        %2288 = vmatpush1.msra.mxu0 0.0
        %2289 = vmatprep.subr.mxu0 0.0
        %2290 = vmatpush1.msra.mxu0 0.0
        %2291 = vmatprep.subr.mxu0 0.0
        %2292 = vmatpush1.msra.mxu0 0.0
        %2293 = vmatprep.subr.mxu0 0.0
        %2294 = vmatpush1.msra.mxu0 0.0
        %2295 = vmatprep.subr.mxu0 0.0
        %2296 = vmatpush1.msra.mxu0 0.0
        %2297 = vmatprep.subr.mxu0 0.0
        %2298 = vmatpush1.msra.mxu0 0.0
        %2299 = vmatprep.subr.mxu0 0.0
        %2300 = vmatpush1.msra.mxu0 0.0
        %2301 = vmatprep.subr.mxu0 0.0
        %2302 = vmatpush1.msra.mxu0 0.0
        %2303 = vmatprep.subr.mxu0 0.0
        %2304 = vmatpush1.msra.mxu0 0.0
        %2305 = vmatprep.subr.mxu0 0.0
        %2306 = vmatpush1.msra.mxu0 0.0
        %2307 = vmatprep.subr.mxu0 0.0
        %2308 = vmatpush1.msra.mxu0 0.0
        %2309 = vmatprep.subr.mxu0 0.0
        %2310 = vmatpush1.msra.mxu0 0.0
        %2311 = vmatprep.subr.mxu0 0.0
        %2312 = vmatpush1.msra.mxu0 0.0
        %2313 = vmatprep.subr.mxu0 0.0
        %2314 = vmatpush1.msra.mxu0 0.0
        %2315 = vmatprep.subr.mxu0 0.0
        %2316 = vmatpush1.msra.mxu0 0.0
        %2317 = vmatprep.subr.mxu0 0.0
        %2318 = vmatpush1.msra.mxu0 0.0
        %2319 = vmatprep.subr.mxu0 0.0
        %2320 = vmatpush1.msra.mxu0 0.0
        %2321 = vmatprep.subr.mxu0 0.0
        %2322 = vmatpush1.msra.mxu0 0.0
        %2323 = vmatprep.subr.mxu0 0.0
        %2324 = vmatpush1.msra.mxu0 0.0
        %2325 = vmatprep.subr.mxu0 0.0
        %2326 = vmatpush1.msra.mxu0 0.0
        %2327 = vmatprep.subr.mxu0 0.0
        %2328 = vmatpush1.msra.mxu0 0.0
        %2329 = vmatprep.subr.mxu0 0.0
        %2330 = vmatpush1.msra.mxu0 0.0
        %2331 = vmatprep.subr.mxu0 0.0
        %2332 = vmatpush1.msra.mxu0 0.0
        %2333 = vmatprep.subr.mxu0 0.0
        %2334 = vmatpush1.msra.mxu0 0.0
        %2335 = vmatprep.subr.mxu0 0.0
        %2336 = vmatpush1.msra.mxu0 0.0
        %2337 = vmatprep.subr.mxu0 0.0
        %2338 = vmatpush1.msra.mxu0 0.0
        %2339 = vmatprep.mubr.f32.mxu0 0.0
        %2340 = vmatmul.mubr.f32.gmra.mrb[0].mxu0 %v2273
        %v2341 = vpop.f32.mrb[0].mxu0
        %v2342 = vadd.f32 0.0, %v2341
        %v2343 = vpop.f32.mrb[0].mxu0
        %2344 = vdwg.mxu0
        %v2346 = vsel %vm1554, %v2119, 0
        %2348 = vmatprep.subr.mxu0 0.0
        %2349 = vmatpush1.msra.mxu0 %v2197
        %2350 = vmatprep.subr.mxu0 0.0
        %2351 = vmatpush1.msra.mxu0 0.0
        %2352 = vmatprep.subr.mxu0 0.0
        %2353 = vmatpush1.msra.mxu0 0.0
        %2354 = vmatprep.subr.mxu0 0.0
        %2355 = vmatpush1.msra.mxu0 0.0
        %2356 = vmatprep.subr.mxu0 0.0
        %2357 = vmatpush1.msra.mxu0 0.0
        %2358 = vmatprep.subr.mxu0 0.0
        %2359 = vmatpush1.msra.mxu0 0.0
        %2360 = vmatprep.subr.mxu0 0.0
        %2361 = vmatpush1.msra.mxu0 0.0
        %2362 = vmatprep.subr.mxu0 0.0
        %2363 = vmatpush1.msra.mxu0 0.0
        %2364 = vmatprep.subr.mxu0 0.0
        %2365 = vmatpush1.msra.mxu0 0.0
        %2366 = vmatprep.subr.mxu0 0.0
        %2367 = vmatpush1.msra.mxu0 0.0
        %2368 = vmatprep.subr.mxu0 0.0
        %2369 = vmatpush1.msra.mxu0 0.0
        %2370 = vmatprep.subr.mxu0 0.0
        %2371 = vmatpush1.msra.mxu0 0.0
        %2372 = vmatprep.subr.mxu0 0.0
        %2373 = vmatpush1.msra.mxu0 0.0
        %2374 = vmatprep.subr.mxu0 0.0
        %2375 = vmatpush1.msra.mxu0 0.0
        %2376 = vmatprep.subr.mxu0 0.0
        %2377 = vmatpush1.msra.mxu0 0.0
        %2378 = vmatprep.subr.mxu0 0.0
        %2379 = vmatpush1.msra.mxu0 0.0
        %2380 = vmatprep.subr.mxu0 0.0
        %2381 = vmatpush1.msra.mxu0 0.0
        %2382 = vmatprep.subr.mxu0 0.0
        %2383 = vmatpush1.msra.mxu0 0.0
        %2384 = vmatprep.subr.mxu0 0.0
        %2385 = vmatpush1.msra.mxu0 0.0
        %2386 = vmatprep.subr.mxu0 0.0
        %2387 = vmatpush1.msra.mxu0 0.0
        %2388 = vmatprep.subr.mxu0 0.0
        %2389 = vmatpush1.msra.mxu0 0.0
        %2390 = vmatprep.subr.mxu0 0.0
        %2391 = vmatpush1.msra.mxu0 0.0
        %2392 = vmatprep.subr.mxu0 0.0
        %2393 = vmatpush1.msra.mxu0 0.0
        %2394 = vmatprep.subr.mxu0 0.0
        %2395 = vmatpush1.msra.mxu0 0.0
        %2396 = vmatprep.subr.mxu0 0.0
        %2397 = vmatpush1.msra.mxu0 0.0
        %2398 = vmatprep.subr.mxu0 0.0
        %2399 = vmatpush1.msra.mxu0 0.0
        %2400 = vmatprep.subr.mxu0 0.0
        %2401 = vmatpush1.msra.mxu0 0.0
        %2402 = vmatprep.subr.mxu0 0.0
        %2403 = vmatpush1.msra.mxu0 0.0
        %2404 = vmatprep.subr.mxu0 0.0
        %2405 = vmatpush1.msra.mxu0 0.0
        %2406 = vmatprep.subr.mxu0 0.0
        %2407 = vmatpush1.msra.mxu0 0.0
        %2408 = vmatprep.subr.mxu0 0.0
        %2409 = vmatpush1.msra.mxu0 0.0
        %2410 = vmatprep.subr.mxu0 0.0
        %2411 = vmatpush1.msra.mxu0 0.0
        %2412 = vmatprep.mubr.f32.mxu0 0.0
        %2413 = vmatmul.mubr.f32.gmra.mrb[0].mxu0 %v2346
        %v2414 = vpop.f32.mrb[0].mxu0
        %v2415 = vadd.f32 0.0, %v2414
        %v2416 = vpop.f32.mrb[0].mxu0
        %2417 = vdwg.mxu0
        %v2419 = vsel %vm1554, %v2192, 0
        %2421 = vmatprep.subr.mxu0 0.0
        %2422 = vmatpush1.msra.mxu0 %v2198
        %2423 = vmatprep.subr.mxu0 0.0
        %2424 = vmatpush1.msra.mxu0 0.0
        %2425 = vmatprep.subr.mxu0 0.0
        %2426 = vmatpush1.msra.mxu0 0.0
        %2427 = vmatprep.subr.mxu0 0.0
        %2428 = vmatpush1.msra.mxu0 0.0
        %2429 = vmatprep.subr.mxu0 0.0
        %2430 = vmatpush1.msra.mxu0 0.0
        %2431 = vmatprep.subr.mxu0 0.0
        %2432 = vmatpush1.msra.mxu0 0.0
        %2433 = vmatprep.subr.mxu0 0.0
        %2434 = vmatpush1.msra.mxu0 0.0
        %2435 = vmatprep.subr.mxu0 0.0
        %2436 = vmatpush1.msra.mxu0 0.0
        %2437 = vmatprep.subr.mxu0 0.0
        %2438 = vmatpush1.msra.mxu0 0.0
        %2439 = vmatprep.subr.mxu0 0.0
        %2440 = vmatpush1.msra.mxu0 0.0
        %2441 = vmatprep.subr.mxu0 0.0
        %2442 = vmatpush1.msra.mxu0 0.0
        %2443 = vmatprep.subr.mxu0 0.0
        %2444 = vmatpush1.msra.mxu0 0.0
        %2445 = vmatprep.subr.mxu0 0.0
        %2446 = vmatpush1.msra.mxu0 0.0
        %2447 = vmatprep.subr.mxu0 0.0
        %2448 = vmatpush1.msra.mxu0 0.0
        %2449 = vmatprep.subr.mxu0 0.0
        %2450 = vmatpush1.msra.mxu0 0.0
        %2451 = vmatprep.subr.mxu0 0.0
        %2452 = vmatpush1.msra.mxu0 0.0
        %2453 = vmatprep.subr.mxu0 0.0
        %2454 = vmatpush1.msra.mxu0 0.0
        %2455 = vmatprep.subr.mxu0 0.0
        %2456 = vmatpush1.msra.mxu0 0.0
        %2457 = vmatprep.subr.mxu0 0.0
        %2458 = vmatpush1.msra.mxu0 0.0
        %2459 = vmatprep.subr.mxu0 0.0
        %2460 = vmatpush1.msra.mxu0 0.0
        %2461 = vmatprep.subr.mxu0 0.0
        %2462 = vmatpush1.msra.mxu0 0.0
        %2463 = vmatprep.subr.mxu0 0.0
        %2464 = vmatpush1.msra.mxu0 0.0
        %2465 = vmatprep.subr.mxu0 0.0
        %2466 = vmatpush1.msra.mxu0 0.0
        %2467 = vmatprep.subr.mxu0 0.0
        %2468 = vmatpush1.msra.mxu0 0.0
        %2469 = vmatprep.subr.mxu0 0.0
        %2470 = vmatpush1.msra.mxu0 0.0
        %2471 = vmatprep.subr.mxu0 0.0
        %2472 = vmatpush1.msra.mxu0 0.0
        %2473 = vmatprep.subr.mxu0 0.0
        %2474 = vmatpush1.msra.mxu0 0.0
        %2475 = vmatprep.subr.mxu0 0.0
        %2476 = vmatpush1.msra.mxu0 0.0
        %2477 = vmatprep.subr.mxu0 0.0
        %2478 = vmatpush1.msra.mxu0 0.0
        %2479 = vmatprep.subr.mxu0 0.0
        %2480 = vmatpush1.msra.mxu0 0.0
        %2481 = vmatprep.subr.mxu0 0.0
        %2482 = vmatpush1.msra.mxu0 0.0
        %2483 = vmatprep.subr.mxu0 0.0
        %2484 = vmatpush1.msra.mxu0 0.0
        %2485 = vmatprep.mubr.f32.mxu0 0.0
        %2486 = vmatmul.mubr.f32.gmra.mrb[0].mxu0 %v2419
        %v2487 = vpop.f32.mrb[0].mxu0
        %v2488 = vadd.f32 0.0, %v2487
        %v2489 = vpop.f32.mrb[0].mxu0
        %2490 = vdwg.mxu0
        %v2491 = vsel %vm537, %v2269, 0.0
        %v2492 = vsel %vm537, %v2342, 0.0
        %v2493 = vadd.f32 %v2491, %v2492
        %v2494 = vsel %vm537, %v2415, 0.0
        %v2495 = vadd.f32 %v2493, %v2494
        %v2496 = vsel %vm537, %v2488, 0.0
        %v2497 = vadd.f32 %v2495, %v2496
        %v2498 = vld [vmem:[%s7] sm:$0x1]
        %v2500 = vlaneseq
        %v2501 = vshrl.u32 %v2500, 7
        %v2502 = vsub.s32 0, %v2501
        %v2503 = vrot.slane %v2498, %v2502
        %v2505 = vadd.f32 %v2497, %v2503
        %v2506 = vadd.f32 %v531, %v2505
        %v2507 = vld [vmem:[%s8] sm:$0x1]
        %v2508 = vld [vmem:[%s9] sm:$0x1]
        %v2509 = vsel %vm537, %v2506, 0.0
        %2510 = vadd.xlane.f32.xlu0 %v2509
        %v2511 = vpop.xlane.xlu0 %2510
        %v2512 = vmul.f32 %v2511, %v541
        %v2513 = vsub.f32 %v2506, %v2512
        %v2514 = vmul.f32 %v2513, %v2513
        %v2515 = vsel %vm537, %v2514, 0.0
        %2516 = vadd.xlane.f32.xlu0 %v2515
        %v2517 = vpop.xlane.xlu0 %2516
        %v2518 = vmul.f32 %v2517, 0.032258064
        %v2519 = vrsqrt.pop %v2518
        %v2520 = vmul.f32 %v2518, %v2519
        %vm2521 = vcmp.eq.f32.partialorder %v2518, inf
        %v2522 = vsel %vm2521, %v2518, %v2520
        %vm2523 = vcmp.eq.f32.partialorder %v2518, 0.0
        %v2524 = vand.u32 %v2518, 2147483648
        %v2525 = vsel %vm2523, %v2524, %v2522
        %v2526 = vadd.f32 %v2525, 1e-06
        %v2527 = vrcp.pop %v2526
        %v2528 = vmul.f32 %v2513, %v2527
        %v2530 = vlaneseq
        %v2531 = vshrl.u32 %v2530, 7
        %v2532 = vsub.s32 0, %v2531
        %v2533 = vrot.slane %v2507, %v2532
        %v2535 = vmul.f32 %v2533, %v2528
        %v2537 = vlaneseq
        %v2538 = vshrl.u32 %v2537, 7
        %v2539 = vsub.s32 0, %v2538
        %v2540 = vrot.slane %v2508, %v2539
        %v2542 = vadd.f32 %v2535, %v2540
        %v2543 = vld [vmem:[%s10] sm:$0xff]
        %v2544 = vld [vmem:[%s10 + $0x8] sm:$0xff]
        %v2545 = vld [vmem:[%s10 + $0x10] sm:$0xff]
        %v2546 = vld [vmem:[%s10 + $0x18] sm:$0xff]
        %v2547 = vld [vmem:[%s11] sm:$0x1]
        %v2549 = vlaneseq
        %v2550 = vshrl.u32 %v2549, 7
        %v2551 = vsub.s32 0, %v2550
        %v2552 = vrot.slane %v2547, %v2551
        %v2555 = vsel %vm537, %v2542, 0
        %2557 = vmatprep.subr.mxu0 0.0
        %2558 = vmatpush1.msra.mxu0 %v2543
        %2559 = vmatprep.subr.mxu0 0.0
        %2560 = vmatpush1.msra.mxu0 %v2544
        %2561 = vmatprep.subr.mxu0 0.0
        %2562 = vmatpush1.msra.mxu0 %v2545
        %2563 = vmatprep.subr.mxu0 0.0
        %2564 = vmatpush1.msra.mxu0 %v2546
        %2565 = vmatprep.subr.mxu0 0.0
        %2566 = vmatpush1.msra.mxu0 0.0
        %2567 = vmatprep.subr.mxu0 0.0
        %2568 = vmatpush1.msra.mxu0 0.0
        %2569 = vmatprep.subr.mxu0 0.0
        %2570 = vmatpush1.msra.mxu0 0.0
        %2571 = vmatprep.subr.mxu0 0.0
        %2572 = vmatpush1.msra.mxu0 0.0
        %2573 = vmatprep.subr.mxu0 0.0
        %2574 = vmatpush1.msra.mxu0 0.0
        %2575 = vmatprep.subr.mxu0 0.0
        %2576 = vmatpush1.msra.mxu0 0.0
        %2577 = vmatprep.subr.mxu0 0.0
        %2578 = vmatpush1.msra.mxu0 0.0
        %2579 = vmatprep.subr.mxu0 0.0
        %2580 = vmatpush1.msra.mxu0 0.0
        %2581 = vmatprep.subr.mxu0 0.0
        %2582 = vmatpush1.msra.mxu0 0.0
        %2583 = vmatprep.subr.mxu0 0.0
        %2584 = vmatpush1.msra.mxu0 0.0
        %2585 = vmatprep.subr.mxu0 0.0
        %2586 = vmatpush1.msra.mxu0 0.0
        %2587 = vmatprep.subr.mxu0 0.0
        %2588 = vmatpush1.msra.mxu0 0.0
        %2589 = vmatprep.subr.mxu0 0.0
        %2590 = vmatpush1.msra.mxu0 0.0
        %2591 = vmatprep.subr.mxu0 0.0
        %2592 = vmatpush1.msra.mxu0 0.0
        %2593 = vmatprep.subr.mxu0 0.0
        %2594 = vmatpush1.msra.mxu0 0.0
        %2595 = vmatprep.subr.mxu0 0.0
        %2596 = vmatpush1.msra.mxu0 0.0
        %2597 = vmatprep.subr.mxu0 0.0
        %2598 = vmatpush1.msra.mxu0 0.0
        %2599 = vmatprep.subr.mxu0 0.0
        %2600 = vmatpush1.msra.mxu0 0.0
        %2601 = vmatprep.subr.mxu0 0.0
        %2602 = vmatpush1.msra.mxu0 0.0
        %2603 = vmatprep.subr.mxu0 0.0
        %2604 = vmatpush1.msra.mxu0 0.0
        %2605 = vmatprep.subr.mxu0 0.0
        %2606 = vmatpush1.msra.mxu0 0.0
        %2607 = vmatprep.subr.mxu0 0.0
        %2608 = vmatpush1.msra.mxu0 0.0
        %2609 = vmatprep.subr.mxu0 0.0
        %2610 = vmatpush1.msra.mxu0 0.0
        %2611 = vmatprep.subr.mxu0 0.0
        %2612 = vmatpush1.msra.mxu0 0.0
        %2613 = vmatprep.subr.mxu0 0.0
        %2614 = vmatpush1.msra.mxu0 0.0
        %2615 = vmatprep.subr.mxu0 0.0
        %2616 = vmatpush1.msra.mxu0 0.0
        %2617 = vmatprep.subr.mxu0 0.0
        %2618 = vmatpush1.msra.mxu0 0.0
        %2619 = vmatprep.subr.mxu0 0.0
        %2620 = vmatpush1.msra.mxu0 0.0
        %2621 = vmatprep.mubr.f32.mxu0 0.0
        %2622 = vmatmul.mubr.f32.gmra.mrb[0].mxu0 %v2555
        %v2623 = vpop.f32.mrb[0].mxu0
        %v2624 = vadd.f32 %v2552, %v2623
        %v2625 = vpop.f32.mrb[0].mxu0
        %2626 = vdwg.mxu0
        %v2627 = vmax.f32 %v2624, 0.0
        %v2628 = vld [vmem:[%s12] sm:$0xff]
        %v2629 = vld [vmem:[%s12 + $0x8] sm:$0xff]
        %v2630 = vld [vmem:[%s12 + $0x10] sm:$0xff]
        %v2631 = vld [vmem:[%s12 + $0x18] sm:$0xff]
        %v2632 = vld [vmem:[%s12 + $0x20] sm:$0xff]
        %v2633 = vld [vmem:[%s12 + $0x28] sm:$0xff]
        %v2634 = vld [vmem:[%s12 + $0x30] sm:$0xff]
        %v2635 = vld [vmem:[%s12 + $0x38] sm:$0xff]
        %vm2636 = vcmask 523264
        %v2638 = vsel %vm2636, %v2627, 0
        %2640 = vmatprep.subr.mxu0 0.0
        %2641 = vmatpush1.msra.mxu0 %v2628
        %2642 = vmatprep.subr.mxu0 0.0
        %2643 = vmatpush1.msra.mxu0 %v2629
        %2644 = vmatprep.subr.mxu0 0.0
        %2645 = vmatpush1.msra.mxu0 %v2630
        %2646 = vmatprep.subr.mxu0 0.0
        %2647 = vmatpush1.msra.mxu0 %v2631
        %2648 = vmatprep.subr.mxu0 0.0
        %2649 = vmatpush1.msra.mxu0 %v2632
        %2650 = vmatprep.subr.mxu0 0.0
        %2651 = vmatpush1.msra.mxu0 %v2633
        %2652 = vmatprep.subr.mxu0 0.0
        %2653 = vmatpush1.msra.mxu0 %v2634
        %2654 = vmatprep.subr.mxu0 0.0
        %2655 = vmatpush1.msra.mxu0 %v2635
        %2656 = vmatprep.subr.mxu0 0.0
        %2657 = vmatpush1.msra.mxu0 0.0
        %2658 = vmatprep.subr.mxu0 0.0
        %2659 = vmatpush1.msra.mxu0 0.0
        %2660 = vmatprep.subr.mxu0 0.0
        %2661 = vmatpush1.msra.mxu0 0.0
        %2662 = vmatprep.subr.mxu0 0.0
        %2663 = vmatpush1.msra.mxu0 0.0
        %2664 = vmatprep.subr.mxu0 0.0
        %2665 = vmatpush1.msra.mxu0 0.0
        %2666 = vmatprep.subr.mxu0 0.0
        %2667 = vmatpush1.msra.mxu0 0.0
        %2668 = vmatprep.subr.mxu0 0.0
        %2669 = vmatpush1.msra.mxu0 0.0
        %2670 = vmatprep.subr.mxu0 0.0
        %2671 = vmatpush1.msra.mxu0 0.0
        %2672 = vmatprep.subr.mxu0 0.0
        %2673 = vmatpush1.msra.mxu0 0.0
        %2674 = vmatprep.subr.mxu0 0.0
        %2675 = vmatpush1.msra.mxu0 0.0
        %2676 = vmatprep.subr.mxu0 0.0
        %2677 = vmatpush1.msra.mxu0 0.0
        %2678 = vmatprep.subr.mxu0 0.0
        %2679 = vmatpush1.msra.mxu0 0.0
        %2680 = vmatprep.subr.mxu0 0.0
        %2681 = vmatpush1.msra.mxu0 0.0
        %2682 = vmatprep.subr.mxu0 0.0
        %2683 = vmatpush1.msra.mxu0 0.0
        %2684 = vmatprep.subr.mxu0 0.0
        %2685 = vmatpush1.msra.mxu0 0.0
        %2686 = vmatprep.subr.mxu0 0.0
        %2687 = vmatpush1.msra.mxu0 0.0
        %2688 = vmatprep.subr.mxu0 0.0
        %2689 = vmatpush1.msra.mxu0 0.0
        %2690 = vmatprep.subr.mxu0 0.0
        %2691 = vmatpush1.msra.mxu0 0.0
        %2692 = vmatprep.subr.mxu0 0.0
        %2693 = vmatpush1.msra.mxu0 0.0
        %2694 = vmatprep.subr.mxu0 0.0
        %2695 = vmatpush1.msra.mxu0 0.0
        %2696 = vmatprep.subr.mxu0 0.0
        %2697 = vmatpush1.msra.mxu0 0.0
        %2698 = vmatprep.subr.mxu0 0.0
        %2699 = vmatpush1.msra.mxu0 0.0
        %2700 = vmatprep.subr.mxu0 0.0
        %2701 = vmatpush1.msra.mxu0 0.0
        %2702 = vmatprep.subr.mxu0 0.0
        %2703 = vmatpush1.msra.mxu0 0.0
        %2704 = vmatprep.mubr.f32.mxu0 0.0
        %2705 = vmatmul.mubr.f32.gmra.mrb[0].mxu0 %v2638
        %v2706 = vpop.f32.mrb[0].mxu0
        %v2707 = vadd.f32 0.0, %v2706
        %v2708 = vpop.f32.mrb[0].mxu0
        %2709 = vdwg.mxu0
        %v2710 = vadd.f32 %v2506, %v2707
        %v2711 = vld [vmem:[%s13] sm:$0x1]
        %v2713 = vlaneseq
        %v2714 = vshrl.u32 %v2713, 7
        %v2715 = vsub.s32 0, %v2714
        %v2716 = vrot.slane %v2711, %v2715
        %v2718 = vadd.f32 %v2710, %v2716
        %s2719 = scalar_lea.vmem %s2, 1
        %v2720 = vld [vmem:[%s2719] sm:$0x1]
        %s2721 = scalar_lea.vmem %s3, 1
        %v2722 = vld [vmem:[%s2721] sm:$0x1]
        %v2723 = vsel %vm537, %v2718, 0.0
        %2724 = vadd.xlane.f32.xlu0 %v2723
        %v2725 = vpop.xlane.xlu0 %2724
        %v2726 = vmul.f32 %v2725, %v541
        %v2727 = vsub.f32 %v2718, %v2726
        %v2728 = vmul.f32 %v2727, %v2727
        %v2729 = vsel %vm537, %v2728, 0.0
        %2730 = vadd.xlane.f32.xlu0 %v2729
        %v2731 = vpop.xlane.xlu0 %2730
        %v2732 = vmul.f32 %v2731, 0.032258064
        %v2733 = vrsqrt.pop %v2732
        %v2734 = vmul.f32 %v2732, %v2733
        %vm2735 = vcmp.eq.f32.partialorder %v2732, inf
        %v2736 = vsel %vm2735, %v2732, %v2734
        %vm2737 = vcmp.eq.f32.partialorder %v2732, 0.0
        %v2738 = vand.u32 %v2732, 2147483648
        %v2739 = vsel %vm2737, %v2738, %v2736
        %v2740 = vadd.f32 %v2739, 1e-06
        %v2741 = vrcp.pop %v2740
        %v2742 = vmul.f32 %v2727, %v2741
        %v2744 = vlaneseq
        %v2745 = vshrl.u32 %v2744, 7
        %v2746 = vsub.s32 0, %v2745
        %v2747 = vrot.slane %v2720, %v2746
        %v2749 = vmul.f32 %v2747, %v2742
        %v2751 = vlaneseq
        %v2752 = vshrl.u32 %v2751, 7
        %v2753 = vsub.s32 0, %v2752
        %v2754 = vrot.slane %v2722, %v2753
        %v2756 = vadd.f32 %v2749, %v2754
        %s2757 = scalar_lea.vmem %s4, 384
        %v2758 = vld [vmem:[%s2757] sm:$0xff]
        %v2759 = vld [vmem:[%s2757 + $0x8] sm:$0xff]
        %v2760 = vld [vmem:[%s2757 + $0x10] sm:$0xff]
        %v2761 = vld [vmem:[%s2757 + $0x18] sm:$0xff]
        %v2762 = vld [vmem:[%s2757 + $0x20] sm:$0xff]
        %v2763 = vld [vmem:[%s2757 + $0x28] sm:$0xff]
        %v2764 = vld [vmem:[%s2757 + $0x30] sm:$0xff]
        %v2765 = vld [vmem:[%s2757 + $0x38] sm:$0xff]
        %v2766 = vld [vmem:[%s2757 + $0x40] sm:$0xff]
        %v2767 = vld [vmem:[%s2757 + $0x48] sm:$0xff]
        %v2768 = vld [vmem:[%s2757 + $0x50] sm:$0xff]
        %v2769 = vld [vmem:[%s2757 + $0x58] sm:$0xff]
        %v2770 = vld [vmem:[%s2757 + $0x60] sm:$0xff]
        %v2771 = vld [vmem:[%s2757 + $0x68] sm:$0xff]
        %v2772 = vld [vmem:[%s2757 + $0x70] sm:$0xff]
        %v2773 = vld [vmem:[%s2757 + $0x78] sm:$0xff]
        %v2774 = vld [vmem:[%s2757 + $0x80] sm:$0xff]
        %v2775 = vld [vmem:[%s2757 + $0x88] sm:$0xff]
        %v2776 = vld [vmem:[%s2757 + $0x90] sm:$0xff]
        %v2777 = vld [vmem:[%s2757 + $0x98] sm:$0xff]
        %v2778 = vld [vmem:[%s2757 + $0xa0] sm:$0xff]
        %v2779 = vld [vmem:[%s2757 + $0xa8] sm:$0xff]
        %v2780 = vld [vmem:[%s2757 + $0xb0] sm:$0xff]
        %v2781 = vld [vmem:[%s2757 + $0xb8] sm:$0xff]
        %v2782 = vld [vmem:[%s2757 + $0xc0] sm:$0xff]
        %v2783 = vld [vmem:[%s2757 + $0xc8] sm:$0xff]
        %v2784 = vld [vmem:[%s2757 + $0xd0] sm:$0xff]
        %v2785 = vld [vmem:[%s2757 + $0xd8] sm:$0xff]
        %v2786 = vld [vmem:[%s2757 + $0xe0] sm:$0xff]
        %v2787 = vld [vmem:[%s2757 + $0xe8] sm:$0xff]
        %v2788 = vld [vmem:[%s2757 + $0xf0] sm:$0xff]
        %v2789 = vld [vmem:[%s2757 + $0xf8] sm:$0xff]
        %v2790 = vld [vmem:[%s2757 + $0x100] sm:$0xff]
        %v2791 = vld [vmem:[%s2757 + $0x108] sm:$0xff]
        %v2792 = vld [vmem:[%s2757 + $0x110] sm:$0xff]
        %v2793 = vld [vmem:[%s2757 + $0x118] sm:$0xff]
        %v2794 = vld [vmem:[%s2757 + $0x120] sm:$0xff]
        %v2795 = vld [vmem:[%s2757 + $0x128] sm:$0xff]
        %v2796 = vld [vmem:[%s2757 + $0x130] sm:$0xff]
        %v2797 = vld [vmem:[%s2757 + $0x138] sm:$0xff]
        %v2798 = vld [vmem:[%s2757 + $0x140] sm:$0xff]
        %v2799 = vld [vmem:[%s2757 + $0x148] sm:$0xff]
        %v2800 = vld [vmem:[%s2757 + $0x150] sm:$0xff]
        %v2801 = vld [vmem:[%s2757 + $0x158] sm:$0xff]
        %v2802 = vld [vmem:[%s2757 + $0x160] sm:$0xff]
        %v2803 = vld [vmem:[%s2757 + $0x168] sm:$0xff]
        %v2804 = vld [vmem:[%s2757 + $0x170] sm:$0xff]
        %v2805 = vld [vmem:[%s2757 + $0x178] sm:$0xff]
        %s2806 = scalar_lea.vmem %s5, 12
        %v2807 = vld [vmem:[%s2806] sm:$0x1]
        %v2808 = vld [vmem:[%s2806 + $0x1] sm:$0x1]
        %v2809 = vld [vmem:[%s2806 + $0x2] sm:$0x1]
        %v2810 = vld [vmem:[%s2806 + $0x3] sm:$0x1]
        %v2811 = vld [vmem:[%s2806 + $0x4] sm:$0x1]
        %v2812 = vld [vmem:[%s2806 + $0x5] sm:$0x1]
        %v2813 = vld [vmem:[%s2806 + $0x6] sm:$0x1]
        %v2814 = vld [vmem:[%s2806 + $0x7] sm:$0x1]
        %v2815 = vld [vmem:[%s2806 + $0x8] sm:$0x1]
        %v2816 = vld [vmem:[%s2806 + $0x9] sm:$0x1]
        %v2817 = vld [vmem:[%s2806 + $0xa] sm:$0x1]
        %v2818 = vld [vmem:[%s2806 + $0xb] sm:$0x1]
        %v2831 = vlaneseq
        %v2832 = vshrl.u32 %v2831, 7
        %v2833 = vsub.s32 0, %v2832
        %v2834 = vrot.slane %v2807, %v2833
        %v2835 = vlaneseq
        %v2836 = vshrl.u32 %v2835, 7
        %v2837 = vsub.s32 0, %v2836
        %v2838 = vrot.slane %v2808, %v2837
        %v2839 = vlaneseq
        %v2840 = vshrl.u32 %v2839, 7
        %v2841 = vsub.s32 0, %v2840
        %v2842 = vrot.slane %v2809, %v2841
        %v2843 = vlaneseq
        %v2844 = vshrl.u32 %v2843, 7
        %v2845 = vsub.s32 0, %v2844
        %v2846 = vrot.slane %v2810, %v2845
        %v2847 = vlaneseq
        %v2848 = vshrl.u32 %v2847, 7
        %v2849 = vsub.s32 0, %v2848
        %v2850 = vrot.slane %v2811, %v2849
        %v2851 = vlaneseq
        %v2852 = vshrl.u32 %v2851, 7
        %v2853 = vsub.s32 0, %v2852
        %v2854 = vrot.slane %v2812, %v2853
        %v2855 = vlaneseq
        %v2856 = vshrl.u32 %v2855, 7
        %v2857 = vsub.s32 0, %v2856
        %v2858 = vrot.slane %v2813, %v2857
        %v2859 = vlaneseq
        %v2860 = vshrl.u32 %v2859, 7
        %v2861 = vsub.s32 0, %v2860
        %v2862 = vrot.slane %v2814, %v2861
        %v2863 = vlaneseq
        %v2864 = vshrl.u32 %v2863, 7
        %v2865 = vsub.s32 0, %v2864
        %v2866 = vrot.slane %v2815, %v2865
        %v2867 = vlaneseq
        %v2868 = vshrl.u32 %v2867, 7
        %v2869 = vsub.s32 0, %v2868
        %v2870 = vrot.slane %v2816, %v2869
        %v2871 = vlaneseq
        %v2872 = vshrl.u32 %v2871, 7
        %v2873 = vsub.s32 0, %v2872
        %v2874 = vrot.slane %v2817, %v2873
        %v2875 = vlaneseq
        %v2876 = vshrl.u32 %v2875, 7
        %v2877 = vsub.s32 0, %v2876
        %v2878 = vrot.slane %v2818, %v2877
        %v2892 = vsel %vm537, %v2756, 0
        %2894 = vmatprep.subr.mxu0 0.0
        %2895 = vmatpush1.msra.mxu0 %v2758
        %2896 = vmatprep.subr.mxu0 0.0
        %2897 = vmatpush1.msra.mxu0 %v2759
        %2898 = vmatprep.subr.mxu0 0.0
        %2899 = vmatpush1.msra.mxu0 %v2760
        %2900 = vmatprep.subr.mxu0 0.0
        %2901 = vmatpush1.msra.mxu0 %v2761
        %2902 = vmatprep.subr.mxu0 0.0
        %2903 = vmatpush1.msra.mxu0 0.0
        %2904 = vmatprep.subr.mxu0 0.0
        %2905 = vmatpush1.msra.mxu0 0.0
        %2906 = vmatprep.subr.mxu0 0.0
        %2907 = vmatpush1.msra.mxu0 0.0
        %2908 = vmatprep.subr.mxu0 0.0
        %2909 = vmatpush1.msra.mxu0 0.0
        %2910 = vmatprep.subr.mxu0 0.0
        %2911 = vmatpush1.msra.mxu0 0.0
        %2912 = vmatprep.subr.mxu0 0.0
        %2913 = vmatpush1.msra.mxu0 0.0
        %2914 = vmatprep.subr.mxu0 0.0
        %2915 = vmatpush1.msra.mxu0 0.0
        %2916 = vmatprep.subr.mxu0 0.0
        %2917 = vmatpush1.msra.mxu0 0.0
        %2918 = vmatprep.subr.mxu0 0.0
        %2919 = vmatpush1.msra.mxu0 0.0
        %2920 = vmatprep.subr.mxu0 0.0
        %2921 = vmatpush1.msra.mxu0 0.0
        %2922 = vmatprep.subr.mxu0 0.0
        %2923 = vmatpush1.msra.mxu0 0.0
        %2924 = vmatprep.subr.mxu0 0.0
        %2925 = vmatpush1.msra.mxu0 0.0
        %2926 = vmatprep.subr.mxu0 0.0
        %2927 = vmatpush1.msra.mxu0 0.0
        %2928 = vmatprep.subr.mxu0 0.0
        %2929 = vmatpush1.msra.mxu0 0.0
        %2930 = vmatprep.subr.mxu0 0.0
        %2931 = vmatpush1.msra.mxu0 0.0
        %2932 = vmatprep.subr.mxu0 0.0
        %2933 = vmatpush1.msra.mxu0 0.0
        %2934 = vmatprep.subr.mxu0 0.0
        %2935 = vmatpush1.msra.mxu0 0.0
        %2936 = vmatprep.subr.mxu0 0.0
        %2937 = vmatpush1.msra.mxu0 0.0
        %2938 = vmatprep.subr.mxu0 0.0
        %2939 = vmatpush1.msra.mxu0 0.0
        %2940 = vmatprep.subr.mxu0 0.0
        %2941 = vmatpush1.msra.mxu0 0.0
        %2942 = vmatprep.subr.mxu0 0.0
        %2943 = vmatpush1.msra.mxu0 0.0
        %2944 = vmatprep.subr.mxu0 0.0
        %2945 = vmatpush1.msra.mxu0 0.0
        %2946 = vmatprep.subr.mxu0 0.0
        %2947 = vmatpush1.msra.mxu0 0.0
        %2948 = vmatprep.subr.mxu0 0.0
        %2949 = vmatpush1.msra.mxu0 0.0
        %2950 = vmatprep.subr.mxu0 0.0
        %2951 = vmatpush1.msra.mxu0 0.0
        %2952 = vmatprep.subr.mxu0 0.0
        %2953 = vmatpush1.msra.mxu0 0.0
        %2954 = vmatprep.subr.mxu0 0.0
        %2955 = vmatpush1.msra.mxu0 0.0
        %2956 = vmatprep.subr.mxu0 0.0
        %2957 = vmatpush1.msra.mxu0 0.0
        %2958 = vmatprep.mubr.f32.mxu0 0.0
        %2959 = vmatmul.mubr.f32.gmra.mrb[0].mxu0 %v2892
        %v2960 = vpop.f32.mrb[0].mxu0
        %v2961 = vadd.f32 %v2834, %v2960
        %v2962 = vpop.f32.mrb[0].mxu0
        %2963 = vdwg.mxu0
        %2964 = vmatprep.subr.mxu0 0.0
        %2965 = vmatpush1.msra.mxu0 %v2762
        %2966 = vmatprep.subr.mxu0 0.0
        %2967 = vmatpush1.msra.mxu0 %v2763
        %2968 = vmatprep.subr.mxu0 0.0
        %2969 = vmatpush1.msra.mxu0 %v2764
        %2970 = vmatprep.subr.mxu0 0.0
        %2971 = vmatpush1.msra.mxu0 %v2765
        %2972 = vmatprep.subr.mxu0 0.0
        %2973 = vmatpush1.msra.mxu0 0.0
        %2974 = vmatprep.subr.mxu0 0.0
        %2975 = vmatpush1.msra.mxu0 0.0
        %2976 = vmatprep.subr.mxu0 0.0
        %2977 = vmatpush1.msra.mxu0 0.0
        %2978 = vmatprep.subr.mxu0 0.0
        %2979 = vmatpush1.msra.mxu0 0.0
        %2980 = vmatprep.subr.mxu0 0.0
        %2981 = vmatpush1.msra.mxu0 0.0
        %2982 = vmatprep.subr.mxu0 0.0
        %2983 = vmatpush1.msra.mxu0 0.0
        %2984 = vmatprep.subr.mxu0 0.0
        %2985 = vmatpush1.msra.mxu0 0.0
        %2986 = vmatprep.subr.mxu0 0.0
        %2987 = vmatpush1.msra.mxu0 0.0
        %2988 = vmatprep.subr.mxu0 0.0
        %2989 = vmatpush1.msra.mxu0 0.0
        %2990 = vmatprep.subr.mxu0 0.0
        %2991 = vmatpush1.msra.mxu0 0.0
        %2992 = vmatprep.subr.mxu0 0.0
        %2993 = vmatpush1.msra.mxu0 0.0
        %2994 = vmatprep.subr.mxu0 0.0
        %2995 = vmatpush1.msra.mxu0 0.0
        %2996 = vmatprep.subr.mxu0 0.0
        %2997 = vmatpush1.msra.mxu0 0.0
        %2998 = vmatprep.subr.mxu0 0.0
        %2999 = vmatpush1.msra.mxu0 0.0
        %3000 = vmatprep.subr.mxu0 0.0
        %3001 = vmatpush1.msra.mxu0 0.0
        %3002 = vmatprep.subr.mxu0 0.0
        %3003 = vmatpush1.msra.mxu0 0.0
        %3004 = vmatprep.subr.mxu0 0.0
        %3005 = vmatpush1.msra.mxu0 0.0
        %3006 = vmatprep.subr.mxu0 0.0
        %3007 = vmatpush1.msra.mxu0 0.0
        %3008 = vmatprep.subr.mxu0 0.0
        %3009 = vmatpush1.msra.mxu0 0.0
        %3010 = vmatprep.subr.mxu0 0.0
        %3011 = vmatpush1.msra.mxu0 0.0
        %3012 = vmatprep.subr.mxu0 0.0
        %3013 = vmatpush1.msra.mxu0 0.0
        %3014 = vmatprep.subr.mxu0 0.0
        %3015 = vmatpush1.msra.mxu0 0.0
        %3016 = vmatprep.subr.mxu0 0.0
        %3017 = vmatpush1.msra.mxu0 0.0
        %3018 = vmatprep.subr.mxu0 0.0
        %3019 = vmatpush1.msra.mxu0 0.0
        %3020 = vmatprep.subr.mxu0 0.0
        %3021 = vmatpush1.msra.mxu0 0.0
        %3022 = vmatprep.subr.mxu0 0.0
        %3023 = vmatpush1.msra.mxu0 0.0
        %3024 = vmatprep.subr.mxu0 0.0
        %3025 = vmatpush1.msra.mxu0 0.0
        %3026 = vmatprep.subr.mxu0 0.0
        %3027 = vmatpush1.msra.mxu0 0.0
        %3028 = vmatprep.mubr.f32.mxu0 0.0
        %3029 = vmatmul.mubr.f32.gmra.mrb[0].mxu0 %v2892
        %v3030 = vpop.f32.mrb[0].mxu0
        %v3031 = vadd.f32 %v2838, %v3030
        %v3032 = vpop.f32.mrb[0].mxu0
        %3033 = vdwg.mxu0
        %3034 = vmatprep.subr.mxu0 0.0
        %3035 = vmatpush1.msra.mxu0 %v2766
        %3036 = vmatprep.subr.mxu0 0.0
        %3037 = vmatpush1.msra.mxu0 %v2767
        %3038 = vmatprep.subr.mxu0 0.0
        %3039 = vmatpush1.msra.mxu0 %v2768
        %3040 = vmatprep.subr.mxu0 0.0
        %3041 = vmatpush1.msra.mxu0 %v2769
        %3042 = vmatprep.subr.mxu0 0.0
        %3043 = vmatpush1.msra.mxu0 0.0
        %3044 = vmatprep.subr.mxu0 0.0
        %3045 = vmatpush1.msra.mxu0 0.0
        %3046 = vmatprep.subr.mxu0 0.0
        %3047 = vmatpush1.msra.mxu0 0.0
        %3048 = vmatprep.subr.mxu0 0.0
        %3049 = vmatpush1.msra.mxu0 0.0
        %3050 = vmatprep.subr.mxu0 0.0
        %3051 = vmatpush1.msra.mxu0 0.0
        %3052 = vmatprep.subr.mxu0 0.0
        %3053 = vmatpush1.msra.mxu0 0.0
        %3054 = vmatprep.subr.mxu0 0.0
        %3055 = vmatpush1.msra.mxu0 0.0
        %3056 = vmatprep.subr.mxu0 0.0
        %3057 = vmatpush1.msra.mxu0 0.0
        %3058 = vmatprep.subr.mxu0 0.0
        %3059 = vmatpush1.msra.mxu0 0.0
        %3060 = vmatprep.subr.mxu0 0.0
        %3061 = vmatpush1.msra.mxu0 0.0
        %3062 = vmatprep.subr.mxu0 0.0
        %3063 = vmatpush1.msra.mxu0 0.0
        %3064 = vmatprep.subr.mxu0 0.0
        %3065 = vmatpush1.msra.mxu0 0.0
        %3066 = vmatprep.subr.mxu0 0.0
        %3067 = vmatpush1.msra.mxu0 0.0
        %3068 = vmatprep.subr.mxu0 0.0
        %3069 = vmatpush1.msra.mxu0 0.0
        %3070 = vmatprep.subr.mxu0 0.0
        %3071 = vmatpush1.msra.mxu0 0.0
        %3072 = vmatprep.subr.mxu0 0.0
        %3073 = vmatpush1.msra.mxu0 0.0
        %3074 = vmatprep.subr.mxu0 0.0
        %3075 = vmatpush1.msra.mxu0 0.0
        %3076 = vmatprep.subr.mxu0 0.0
        %3077 = vmatpush1.msra.mxu0 0.0
        %3078 = vmatprep.subr.mxu0 0.0
        %3079 = vmatpush1.msra.mxu0 0.0
        %3080 = vmatprep.subr.mxu0 0.0
        %3081 = vmatpush1.msra.mxu0 0.0
        %3082 = vmatprep.subr.mxu0 0.0
        %3083 = vmatpush1.msra.mxu0 0.0
        %3084 = vmatprep.subr.mxu0 0.0
        %3085 = vmatpush1.msra.mxu0 0.0
        %3086 = vmatprep.subr.mxu0 0.0
        %3087 = vmatpush1.msra.mxu0 0.0
        %3088 = vmatprep.subr.mxu0 0.0
        %3089 = vmatpush1.msra.mxu0 0.0
        %3090 = vmatprep.subr.mxu0 0.0
        %3091 = vmatpush1.msra.mxu0 0.0
        %3092 = vmatprep.subr.mxu0 0.0
        %3093 = vmatpush1.msra.mxu0 0.0
        %3094 = vmatprep.subr.mxu0 0.0
        %3095 = vmatpush1.msra.mxu0 0.0
        %3096 = vmatprep.subr.mxu0 0.0
        %3097 = vmatpush1.msra.mxu0 0.0
        %3098 = vmatprep.mubr.f32.mxu0 0.0
        %3099 = vmatmul.mubr.f32.gmra.mrb[0].mxu0 %v2892
        %v3100 = vpop.f32.mrb[0].mxu0
        %v3101 = vadd.f32 %v2842, %v3100
        %v3102 = vpop.f32.mrb[0].mxu0
        %3103 = vdwg.mxu0
        %3104 = vmatprep.subr.mxu0 0.0
        %3105 = vmatpush1.msra.mxu0 %v2770
        %3106 = vmatprep.subr.mxu0 0.0
        %3107 = vmatpush1.msra.mxu0 %v2771
        %3108 = vmatprep.subr.mxu0 0.0
        %3109 = vmatpush1.msra.mxu0 %v2772
        %3110 = vmatprep.subr.mxu0 0.0
        %3111 = vmatpush1.msra.mxu0 %v2773
        %3112 = vmatprep.subr.mxu0 0.0
        %3113 = vmatpush1.msra.mxu0 0.0
        %3114 = vmatprep.subr.mxu0 0.0
        %3115 = vmatpush1.msra.mxu0 0.0
        %3116 = vmatprep.subr.mxu0 0.0
        %3117 = vmatpush1.msra.mxu0 0.0
        %3118 = vmatprep.subr.mxu0 0.0
        %3119 = vmatpush1.msra.mxu0 0.0
        %3120 = vmatprep.subr.mxu0 0.0
        %3121 = vmatpush1.msra.mxu0 0.0
        %3122 = vmatprep.subr.mxu0 0.0
        %3123 = vmatpush1.msra.mxu0 0.0
        %3124 = vmatprep.subr.mxu0 0.0
        %3125 = vmatpush1.msra.mxu0 0.0
        %3126 = vmatprep.subr.mxu0 0.0
        %3127 = vmatpush1.msra.mxu0 0.0
        %3128 = vmatprep.subr.mxu0 0.0
        %3129 = vmatpush1.msra.mxu0 0.0
        %3130 = vmatprep.subr.mxu0 0.0
        %3131 = vmatpush1.msra.mxu0 0.0
        %3132 = vmatprep.subr.mxu0 0.0
        %3133 = vmatpush1.msra.mxu0 0.0
        %3134 = vmatprep.subr.mxu0 0.0
        %3135 = vmatpush1.msra.mxu0 0.0
        %3136 = vmatprep.subr.mxu0 0.0
        %3137 = vmatpush1.msra.mxu0 0.0
        %3138 = vmatprep.subr.mxu0 0.0
        %3139 = vmatpush1.msra.mxu0 0.0
        %3140 = vmatprep.subr.mxu0 0.0
        %3141 = vmatpush1.msra.mxu0 0.0
        %3142 = vmatprep.subr.mxu0 0.0
        %3143 = vmatpush1.msra.mxu0 0.0
        %3144 = vmatprep.subr.mxu0 0.0
        %3145 = vmatpush1.msra.mxu0 0.0
        %3146 = vmatprep.subr.mxu0 0.0
        %3147 = vmatpush1.msra.mxu0 0.0
        %3148 = vmatprep.subr.mxu0 0.0
        %3149 = vmatpush1.msra.mxu0 0.0
        %3150 = vmatprep.subr.mxu0 0.0
        %3151 = vmatpush1.msra.mxu0 0.0
        %3152 = vmatprep.subr.mxu0 0.0
        %3153 = vmatpush1.msra.mxu0 0.0
        %3154 = vmatprep.subr.mxu0 0.0
        %3155 = vmatpush1.msra.mxu0 0.0
        %3156 = vmatprep.subr.mxu0 0.0
        %3157 = vmatpush1.msra.mxu0 0.0
        %3158 = vmatprep.subr.mxu0 0.0
        %3159 = vmatpush1.msra.mxu0 0.0
        %3160 = vmatprep.subr.mxu0 0.0
        %3161 = vmatpush1.msra.mxu0 0.0
        %3162 = vmatprep.subr.mxu0 0.0
        %3163 = vmatpush1.msra.mxu0 0.0
        %3164 = vmatprep.subr.mxu0 0.0
        %3165 = vmatpush1.msra.mxu0 0.0
        %3166 = vmatprep.subr.mxu0 0.0
        %3167 = vmatpush1.msra.mxu0 0.0
        %3168 = vmatprep.mubr.f32.mxu0 0.0
        %3169 = vmatmul.mubr.f32.gmra.mrb[0].mxu0 %v2892
        %v3170 = vpop.f32.mrb[0].mxu0
        %v3171 = vadd.f32 %v2846, %v3170
        %v3172 = vpop.f32.mrb[0].mxu0
        %3173 = vdwg.mxu0
        %3174 = vmatprep.subr.mxu0 0.0
        %3175 = vmatpush1.msra.mxu0 %v2774
        %3176 = vmatprep.subr.mxu0 0.0
        %3177 = vmatpush1.msra.mxu0 %v2775
        %3178 = vmatprep.subr.mxu0 0.0
        %3179 = vmatpush1.msra.mxu0 %v2776
        %3180 = vmatprep.subr.mxu0 0.0
        %3181 = vmatpush1.msra.mxu0 %v2777
        %3182 = vmatprep.subr.mxu0 0.0
        %3183 = vmatpush1.msra.mxu0 0.0
        %3184 = vmatprep.subr.mxu0 0.0
        %3185 = vmatpush1.msra.mxu0 0.0
        %3186 = vmatprep.subr.mxu0 0.0
        %3187 = vmatpush1.msra.mxu0 0.0
        %3188 = vmatprep.subr.mxu0 0.0
        %3189 = vmatpush1.msra.mxu0 0.0
        %3190 = vmatprep.subr.mxu0 0.0
        %3191 = vmatpush1.msra.mxu0 0.0
        %3192 = vmatprep.subr.mxu0 0.0
        %3193 = vmatpush1.msra.mxu0 0.0
        %3194 = vmatprep.subr.mxu0 0.0
        %3195 = vmatpush1.msra.mxu0 0.0
        %3196 = vmatprep.subr.mxu0 0.0
        %3197 = vmatpush1.msra.mxu0 0.0
        %3198 = vmatprep.subr.mxu0 0.0
        %3199 = vmatpush1.msra.mxu0 0.0
        %3200 = vmatprep.subr.mxu0 0.0
        %3201 = vmatpush1.msra.mxu0 0.0
        %3202 = vmatprep.subr.mxu0 0.0
        %3203 = vmatpush1.msra.mxu0 0.0
        %3204 = vmatprep.subr.mxu0 0.0
        %3205 = vmatpush1.msra.mxu0 0.0
        %3206 = vmatprep.subr.mxu0 0.0
        %3207 = vmatpush1.msra.mxu0 0.0
        %3208 = vmatprep.subr.mxu0 0.0
        %3209 = vmatpush1.msra.mxu0 0.0
        %3210 = vmatprep.subr.mxu0 0.0
        %3211 = vmatpush1.msra.mxu0 0.0
        %3212 = vmatprep.subr.mxu0 0.0
        %3213 = vmatpush1.msra.mxu0 0.0
        %3214 = vmatprep.subr.mxu0 0.0
        %3215 = vmatpush1.msra.mxu0 0.0
        %3216 = vmatprep.subr.mxu0 0.0
        %3217 = vmatpush1.msra.mxu0 0.0
        %3218 = vmatprep.subr.mxu0 0.0
        %3219 = vmatpush1.msra.mxu0 0.0
        %3220 = vmatprep.subr.mxu0 0.0
        %3221 = vmatpush1.msra.mxu0 0.0
        %3222 = vmatprep.subr.mxu0 0.0
        %3223 = vmatpush1.msra.mxu0 0.0
        %3224 = vmatprep.subr.mxu0 0.0
        %3225 = vmatpush1.msra.mxu0 0.0
        %3226 = vmatprep.subr.mxu0 0.0
        %3227 = vmatpush1.msra.mxu0 0.0
        %3228 = vmatprep.subr.mxu0 0.0
        %3229 = vmatpush1.msra.mxu0 0.0
        %3230 = vmatprep.subr.mxu0 0.0
        %3231 = vmatpush1.msra.mxu0 0.0
        %3232 = vmatprep.subr.mxu0 0.0
        %3233 = vmatpush1.msra.mxu0 0.0
        %3234 = vmatprep.subr.mxu0 0.0
        %3235 = vmatpush1.msra.mxu0 0.0
        %3236 = vmatprep.subr.mxu0 0.0
        %3237 = vmatpush1.msra.mxu0 0.0
        %3238 = vmatprep.mubr.f32.mxu0 0.0
        %3239 = vmatmul.mubr.f32.gmra.mrb[0].mxu0 %v2892
        %v3240 = vpop.f32.mrb[0].mxu0
        %v3241 = vadd.f32 %v2850, %v3240
        %v3242 = vpop.f32.mrb[0].mxu0
        %3243 = vdwg.mxu0
        %3244 = vmatprep.subr.mxu0 0.0
        %3245 = vmatpush1.msra.mxu0 %v2778
        %3246 = vmatprep.subr.mxu0 0.0
        %3247 = vmatpush1.msra.mxu0 %v2779
        %3248 = vmatprep.subr.mxu0 0.0
        %3249 = vmatpush1.msra.mxu0 %v2780
        %3250 = vmatprep.subr.mxu0 0.0
        %3251 = vmatpush1.msra.mxu0 %v2781
        %3252 = vmatprep.subr.mxu0 0.0
        %3253 = vmatpush1.msra.mxu0 0.0
        %3254 = vmatprep.subr.mxu0 0.0
        %3255 = vmatpush1.msra.mxu0 0.0
        %3256 = vmatprep.subr.mxu0 0.0
        %3257 = vmatpush1.msra.mxu0 0.0
        %3258 = vmatprep.subr.mxu0 0.0
        %3259 = vmatpush1.msra.mxu0 0.0
        %3260 = vmatprep.subr.mxu0 0.0
        %3261 = vmatpush1.msra.mxu0 0.0
        %3262 = vmatprep.subr.mxu0 0.0
        %3263 = vmatpush1.msra.mxu0 0.0
        %3264 = vmatprep.subr.mxu0 0.0
        %3265 = vmatpush1.msra.mxu0 0.0
        %3266 = vmatprep.subr.mxu0 0.0
        %3267 = vmatpush1.msra.mxu0 0.0
        %3268 = vmatprep.subr.mxu0 0.0
        %3269 = vmatpush1.msra.mxu0 0.0
        %3270 = vmatprep.subr.mxu0 0.0
        %3271 = vmatpush1.msra.mxu0 0.0
        %3272 = vmatprep.subr.mxu0 0.0
        %3273 = vmatpush1.msra.mxu0 0.0
        %3274 = vmatprep.subr.mxu0 0.0
        %3275 = vmatpush1.msra.mxu0 0.0
        %3276 = vmatprep.subr.mxu0 0.0
        %3277 = vmatpush1.msra.mxu0 0.0
        %3278 = vmatprep.subr.mxu0 0.0
        %3279 = vmatpush1.msra.mxu0 0.0
        %3280 = vmatprep.subr.mxu0 0.0
        %3281 = vmatpush1.msra.mxu0 0.0
        %3282 = vmatprep.subr.mxu0 0.0
        %3283 = vmatpush1.msra.mxu0 0.0
        %3284 = vmatprep.subr.mxu0 0.0
        %3285 = vmatpush1.msra.mxu0 0.0
        %3286 = vmatprep.subr.mxu0 0.0
        %3287 = vmatpush1.msra.mxu0 0.0
        %3288 = vmatprep.subr.mxu0 0.0
        %3289 = vmatpush1.msra.mxu0 0.0
        %3290 = vmatprep.subr.mxu0 0.0
        %3291 = vmatpush1.msra.mxu0 0.0
        %3292 = vmatprep.subr.mxu0 0.0
        %3293 = vmatpush1.msra.mxu0 0.0
        %3294 = vmatprep.subr.mxu0 0.0
        %3295 = vmatpush1.msra.mxu0 0.0
        %3296 = vmatprep.subr.mxu0 0.0
        %3297 = vmatpush1.msra.mxu0 0.0
        %3298 = vmatprep.subr.mxu0 0.0
        %3299 = vmatpush1.msra.mxu0 0.0
        %3300 = vmatprep.subr.mxu0 0.0
        %3301 = vmatpush1.msra.mxu0 0.0
        %3302 = vmatprep.subr.mxu0 0.0
        %3303 = vmatpush1.msra.mxu0 0.0
        %3304 = vmatprep.subr.mxu0 0.0
        %3305 = vmatpush1.msra.mxu0 0.0
        %3306 = vmatprep.subr.mxu0 0.0
        %3307 = vmatpush1.msra.mxu0 0.0
        %3308 = vmatprep.mubr.f32.mxu0 0.0
        %3309 = vmatmul.mubr.f32.gmra.mrb[0].mxu0 %v2892
        %v3310 = vpop.f32.mrb[0].mxu0
        %v3311 = vadd.f32 %v2854, %v3310
        %v3312 = vpop.f32.mrb[0].mxu0
        %3313 = vdwg.mxu0
        %3314 = vmatprep.subr.mxu0 0.0
        %3315 = vmatpush1.msra.mxu0 %v2782
        %3316 = vmatprep.subr.mxu0 0.0
        %3317 = vmatpush1.msra.mxu0 %v2783
        %3318 = vmatprep.subr.mxu0 0.0
        %3319 = vmatpush1.msra.mxu0 %v2784
        %3320 = vmatprep.subr.mxu0 0.0
        %3321 = vmatpush1.msra.mxu0 %v2785
        %3322 = vmatprep.subr.mxu0 0.0
        %3323 = vmatpush1.msra.mxu0 0.0
        %3324 = vmatprep.subr.mxu0 0.0
        %3325 = vmatpush1.msra.mxu0 0.0
        %3326 = vmatprep.subr.mxu0 0.0
        %3327 = vmatpush1.msra.mxu0 0.0
        %3328 = vmatprep.subr.mxu0 0.0
        %3329 = vmatpush1.msra.mxu0 0.0
        %3330 = vmatprep.subr.mxu0 0.0
        %3331 = vmatpush1.msra.mxu0 0.0
        %3332 = vmatprep.subr.mxu0 0.0
        %3333 = vmatpush1.msra.mxu0 0.0
        %3334 = vmatprep.subr.mxu0 0.0
        %3335 = vmatpush1.msra.mxu0 0.0
        %3336 = vmatprep.subr.mxu0 0.0
        %3337 = vmatpush1.msra.mxu0 0.0
        %3338 = vmatprep.subr.mxu0 0.0
        %3339 = vmatpush1.msra.mxu0 0.0
        %3340 = vmatprep.subr.mxu0 0.0
        %3341 = vmatpush1.msra.mxu0 0.0
        %3342 = vmatprep.subr.mxu0 0.0
        %3343 = vmatpush1.msra.mxu0 0.0
        %3344 = vmatprep.subr.mxu0 0.0
        %3345 = vmatpush1.msra.mxu0 0.0
        %3346 = vmatprep.subr.mxu0 0.0
        %3347 = vmatpush1.msra.mxu0 0.0
        %3348 = vmatprep.subr.mxu0 0.0
        %3349 = vmatpush1.msra.mxu0 0.0
        %3350 = vmatprep.subr.mxu0 0.0
        %3351 = vmatpush1.msra.mxu0 0.0
        %3352 = vmatprep.subr.mxu0 0.0
        %3353 = vmatpush1.msra.mxu0 0.0
        %3354 = vmatprep.subr.mxu0 0.0
        %3355 = vmatpush1.msra.mxu0 0.0
        %3356 = vmatprep.subr.mxu0 0.0
        %3357 = vmatpush1.msra.mxu0 0.0
        %3358 = vmatprep.subr.mxu0 0.0
        %3359 = vmatpush1.msra.mxu0 0.0
        %3360 = vmatprep.subr.mxu0 0.0
        %3361 = vmatpush1.msra.mxu0 0.0
        %3362 = vmatprep.subr.mxu0 0.0
        %3363 = vmatpush1.msra.mxu0 0.0
        %3364 = vmatprep.subr.mxu0 0.0
        %3365 = vmatpush1.msra.mxu0 0.0
        %3366 = vmatprep.subr.mxu0 0.0
        %3367 = vmatpush1.msra.mxu0 0.0
        %3368 = vmatprep.subr.mxu0 0.0
        %3369 = vmatpush1.msra.mxu0 0.0
        %3370 = vmatprep.subr.mxu0 0.0
        %3371 = vmatpush1.msra.mxu0 0.0
        %3372 = vmatprep.subr.mxu0 0.0
        %3373 = vmatpush1.msra.mxu0 0.0
        %3374 = vmatprep.subr.mxu0 0.0
        %3375 = vmatpush1.msra.mxu0 0.0
        %3376 = vmatprep.subr.mxu0 0.0
        %3377 = vmatpush1.msra.mxu0 0.0
        %3378 = vmatprep.mubr.f32.mxu0 0.0
        %3379 = vmatmul.mubr.f32.gmra.mrb[0].mxu0 %v2892
        %v3380 = vpop.f32.mrb[0].mxu0
        %v3381 = vadd.f32 %v2858, %v3380
        %v3382 = vpop.f32.mrb[0].mxu0
        %3383 = vdwg.mxu0
        %3384 = vmatprep.subr.mxu0 0.0
        %3385 = vmatpush1.msra.mxu0 %v2786
        %3386 = vmatprep.subr.mxu0 0.0
        %3387 = vmatpush1.msra.mxu0 %v2787
        %3388 = vmatprep.subr.mxu0 0.0
        %3389 = vmatpush1.msra.mxu0 %v2788
        %3390 = vmatprep.subr.mxu0 0.0
        %3391 = vmatpush1.msra.mxu0 %v2789
        %3392 = vmatprep.subr.mxu0 0.0
        %3393 = vmatpush1.msra.mxu0 0.0
        %3394 = vmatprep.subr.mxu0 0.0
        %3395 = vmatpush1.msra.mxu0 0.0
        %3396 = vmatprep.subr.mxu0 0.0
        %3397 = vmatpush1.msra.mxu0 0.0
        %3398 = vmatprep.subr.mxu0 0.0
        %3399 = vmatpush1.msra.mxu0 0.0
        %3400 = vmatprep.subr.mxu0 0.0
        %3401 = vmatpush1.msra.mxu0 0.0
        %3402 = vmatprep.subr.mxu0 0.0
        %3403 = vmatpush1.msra.mxu0 0.0
        %3404 = vmatprep.subr.mxu0 0.0
        %3405 = vmatpush1.msra.mxu0 0.0
        %3406 = vmatprep.subr.mxu0 0.0
        %3407 = vmatpush1.msra.mxu0 0.0
        %3408 = vmatprep.subr.mxu0 0.0
        %3409 = vmatpush1.msra.mxu0 0.0
        %3410 = vmatprep.subr.mxu0 0.0
        %3411 = vmatpush1.msra.mxu0 0.0
        %3412 = vmatprep.subr.mxu0 0.0
        %3413 = vmatpush1.msra.mxu0 0.0
        %3414 = vmatprep.subr.mxu0 0.0
        %3415 = vmatpush1.msra.mxu0 0.0
        %3416 = vmatprep.subr.mxu0 0.0
        %3417 = vmatpush1.msra.mxu0 0.0
        %3418 = vmatprep.subr.mxu0 0.0
        %3419 = vmatpush1.msra.mxu0 0.0
        %3420 = vmatprep.subr.mxu0 0.0
        %3421 = vmatpush1.msra.mxu0 0.0
        %3422 = vmatprep.subr.mxu0 0.0
        %3423 = vmatpush1.msra.mxu0 0.0
        %3424 = vmatprep.subr.mxu0 0.0
        %3425 = vmatpush1.msra.mxu0 0.0
        %3426 = vmatprep.subr.mxu0 0.0
        %3427 = vmatpush1.msra.mxu0 0.0
        %3428 = vmatprep.subr.mxu0 0.0
        %3429 = vmatpush1.msra.mxu0 0.0
        %3430 = vmatprep.subr.mxu0 0.0
        %3431 = vmatpush1.msra.mxu0 0.0
        %3432 = vmatprep.subr.mxu0 0.0
        %3433 = vmatpush1.msra.mxu0 0.0
        %3434 = vmatprep.subr.mxu0 0.0
        %3435 = vmatpush1.msra.mxu0 0.0
        %3436 = vmatprep.subr.mxu0 0.0
        %3437 = vmatpush1.msra.mxu0 0.0
        %3438 = vmatprep.subr.mxu0 0.0
        %3439 = vmatpush1.msra.mxu0 0.0
        %3440 = vmatprep.subr.mxu0 0.0
        %3441 = vmatpush1.msra.mxu0 0.0
        %3442 = vmatprep.subr.mxu0 0.0
        %3443 = vmatpush1.msra.mxu0 0.0
        %3444 = vmatprep.subr.mxu0 0.0
        %3445 = vmatpush1.msra.mxu0 0.0
        %3446 = vmatprep.subr.mxu0 0.0
        %3447 = vmatpush1.msra.mxu0 0.0
        %3448 = vmatprep.mubr.f32.mxu0 0.0
        %3449 = vmatmul.mubr.f32.gmra.mrb[0].mxu0 %v2892
        %v3450 = vpop.f32.mrb[0].mxu0
        %v3451 = vadd.f32 %v2862, %v3450
        %v3452 = vpop.f32.mrb[0].mxu0
        %3453 = vdwg.mxu0
        %3454 = vmatprep.subr.mxu0 0.0
        %3455 = vmatpush1.msra.mxu0 %v2790
        %3456 = vmatprep.subr.mxu0 0.0
        %3457 = vmatpush1.msra.mxu0 %v2791
        %3458 = vmatprep.subr.mxu0 0.0
        %3459 = vmatpush1.msra.mxu0 %v2792
        %3460 = vmatprep.subr.mxu0 0.0
        %3461 = vmatpush1.msra.mxu0 %v2793
        %3462 = vmatprep.subr.mxu0 0.0
        %3463 = vmatpush1.msra.mxu0 0.0
        %3464 = vmatprep.subr.mxu0 0.0
        %3465 = vmatpush1.msra.mxu0 0.0
        %3466 = vmatprep.subr.mxu0 0.0
        %3467 = vmatpush1.msra.mxu0 0.0
        %3468 = vmatprep.subr.mxu0 0.0
        %3469 = vmatpush1.msra.mxu0 0.0
        %3470 = vmatprep.subr.mxu0 0.0
        %3471 = vmatpush1.msra.mxu0 0.0
        %3472 = vmatprep.subr.mxu0 0.0
        %3473 = vmatpush1.msra.mxu0 0.0
        %3474 = vmatprep.subr.mxu0 0.0
        %3475 = vmatpush1.msra.mxu0 0.0
        %3476 = vmatprep.subr.mxu0 0.0
        %3477 = vmatpush1.msra.mxu0 0.0
        %3478 = vmatprep.subr.mxu0 0.0
        %3479 = vmatpush1.msra.mxu0 0.0
        %3480 = vmatprep.subr.mxu0 0.0
        %3481 = vmatpush1.msra.mxu0 0.0
        %3482 = vmatprep.subr.mxu0 0.0
        %3483 = vmatpush1.msra.mxu0 0.0
        %3484 = vmatprep.subr.mxu0 0.0
        %3485 = vmatpush1.msra.mxu0 0.0
        %3486 = vmatprep.subr.mxu0 0.0
        %3487 = vmatpush1.msra.mxu0 0.0
        %3488 = vmatprep.subr.mxu0 0.0
        %3489 = vmatpush1.msra.mxu0 0.0
        %3490 = vmatprep.subr.mxu0 0.0
        %3491 = vmatpush1.msra.mxu0 0.0
        %3492 = vmatprep.subr.mxu0 0.0
        %3493 = vmatpush1.msra.mxu0 0.0
        %3494 = vmatprep.subr.mxu0 0.0
        %3495 = vmatpush1.msra.mxu0 0.0
        %3496 = vmatprep.subr.mxu0 0.0
        %3497 = vmatpush1.msra.mxu0 0.0
        %3498 = vmatprep.subr.mxu0 0.0
        %3499 = vmatpush1.msra.mxu0 0.0
        %3500 = vmatprep.subr.mxu0 0.0
        %3501 = vmatpush1.msra.mxu0 0.0
        %3502 = vmatprep.subr.mxu0 0.0
        %3503 = vmatpush1.msra.mxu0 0.0
        %3504 = vmatprep.subr.mxu0 0.0
        %3505 = vmatpush1.msra.mxu0 0.0
        %3506 = vmatprep.subr.mxu0 0.0
        %3507 = vmatpush1.msra.mxu0 0.0
        %3508 = vmatprep.subr.mxu0 0.0
        %3509 = vmatpush1.msra.mxu0 0.0
        %3510 = vmatprep.subr.mxu0 0.0
        %3511 = vmatpush1.msra.mxu0 0.0
        %3512 = vmatprep.subr.mxu0 0.0
        %3513 = vmatpush1.msra.mxu0 0.0
        %3514 = vmatprep.subr.mxu0 0.0
        %3515 = vmatpush1.msra.mxu0 0.0
        %3516 = vmatprep.subr.mxu0 0.0
        %3517 = vmatpush1.msra.mxu0 0.0
        %3518 = vmatprep.mubr.f32.mxu0 0.0
        %3519 = vmatmul.mubr.f32.gmra.mrb[0].mxu0 %v2892
        %v3520 = vpop.f32.mrb[0].mxu0
        %v3521 = vadd.f32 %v2866, %v3520
        %v3522 = vpop.f32.mrb[0].mxu0
        %3523 = vdwg.mxu0
        %3524 = vmatprep.subr.mxu0 0.0
        %3525 = vmatpush1.msra.mxu0 %v2794
        %3526 = vmatprep.subr.mxu0 0.0
        %3527 = vmatpush1.msra.mxu0 %v2795
        %3528 = vmatprep.subr.mxu0 0.0
        %3529 = vmatpush1.msra.mxu0 %v2796
        %3530 = vmatprep.subr.mxu0 0.0
        %3531 = vmatpush1.msra.mxu0 %v2797
        %3532 = vmatprep.subr.mxu0 0.0
        %3533 = vmatpush1.msra.mxu0 0.0
        %3534 = vmatprep.subr.mxu0 0.0
        %3535 = vmatpush1.msra.mxu0 0.0
        %3536 = vmatprep.subr.mxu0 0.0
        %3537 = vmatpush1.msra.mxu0 0.0
        %3538 = vmatprep.subr.mxu0 0.0
        %3539 = vmatpush1.msra.mxu0 0.0
        %3540 = vmatprep.subr.mxu0 0.0
        %3541 = vmatpush1.msra.mxu0 0.0
        %3542 = vmatprep.subr.mxu0 0.0
        %3543 = vmatpush1.msra.mxu0 0.0
        %3544 = vmatprep.subr.mxu0 0.0
        %3545 = vmatpush1.msra.mxu0 0.0
        %3546 = vmatprep.subr.mxu0 0.0
        %3547 = vmatpush1.msra.mxu0 0.0
        %3548 = vmatprep.subr.mxu0 0.0
        %3549 = vmatpush1.msra.mxu0 0.0
        %3550 = vmatprep.subr.mxu0 0.0
        %3551 = vmatpush1.msra.mxu0 0.0
        %3552 = vmatprep.subr.mxu0 0.0
        %3553 = vmatpush1.msra.mxu0 0.0
        %3554 = vmatprep.subr.mxu0 0.0
        %3555 = vmatpush1.msra.mxu0 0.0
        %3556 = vmatprep.subr.mxu0 0.0
        %3557 = vmatpush1.msra.mxu0 0.0
        %3558 = vmatprep.subr.mxu0 0.0
        %3559 = vmatpush1.msra.mxu0 0.0
        %3560 = vmatprep.subr.mxu0 0.0
        %3561 = vmatpush1.msra.mxu0 0.0
        %3562 = vmatprep.subr.mxu0 0.0
        %3563 = vmatpush1.msra.mxu0 0.0
        %3564 = vmatprep.subr.mxu0 0.0
        %3565 = vmatpush1.msra.mxu0 0.0
        %3566 = vmatprep.subr.mxu0 0.0
        %3567 = vmatpush1.msra.mxu0 0.0
        %3568 = vmatprep.subr.mxu0 0.0
        %3569 = vmatpush1.msra.mxu0 0.0
        %3570 = vmatprep.subr.mxu0 0.0
        %3571 = vmatpush1.msra.mxu0 0.0
        %3572 = vmatprep.subr.mxu0 0.0
        %3573 = vmatpush1.msra.mxu0 0.0
        %3574 = vmatprep.subr.mxu0 0.0
        %3575 = vmatpush1.msra.mxu0 0.0
        %3576 = vmatprep.subr.mxu0 0.0
        %3577 = vmatpush1.msra.mxu0 0.0
        %3578 = vmatprep.subr.mxu0 0.0
        %3579 = vmatpush1.msra.mxu0 0.0
        %3580 = vmatprep.subr.mxu0 0.0
        %3581 = vmatpush1.msra.mxu0 0.0
        %3582 = vmatprep.subr.mxu0 0.0
        %3583 = vmatpush1.msra.mxu0 0.0
        %3584 = vmatprep.subr.mxu0 0.0
        %3585 = vmatpush1.msra.mxu0 0.0
        %3586 = vmatprep.subr.mxu0 0.0
        %3587 = vmatpush1.msra.mxu0 0.0
        %3588 = vmatprep.mubr.f32.mxu0 0.0
        %3589 = vmatmul.mubr.f32.gmra.mrb[0].mxu0 %v2892
        %v3590 = vpop.f32.mrb[0].mxu0
        %v3591 = vadd.f32 %v2870, %v3590
        %v3592 = vpop.f32.mrb[0].mxu0
        %3593 = vdwg.mxu0
        %3594 = vmatprep.subr.mxu0 0.0
        %3595 = vmatpush1.msra.mxu0 %v2798
        %3596 = vmatprep.subr.mxu0 0.0
        %3597 = vmatpush1.msra.mxu0 %v2799
        %3598 = vmatprep.subr.mxu0 0.0
        %3599 = vmatpush1.msra.mxu0 %v2800
        %3600 = vmatprep.subr.mxu0 0.0
        %3601 = vmatpush1.msra.mxu0 %v2801
        %3602 = vmatprep.subr.mxu0 0.0
        %3603 = vmatpush1.msra.mxu0 0.0
        %3604 = vmatprep.subr.mxu0 0.0
        %3605 = vmatpush1.msra.mxu0 0.0
        %3606 = vmatprep.subr.mxu0 0.0
        %3607 = vmatpush1.msra.mxu0 0.0
        %3608 = vmatprep.subr.mxu0 0.0
        %3609 = vmatpush1.msra.mxu0 0.0
        %3610 = vmatprep.subr.mxu0 0.0
        %3611 = vmatpush1.msra.mxu0 0.0
        %3612 = vmatprep.subr.mxu0 0.0
        %3613 = vmatpush1.msra.mxu0 0.0
        %3614 = vmatprep.subr.mxu0 0.0
        %3615 = vmatpush1.msra.mxu0 0.0
        %3616 = vmatprep.subr.mxu0 0.0
        %3617 = vmatpush1.msra.mxu0 0.0
        %3618 = vmatprep.subr.mxu0 0.0
        %3619 = vmatpush1.msra.mxu0 0.0
        %3620 = vmatprep.subr.mxu0 0.0
        %3621 = vmatpush1.msra.mxu0 0.0
        %3622 = vmatprep.subr.mxu0 0.0
        %3623 = vmatpush1.msra.mxu0 0.0
        %3624 = vmatprep.subr.mxu0 0.0
        %3625 = vmatpush1.msra.mxu0 0.0
        %3626 = vmatprep.subr.mxu0 0.0
        %3627 = vmatpush1.msra.mxu0 0.0
        %3628 = vmatprep.subr.mxu0 0.0
        %3629 = vmatpush1.msra.mxu0 0.0
        %3630 = vmatprep.subr.mxu0 0.0
        %3631 = vmatpush1.msra.mxu0 0.0
        %3632 = vmatprep.subr.mxu0 0.0
        %3633 = vmatpush1.msra.mxu0 0.0
        %3634 = vmatprep.subr.mxu0 0.0
        %3635 = vmatpush1.msra.mxu0 0.0
        %3636 = vmatprep.subr.mxu0 0.0
        %3637 = vmatpush1.msra.mxu0 0.0
        %3638 = vmatprep.subr.mxu0 0.0
        %3639 = vmatpush1.msra.mxu0 0.0
        %3640 = vmatprep.subr.mxu0 0.0
        %3641 = vmatpush1.msra.mxu0 0.0
        %3642 = vmatprep.subr.mxu0 0.0
        %3643 = vmatpush1.msra.mxu0 0.0
        %3644 = vmatprep.subr.mxu0 0.0
        %3645 = vmatpush1.msra.mxu0 0.0
        %3646 = vmatprep.subr.mxu0 0.0
        %3647 = vmatpush1.msra.mxu0 0.0
        %3648 = vmatprep.subr.mxu0 0.0
        %3649 = vmatpush1.msra.mxu0 0.0
        %3650 = vmatprep.subr.mxu0 0.0
        %3651 = vmatpush1.msra.mxu0 0.0
        %3652 = vmatprep.subr.mxu0 0.0
        %3653 = vmatpush1.msra.mxu0 0.0
        %3654 = vmatprep.subr.mxu0 0.0
        %3655 = vmatpush1.msra.mxu0 0.0
        %3656 = vmatprep.subr.mxu0 0.0
        %3657 = vmatpush1.msra.mxu0 0.0
        %3658 = vmatprep.mubr.f32.mxu0 0.0
        %3659 = vmatmul.mubr.f32.gmra.mrb[0].mxu0 %v2892
        %v3660 = vpop.f32.mrb[0].mxu0
        %v3661 = vadd.f32 %v2874, %v3660
        %v3662 = vpop.f32.mrb[0].mxu0
        %3663 = vdwg.mxu0
        %3664 = vmatprep.subr.mxu0 0.0
        %3665 = vmatpush1.msra.mxu0 %v2802
        %3666 = vmatprep.subr.mxu0 0.0
        %3667 = vmatpush1.msra.mxu0 %v2803
        %3668 = vmatprep.subr.mxu0 0.0
        %3669 = vmatpush1.msra.mxu0 %v2804
        %3670 = vmatprep.subr.mxu0 0.0
        %3671 = vmatpush1.msra.mxu0 %v2805
        %3672 = vmatprep.subr.mxu0 0.0
        %3673 = vmatpush1.msra.mxu0 0.0
        %3674 = vmatprep.subr.mxu0 0.0
        %3675 = vmatpush1.msra.mxu0 0.0
        %3676 = vmatprep.subr.mxu0 0.0
        %3677 = vmatpush1.msra.mxu0 0.0
        %3678 = vmatprep.subr.mxu0 0.0
        %3679 = vmatpush1.msra.mxu0 0.0
        %3680 = vmatprep.subr.mxu0 0.0
        %3681 = vmatpush1.msra.mxu0 0.0
        %3682 = vmatprep.subr.mxu0 0.0
        %3683 = vmatpush1.msra.mxu0 0.0
        %3684 = vmatprep.subr.mxu0 0.0
        %3685 = vmatpush1.msra.mxu0 0.0
        %3686 = vmatprep.subr.mxu0 0.0
        %3687 = vmatpush1.msra.mxu0 0.0
        %3688 = vmatprep.subr.mxu0 0.0
        %3689 = vmatpush1.msra.mxu0 0.0
        %3690 = vmatprep.subr.mxu0 0.0
        %3691 = vmatpush1.msra.mxu0 0.0
        %3692 = vmatprep.subr.mxu0 0.0
        %3693 = vmatpush1.msra.mxu0 0.0
        %3694 = vmatprep.subr.mxu0 0.0
        %3695 = vmatpush1.msra.mxu0 0.0
        %3696 = vmatprep.subr.mxu0 0.0
        %3697 = vmatpush1.msra.mxu0 0.0
        %3698 = vmatprep.subr.mxu0 0.0
        %3699 = vmatpush1.msra.mxu0 0.0
        %3700 = vmatprep.subr.mxu0 0.0
        %3701 = vmatpush1.msra.mxu0 0.0
        %3702 = vmatprep.subr.mxu0 0.0
        %3703 = vmatpush1.msra.mxu0 0.0
        %3704 = vmatprep.subr.mxu0 0.0
        %3705 = vmatpush1.msra.mxu0 0.0
        %3706 = vmatprep.subr.mxu0 0.0
        %3707 = vmatpush1.msra.mxu0 0.0
        %3708 = vmatprep.subr.mxu0 0.0
        %3709 = vmatpush1.msra.mxu0 0.0
        %3710 = vmatprep.subr.mxu0 0.0
        %3711 = vmatpush1.msra.mxu0 0.0
        %3712 = vmatprep.subr.mxu0 0.0
        %3713 = vmatpush1.msra.mxu0 0.0
        %3714 = vmatprep.subr.mxu0 0.0
        %3715 = vmatpush1.msra.mxu0 0.0
        %3716 = vmatprep.subr.mxu0 0.0
        %3717 = vmatpush1.msra.mxu0 0.0
        %3718 = vmatprep.subr.mxu0 0.0
        %3719 = vmatpush1.msra.mxu0 0.0
        %3720 = vmatprep.subr.mxu0 0.0
        %3721 = vmatpush1.msra.mxu0 0.0
        %3722 = vmatprep.subr.mxu0 0.0
        %3723 = vmatpush1.msra.mxu0 0.0
        %3724 = vmatprep.subr.mxu0 0.0
        %3725 = vmatpush1.msra.mxu0 0.0
        %3726 = vmatprep.subr.mxu0 0.0
        %3727 = vmatpush1.msra.mxu0 0.0
        %3728 = vmatprep.mubr.f32.mxu0 0.0
        %3729 = vmatmul.mubr.f32.gmra.mrb[0].mxu0 %v2892
        %v3730 = vpop.f32.mrb[0].mxu0
        %v3731 = vadd.f32 %v2878, %v3730
        %v3732 = vpop.f32.mrb[0].mxu0
        %3733 = vdwg.mxu0
        %v3735 = vsel %vm1554, %v2961, 0
        %v3738 = vsel %vm1554, %v3241, 0
        %3740 = vmatprep.subr.mxu0 0.0
        %3741 = vmatpush1.xpose.msra.mxu0 %v3738
        %3742 = vmatprep.subr.mxu0 0.0
        %3743 = vmatpush1.xpose.msra.mxu0 0.0
        %3744 = vmatprep.subr.mxu0 0.0
        %3745 = vmatpush1.xpose.msra.mxu0 0.0
        %3746 = vmatprep.subr.mxu0 0.0
        %3747 = vmatpush1.xpose.msra.mxu0 0.0
        %3748 = vmatprep.subr.mxu0 0.0
        %3749 = vmatpush1.xpose.msra.mxu0 0.0
        %3750 = vmatprep.subr.mxu0 0.0
        %3751 = vmatpush1.xpose.msra.mxu0 0.0
        %3752 = vmatprep.subr.mxu0 0.0
        %3753 = vmatpush1.xpose.msra.mxu0 0.0
        %3754 = vmatprep.subr.mxu0 0.0
        %3755 = vmatpush1.xpose.msra.mxu0 0.0
        %3756 = vmatprep.subr.mxu0 0.0
        %3757 = vmatpush1.xpose.msra.mxu0 0.0
        %3758 = vmatprep.subr.mxu0 0.0
        %3759 = vmatpush1.xpose.msra.mxu0 0.0
        %3760 = vmatprep.subr.mxu0 0.0
        %3761 = vmatpush1.xpose.msra.mxu0 0.0
        %3762 = vmatprep.subr.mxu0 0.0
        %3763 = vmatpush1.xpose.msra.mxu0 0.0
        %3764 = vmatprep.subr.mxu0 0.0
        %3765 = vmatpush1.xpose.msra.mxu0 0.0
        %3766 = vmatprep.subr.mxu0 0.0
        %3767 = vmatpush1.xpose.msra.mxu0 0.0
        %3768 = vmatprep.subr.mxu0 0.0
        %3769 = vmatpush1.xpose.msra.mxu0 0.0
        %3770 = vmatprep.subr.mxu0 0.0
        %3771 = vmatpush1.xpose.msra.mxu0 0.0
        %3772 = vmatprep.subr.mxu0 0.0
        %3773 = vmatpush1.xpose.msra.mxu0 0.0
        %3774 = vmatprep.subr.mxu0 0.0
        %3775 = vmatpush1.xpose.msra.mxu0 0.0
        %3776 = vmatprep.subr.mxu0 0.0
        %3777 = vmatpush1.xpose.msra.mxu0 0.0
        %3778 = vmatprep.subr.mxu0 0.0
        %3779 = vmatpush1.xpose.msra.mxu0 0.0
        %3780 = vmatprep.subr.mxu0 0.0
        %3781 = vmatpush1.xpose.msra.mxu0 0.0
        %3782 = vmatprep.subr.mxu0 0.0
        %3783 = vmatpush1.xpose.msra.mxu0 0.0
        %3784 = vmatprep.subr.mxu0 0.0
        %3785 = vmatpush1.xpose.msra.mxu0 0.0
        %3786 = vmatprep.subr.mxu0 0.0
        %3787 = vmatpush1.xpose.msra.mxu0 0.0
        %3788 = vmatprep.subr.mxu0 0.0
        %3789 = vmatpush1.xpose.msra.mxu0 0.0
        %3790 = vmatprep.subr.mxu0 0.0
        %3791 = vmatpush1.xpose.msra.mxu0 0.0
        %3792 = vmatprep.subr.mxu0 0.0
        %3793 = vmatpush1.xpose.msra.mxu0 0.0
        %3794 = vmatprep.subr.mxu0 0.0
        %3795 = vmatpush1.xpose.msra.mxu0 0.0
        %3796 = vmatprep.subr.mxu0 0.0
        %3797 = vmatpush1.xpose.msra.mxu0 0.0
        %3798 = vmatprep.subr.mxu0 0.0
        %3799 = vmatpush1.xpose.msra.mxu0 0.0
        %3800 = vmatprep.subr.mxu0 0.0
        %3801 = vmatpush1.xpose.msra.mxu0 0.0
        %3802 = vmatprep.subr.mxu0 0.0
        %3803 = vmatpush1.xpose.msra.mxu0 0.0
        %3804 = vmatprep.mubr.f32.mxu0 0.0
        %3805 = vmatmul.mubr.f32.gmra.mrb[0].mxu0 %v3735
        %v3806 = vpop.f32.mrb[0].mxu0
        %v3807 = vadd.f32 %v1552, %v3806
        %v3808 = vpop.f32.mrb[0].mxu0
        %3809 = vdwg.mxu0
        %v3811 = vsel %vm1554, %v3031, 0
        %v3814 = vsel %vm1554, %v3311, 0
        %3816 = vmatprep.subr.mxu0 0.0
        %3817 = vmatpush1.xpose.msra.mxu0 %v3814
        %3818 = vmatprep.subr.mxu0 0.0
        %3819 = vmatpush1.xpose.msra.mxu0 0.0
        %3820 = vmatprep.subr.mxu0 0.0
        %3821 = vmatpush1.xpose.msra.mxu0 0.0
        %3822 = vmatprep.subr.mxu0 0.0
        %3823 = vmatpush1.xpose.msra.mxu0 0.0
        %3824 = vmatprep.subr.mxu0 0.0
        %3825 = vmatpush1.xpose.msra.mxu0 0.0
        %3826 = vmatprep.subr.mxu0 0.0
        %3827 = vmatpush1.xpose.msra.mxu0 0.0
        %3828 = vmatprep.subr.mxu0 0.0
        %3829 = vmatpush1.xpose.msra.mxu0 0.0
        %3830 = vmatprep.subr.mxu0 0.0
        %3831 = vmatpush1.xpose.msra.mxu0 0.0
        %3832 = vmatprep.subr.mxu0 0.0
        %3833 = vmatpush1.xpose.msra.mxu0 0.0
        %3834 = vmatprep.subr.mxu0 0.0
        %3835 = vmatpush1.xpose.msra.mxu0 0.0
        %3836 = vmatprep.subr.mxu0 0.0
        %3837 = vmatpush1.xpose.msra.mxu0 0.0
        %3838 = vmatprep.subr.mxu0 0.0
        %3839 = vmatpush1.xpose.msra.mxu0 0.0
        %3840 = vmatprep.subr.mxu0 0.0
        %3841 = vmatpush1.xpose.msra.mxu0 0.0
        %3842 = vmatprep.subr.mxu0 0.0
        %3843 = vmatpush1.xpose.msra.mxu0 0.0
        %3844 = vmatprep.subr.mxu0 0.0
        %3845 = vmatpush1.xpose.msra.mxu0 0.0
        %3846 = vmatprep.subr.mxu0 0.0
        %3847 = vmatpush1.xpose.msra.mxu0 0.0
        %3848 = vmatprep.subr.mxu0 0.0
        %3849 = vmatpush1.xpose.msra.mxu0 0.0
        %3850 = vmatprep.subr.mxu0 0.0
        %3851 = vmatpush1.xpose.msra.mxu0 0.0
        %3852 = vmatprep.subr.mxu0 0.0
        %3853 = vmatpush1.xpose.msra.mxu0 0.0
        %3854 = vmatprep.subr.mxu0 0.0
        %3855 = vmatpush1.xpose.msra.mxu0 0.0
        %3856 = vmatprep.subr.mxu0 0.0
        %3857 = vmatpush1.xpose.msra.mxu0 0.0
        %3858 = vmatprep.subr.mxu0 0.0
        %3859 = vmatpush1.xpose.msra.mxu0 0.0
        %3860 = vmatprep.subr.mxu0 0.0
        %3861 = vmatpush1.xpose.msra.mxu0 0.0
        %3862 = vmatprep.subr.mxu0 0.0
        %3863 = vmatpush1.xpose.msra.mxu0 0.0
        %3864 = vmatprep.subr.mxu0 0.0
        %3865 = vmatpush1.xpose.msra.mxu0 0.0
        %3866 = vmatprep.subr.mxu0 0.0
        %3867 = vmatpush1.xpose.msra.mxu0 0.0
        %3868 = vmatprep.subr.mxu0 0.0
        %3869 = vmatpush1.xpose.msra.mxu0 0.0
        %3870 = vmatprep.subr.mxu0 0.0
        %3871 = vmatpush1.xpose.msra.mxu0 0.0
        %3872 = vmatprep.subr.mxu0 0.0
        %3873 = vmatpush1.xpose.msra.mxu0 0.0
        %3874 = vmatprep.subr.mxu0 0.0
        %3875 = vmatpush1.xpose.msra.mxu0 0.0
        %3876 = vmatprep.subr.mxu0 0.0
        %3877 = vmatpush1.xpose.msra.mxu0 0.0
        %3878 = vmatprep.subr.mxu0 0.0
        %3879 = vmatpush1.xpose.msra.mxu0 0.0
        %3880 = vmatprep.mubr.f32.mxu0 0.0
        %3881 = vmatmul.mubr.f32.gmra.mrb[0].mxu0 %v3811
        %v3882 = vpop.f32.mrb[0].mxu0
        %v3883 = vadd.f32 %v1552, %v3882
        %v3884 = vpop.f32.mrb[0].mxu0
        %3885 = vdwg.mxu0
        %v3887 = vsel %vm1554, %v3101, 0
        %v3890 = vsel %vm1554, %v3381, 0
        %3892 = vmatprep.subr.mxu0 0.0
        %3893 = vmatpush1.xpose.msra.mxu0 %v3890
        %3894 = vmatprep.subr.mxu0 0.0
        %3895 = vmatpush1.xpose.msra.mxu0 0.0
        %3896 = vmatprep.subr.mxu0 0.0
        %3897 = vmatpush1.xpose.msra.mxu0 0.0
        %3898 = vmatprep.subr.mxu0 0.0
        %3899 = vmatpush1.xpose.msra.mxu0 0.0
        %3900 = vmatprep.subr.mxu0 0.0
        %3901 = vmatpush1.xpose.msra.mxu0 0.0
        %3902 = vmatprep.subr.mxu0 0.0
        %3903 = vmatpush1.xpose.msra.mxu0 0.0
        %3904 = vmatprep.subr.mxu0 0.0
        %3905 = vmatpush1.xpose.msra.mxu0 0.0
        %3906 = vmatprep.subr.mxu0 0.0
        %3907 = vmatpush1.xpose.msra.mxu0 0.0
        %3908 = vmatprep.subr.mxu0 0.0
        %3909 = vmatpush1.xpose.msra.mxu0 0.0
        %3910 = vmatprep.subr.mxu0 0.0
        %3911 = vmatpush1.xpose.msra.mxu0 0.0
        %3912 = vmatprep.subr.mxu0 0.0
        %3913 = vmatpush1.xpose.msra.mxu0 0.0
        %3914 = vmatprep.subr.mxu0 0.0
        %3915 = vmatpush1.xpose.msra.mxu0 0.0
        %3916 = vmatprep.subr.mxu0 0.0
        %3917 = vmatpush1.xpose.msra.mxu0 0.0
        %3918 = vmatprep.subr.mxu0 0.0
        %3919 = vmatpush1.xpose.msra.mxu0 0.0
        %3920 = vmatprep.subr.mxu0 0.0
        %3921 = vmatpush1.xpose.msra.mxu0 0.0
        %3922 = vmatprep.subr.mxu0 0.0
        %3923 = vmatpush1.xpose.msra.mxu0 0.0
        %3924 = vmatprep.subr.mxu0 0.0
        %3925 = vmatpush1.xpose.msra.mxu0 0.0
        %3926 = vmatprep.subr.mxu0 0.0
        %3927 = vmatpush1.xpose.msra.mxu0 0.0
        %3928 = vmatprep.subr.mxu0 0.0
        %3929 = vmatpush1.xpose.msra.mxu0 0.0
        %3930 = vmatprep.subr.mxu0 0.0
        %3931 = vmatpush1.xpose.msra.mxu0 0.0
        %3932 = vmatprep.subr.mxu0 0.0
        %3933 = vmatpush1.xpose.msra.mxu0 0.0
        %3934 = vmatprep.subr.mxu0 0.0
        %3935 = vmatpush1.xpose.msra.mxu0 0.0
        %3936 = vmatprep.subr.mxu0 0.0
        %3937 = vmatpush1.xpose.msra.mxu0 0.0
        %3938 = vmatprep.subr.mxu0 0.0
        %3939 = vmatpush1.xpose.msra.mxu0 0.0
        %3940 = vmatprep.subr.mxu0 0.0
        %3941 = vmatpush1.xpose.msra.mxu0 0.0
        %3942 = vmatprep.subr.mxu0 0.0
        %3943 = vmatpush1.xpose.msra.mxu0 0.0
        %3944 = vmatprep.subr.mxu0 0.0
        %3945 = vmatpush1.xpose.msra.mxu0 0.0
        %3946 = vmatprep.subr.mxu0 0.0
        %3947 = vmatpush1.xpose.msra.mxu0 0.0
        %3948 = vmatprep.subr.mxu0 0.0
        %3949 = vmatpush1.xpose.msra.mxu0 0.0
        %3950 = vmatprep.subr.mxu0 0.0
        %3951 = vmatpush1.xpose.msra.mxu0 0.0
        %3952 = vmatprep.subr.mxu0 0.0
        %3953 = vmatpush1.xpose.msra.mxu0 0.0
        %3954 = vmatprep.subr.mxu0 0.0
        %3955 = vmatpush1.xpose.msra.mxu0 0.0
        %3956 = vmatprep.mubr.f32.mxu0 0.0
        %3957 = vmatmul.mubr.f32.gmra.mrb[0].mxu0 %v3887
        %v3958 = vpop.f32.mrb[0].mxu0
        %v3959 = vadd.f32 %v1552, %v3958
        %v3960 = vpop.f32.mrb[0].mxu0
        %3961 = vdwg.mxu0
        %v3963 = vsel %vm1554, %v3171, 0
        %v3966 = vsel %vm1554, %v3451, 0
        %3968 = vmatprep.subr.mxu0 0.0
        %3969 = vmatpush1.xpose.msra.mxu0 %v3966
        %3970 = vmatprep.subr.mxu0 0.0
        %3971 = vmatpush1.xpose.msra.mxu0 0.0
        %3972 = vmatprep.subr.mxu0 0.0
        %3973 = vmatpush1.xpose.msra.mxu0 0.0
        %3974 = vmatprep.subr.mxu0 0.0
        %3975 = vmatpush1.xpose.msra.mxu0 0.0
        %3976 = vmatprep.subr.mxu0 0.0
        %3977 = vmatpush1.xpose.msra.mxu0 0.0
        %3978 = vmatprep.subr.mxu0 0.0
        %3979 = vmatpush1.xpose.msra.mxu0 0.0
        %3980 = vmatprep.subr.mxu0 0.0
        %3981 = vmatpush1.xpose.msra.mxu0 0.0
        %3982 = vmatprep.subr.mxu0 0.0
        %3983 = vmatpush1.xpose.msra.mxu0 0.0
        %3984 = vmatprep.subr.mxu0 0.0
        %3985 = vmatpush1.xpose.msra.mxu0 0.0
        %3986 = vmatprep.subr.mxu0 0.0
        %3987 = vmatpush1.xpose.msra.mxu0 0.0
        %3988 = vmatprep.subr.mxu0 0.0
        %3989 = vmatpush1.xpose.msra.mxu0 0.0
        %3990 = vmatprep.subr.mxu0 0.0
        %3991 = vmatpush1.xpose.msra.mxu0 0.0
        %3992 = vmatprep.subr.mxu0 0.0
        %3993 = vmatpush1.xpose.msra.mxu0 0.0
        %3994 = vmatprep.subr.mxu0 0.0
        %3995 = vmatpush1.xpose.msra.mxu0 0.0
        %3996 = vmatprep.subr.mxu0 0.0
        %3997 = vmatpush1.xpose.msra.mxu0 0.0
        %3998 = vmatprep.subr.mxu0 0.0
        %3999 = vmatpush1.xpose.msra.mxu0 0.0
        %4000 = vmatprep.subr.mxu0 0.0
        %4001 = vmatpush1.xpose.msra.mxu0 0.0
        %4002 = vmatprep.subr.mxu0 0.0
        %4003 = vmatpush1.xpose.msra.mxu0 0.0
        %4004 = vmatprep.subr.mxu0 0.0
        %4005 = vmatpush1.xpose.msra.mxu0 0.0
        %4006 = vmatprep.subr.mxu0 0.0
        %4007 = vmatpush1.xpose.msra.mxu0 0.0
        %4008 = vmatprep.subr.mxu0 0.0
        %4009 = vmatpush1.xpose.msra.mxu0 0.0
        %4010 = vmatprep.subr.mxu0 0.0
        %4011 = vmatpush1.xpose.msra.mxu0 0.0
        %4012 = vmatprep.subr.mxu0 0.0
        %4013 = vmatpush1.xpose.msra.mxu0 0.0
        %4014 = vmatprep.subr.mxu0 0.0
        %4015 = vmatpush1.xpose.msra.mxu0 0.0
        %4016 = vmatprep.subr.mxu0 0.0
        %4017 = vmatpush1.xpose.msra.mxu0 0.0
        %4018 = vmatprep.subr.mxu0 0.0
        %4019 = vmatpush1.xpose.msra.mxu0 0.0
        %4020 = vmatprep.subr.mxu0 0.0
        %4021 = vmatpush1.xpose.msra.mxu0 0.0
        %4022 = vmatprep.subr.mxu0 0.0
        %4023 = vmatpush1.xpose.msra.mxu0 0.0
        %4024 = vmatprep.subr.mxu0 0.0
        %4025 = vmatpush1.xpose.msra.mxu0 0.0
        %4026 = vmatprep.subr.mxu0 0.0
        %4027 = vmatpush1.xpose.msra.mxu0 0.0
        %4028 = vmatprep.subr.mxu0 0.0
        %4029 = vmatpush1.xpose.msra.mxu0 0.0
        %4030 = vmatprep.subr.mxu0 0.0
        %4031 = vmatpush1.xpose.msra.mxu0 0.0
        %4032 = vmatprep.mubr.f32.mxu0 0.0
        %4033 = vmatmul.mubr.f32.gmra.mrb[0].mxu0 %v3963
        %v4034 = vpop.f32.mrb[0].mxu0
        %v4035 = vadd.f32 %v1552, %v4034
        %v4036 = vpop.f32.mrb[0].mxu0
        %4037 = vdwg.mxu0
        %v4038 = vsel %vm1554, %v3807, -inf
        %4039 = vmax.xlane.f32.xlu0 %v4038
        %v4040 = vpop.xlane.xlu0 %4039
        %v4041 = vsel %vm1554, %v3883, -inf
        %4042 = vmax.xlane.f32.xlu0 %v4041
        %v4043 = vpop.xlane.xlu0 %4042
        %v4044 = vsel %vm1554, %v3959, -inf
        %4045 = vmax.xlane.f32.xlu0 %v4044
        %v4046 = vpop.xlane.xlu0 %4045
        %v4047 = vsel %vm1554, %v4035, -inf
        %4048 = vmax.xlane.f32.xlu0 %v4047
        %v4049 = vpop.xlane.xlu0 %4048
        %v4050 = vsub.f32 %v3807, %v4040
        %v4051 = vsub.f32 %v3883, %v4043
        %v4052 = vsub.f32 %v3959, %v4046
        %v4053 = vsub.f32 %v4035, %v4049
        %v4054 = vmul.f32 %v4050, 1.442695
        %v4055 = vpow.pop %v4054
        %v4056 = vmul.f32 %v4051, 1.442695
        %v4057 = vpow.pop %v4056
        %v4058 = vmul.f32 %v4052, 1.442695
        %v4059 = vpow.pop %v4058
        %v4060 = vmul.f32 %v4053, 1.442695
        %v4061 = vpow.pop %v4060
        %v4062 = vsel %vm1554, %v4055, 0.0
        %4063 = vadd.xlane.f32.xlu0 %v4062
        %v4064 = vpop.xlane.xlu0 %4063
        %v4065 = vsel %vm1554, %v4057, 0.0
        %4066 = vadd.xlane.f32.xlu0 %v4065
        %v4067 = vpop.xlane.xlu0 %4066
        %v4068 = vsel %vm1554, %v4059, 0.0
        %4069 = vadd.xlane.f32.xlu0 %v4068
        %v4070 = vpop.xlane.xlu0 %4069
        %v4071 = vsel %vm1554, %v4061, 0.0
        %4072 = vadd.xlane.f32.xlu0 %v4071
        %v4073 = vpop.xlane.xlu0 %4072
        %v4074 = vrcp.pop %v4064
        %v4075 = vrcp.pop %v4067
        %v4076 = vrcp.pop %v4070
        %v4077 = vrcp.pop %v4073
        %v4078 = vmul.f32 %v4055, %v4074
        %v4079 = vmul.f32 %v4057, %v4075
        %v4080 = vmul.f32 %v4059, %v4076
        %v4081 = vmul.f32 %v4061, %v4077
        %v4083 = vsel %vm1554, %v4078, 0
        %4085 = vmatprep.subr.mxu0 0.0
        %4086 = vmatpush1.msra.mxu0 %v3521
        %4087 = vmatprep.subr.mxu0 0.0
        %4088 = vmatpush1.msra.mxu0 0.0
        %4089 = vmatprep.subr.mxu0 0.0
        %4090 = vmatpush1.msra.mxu0 0.0
        %4091 = vmatprep.subr.mxu0 0.0
        %4092 = vmatpush1.msra.mxu0 0.0
        %4093 = vmatprep.subr.mxu0 0.0
        %4094 = vmatpush1.msra.mxu0 0.0
        %4095 = vmatprep.subr.mxu0 0.0
        %4096 = vmatpush1.msra.mxu0 0.0
        %4097 = vmatprep.subr.mxu0 0.0
        %4098 = vmatpush1.msra.mxu0 0.0
        %4099 = vmatprep.subr.mxu0 0.0
        %4100 = vmatpush1.msra.mxu0 0.0
        %4101 = vmatprep.subr.mxu0 0.0
        %4102 = vmatpush1.msra.mxu0 0.0
        %4103 = vmatprep.subr.mxu0 0.0
        %4104 = vmatpush1.msra.mxu0 0.0
        %4105 = vmatprep.subr.mxu0 0.0
        %4106 = vmatpush1.msra.mxu0 0.0
        %4107 = vmatprep.subr.mxu0 0.0
        %4108 = vmatpush1.msra.mxu0 0.0
        %4109 = vmatprep.subr.mxu0 0.0
        %4110 = vmatpush1.msra.mxu0 0.0
        %4111 = vmatprep.subr.mxu0 0.0
        %4112 = vmatpush1.msra.mxu0 0.0
        %4113 = vmatprep.subr.mxu0 0.0
        %4114 = vmatpush1.msra.mxu0 0.0
        %4115 = vmatprep.subr.mxu0 0.0
        %4116 = vmatpush1.msra.mxu0 0.0
        %4117 = vmatprep.subr.mxu0 0.0
        %4118 = vmatpush1.msra.mxu0 0.0
        %4119 = vmatprep.subr.mxu0 0.0
        %4120 = vmatpush1.msra.mxu0 0.0
        %4121 = vmatprep.subr.mxu0 0.0
        %4122 = vmatpush1.msra.mxu0 0.0
        %4123 = vmatprep.subr.mxu0 0.0
        %4124 = vmatpush1.msra.mxu0 0.0
        %4125 = vmatprep.subr.mxu0 0.0
        %4126 = vmatpush1.msra.mxu0 0.0
        %4127 = vmatprep.subr.mxu0 0.0
        %4128 = vmatpush1.msra.mxu0 0.0
        %4129 = vmatprep.subr.mxu0 0.0
        %4130 = vmatpush1.msra.mxu0 0.0
        %4131 = vmatprep.subr.mxu0 0.0
        %4132 = vmatpush1.msra.mxu0 0.0
        %4133 = vmatprep.subr.mxu0 0.0
        %4134 = vmatpush1.msra.mxu0 0.0
        %4135 = vmatprep.subr.mxu0 0.0
        %4136 = vmatpush1.msra.mxu0 0.0
        %4137 = vmatprep.subr.mxu0 0.0
        %4138 = vmatpush1.msra.mxu0 0.0
        %4139 = vmatprep.subr.mxu0 0.0
        %4140 = vmatpush1.msra.mxu0 0.0
        %4141 = vmatprep.subr.mxu0 0.0
        %4142 = vmatpush1.msra.mxu0 0.0
        %4143 = vmatprep.subr.mxu0 0.0
        %4144 = vmatpush1.msra.mxu0 0.0
        %4145 = vmatprep.subr.mxu0 0.0
        %4146 = vmatpush1.msra.mxu0 0.0
        %4147 = vmatprep.subr.mxu0 0.0
        %4148 = vmatpush1.msra.mxu0 0.0
        %4149 = vmatprep.mubr.f32.mxu0 0.0
        %4150 = vmatmul.mubr.f32.gmra.mrb[0].mxu0 %v4083
        %v4151 = vpop.f32.mrb[0].mxu0
        %v4152 = vadd.f32 0.0, %v4151
        %v4153 = vpop.f32.mrb[0].mxu0
        %4154 = vdwg.mxu0
        %v4156 = vsel %vm1554, %v4079, 0
        %4158 = vmatprep.subr.mxu0 0.0
        %4159 = vmatpush1.msra.mxu0 %v3591
        %4160 = vmatprep.subr.mxu0 0.0
        %4161 = vmatpush1.msra.mxu0 0.0
        %4162 = vmatprep.subr.mxu0 0.0
        %4163 = vmatpush1.msra.mxu0 0.0
        %4164 = vmatprep.subr.mxu0 0.0
        %4165 = vmatpush1.msra.mxu0 0.0
        %4166 = vmatprep.subr.mxu0 0.0
        %4167 = vmatpush1.msra.mxu0 0.0
        %4168 = vmatprep.subr.mxu0 0.0
        %4169 = vmatpush1.msra.mxu0 0.0
        %4170 = vmatprep.subr.mxu0 0.0
        %4171 = vmatpush1.msra.mxu0 0.0
        %4172 = vmatprep.subr.mxu0 0.0
        %4173 = vmatpush1.msra.mxu0 0.0
        %4174 = vmatprep.subr.mxu0 0.0
        %4175 = vmatpush1.msra.mxu0 0.0
        %4176 = vmatprep.subr.mxu0 0.0
        %4177 = vmatpush1.msra.mxu0 0.0
        %4178 = vmatprep.subr.mxu0 0.0
        %4179 = vmatpush1.msra.mxu0 0.0
        %4180 = vmatprep.subr.mxu0 0.0
        %4181 = vmatpush1.msra.mxu0 0.0
        %4182 = vmatprep.subr.mxu0 0.0
        %4183 = vmatpush1.msra.mxu0 0.0
        %4184 = vmatprep.subr.mxu0 0.0
        %4185 = vmatpush1.msra.mxu0 0.0
        %4186 = vmatprep.subr.mxu0 0.0
        %4187 = vmatpush1.msra.mxu0 0.0
        %4188 = vmatprep.subr.mxu0 0.0
        %4189 = vmatpush1.msra.mxu0 0.0
        %4190 = vmatprep.subr.mxu0 0.0
        %4191 = vmatpush1.msra.mxu0 0.0
        %4192 = vmatprep.subr.mxu0 0.0
        %4193 = vmatpush1.msra.mxu0 0.0
        %4194 = vmatprep.subr.mxu0 0.0
        %4195 = vmatpush1.msra.mxu0 0.0
        %4196 = vmatprep.subr.mxu0 0.0
        %4197 = vmatpush1.msra.mxu0 0.0
        %4198 = vmatprep.subr.mxu0 0.0
        %4199 = vmatpush1.msra.mxu0 0.0
        %4200 = vmatprep.subr.mxu0 0.0
        %4201 = vmatpush1.msra.mxu0 0.0
        %4202 = vmatprep.subr.mxu0 0.0
        %4203 = vmatpush1.msra.mxu0 0.0
        %4204 = vmatprep.subr.mxu0 0.0
        %4205 = vmatpush1.msra.mxu0 0.0
        %4206 = vmatprep.subr.mxu0 0.0
        %4207 = vmatpush1.msra.mxu0 0.0
        %4208 = vmatprep.subr.mxu0 0.0
        %4209 = vmatpush1.msra.mxu0 0.0
        %4210 = vmatprep.subr.mxu0 0.0
        %4211 = vmatpush1.msra.mxu0 0.0
        %4212 = vmatprep.subr.mxu0 0.0
        %4213 = vmatpush1.msra.mxu0 0.0
        %4214 = vmatprep.subr.mxu0 0.0
        %4215 = vmatpush1.msra.mxu0 0.0
        %4216 = vmatprep.subr.mxu0 0.0
        %4217 = vmatpush1.msra.mxu0 0.0
        %4218 = vmatprep.subr.mxu0 0.0
        %4219 = vmatpush1.msra.mxu0 0.0
        %4220 = vmatprep.subr.mxu0 0.0
        %4221 = vmatpush1.msra.mxu0 0.0
        %4222 = vmatprep.mubr.f32.mxu0 0.0
        %4223 = vmatmul.mubr.f32.gmra.mrb[0].mxu0 %v4156
        %v4224 = vpop.f32.mrb[0].mxu0
        %v4225 = vadd.f32 0.0, %v4224
        %v4226 = vpop.f32.mrb[0].mxu0
        %4227 = vdwg.mxu0
        %v4229 = vsel %vm1554, %v4080, 0
        %4231 = vmatprep.subr.mxu0 0.0
        %4232 = vmatpush1.msra.mxu0 %v3661
        %4233 = vmatprep.subr.mxu0 0.0
        %4234 = vmatpush1.msra.mxu0 0.0
        %4235 = vmatprep.subr.mxu0 0.0
        %4236 = vmatpush1.msra.mxu0 0.0
        %4237 = vmatprep.subr.mxu0 0.0
        %4238 = vmatpush1.msra.mxu0 0.0
        %4239 = vmatprep.subr.mxu0 0.0
        %4240 = vmatpush1.msra.mxu0 0.0
        %4241 = vmatprep.subr.mxu0 0.0
        %4242 = vmatpush1.msra.mxu0 0.0
        %4243 = vmatprep.subr.mxu0 0.0
        %4244 = vmatpush1.msra.mxu0 0.0
        %4245 = vmatprep.subr.mxu0 0.0
        %4246 = vmatpush1.msra.mxu0 0.0
        %4247 = vmatprep.subr.mxu0 0.0
        %4248 = vmatpush1.msra.mxu0 0.0
        %4249 = vmatprep.subr.mxu0 0.0
        %4250 = vmatpush1.msra.mxu0 0.0
        %4251 = vmatprep.subr.mxu0 0.0
        %4252 = vmatpush1.msra.mxu0 0.0
        %4253 = vmatprep.subr.mxu0 0.0
        %4254 = vmatpush1.msra.mxu0 0.0
        %4255 = vmatprep.subr.mxu0 0.0
        %4256 = vmatpush1.msra.mxu0 0.0
        %4257 = vmatprep.subr.mxu0 0.0
        %4258 = vmatpush1.msra.mxu0 0.0
        %4259 = vmatprep.subr.mxu0 0.0
        %4260 = vmatpush1.msra.mxu0 0.0
        %4261 = vmatprep.subr.mxu0 0.0
        %4262 = vmatpush1.msra.mxu0 0.0
        %4263 = vmatprep.subr.mxu0 0.0
        %4264 = vmatpush1.msra.mxu0 0.0
        %4265 = vmatprep.subr.mxu0 0.0
        %4266 = vmatpush1.msra.mxu0 0.0
        %4267 = vmatprep.subr.mxu0 0.0
        %4268 = vmatpush1.msra.mxu0 0.0
        %4269 = vmatprep.subr.mxu0 0.0
        %4270 = vmatpush1.msra.mxu0 0.0
        %4271 = vmatprep.subr.mxu0 0.0
        %4272 = vmatpush1.msra.mxu0 0.0
        %4273 = vmatprep.subr.mxu0 0.0
        %4274 = vmatpush1.msra.mxu0 0.0
        %4275 = vmatprep.subr.mxu0 0.0
        %4276 = vmatpush1.msra.mxu0 0.0
        %4277 = vmatprep.subr.mxu0 0.0
        %4278 = vmatpush1.msra.mxu0 0.0
        %4279 = vmatprep.subr.mxu0 0.0
        %4280 = vmatpush1.msra.mxu0 0.0
        %4281 = vmatprep.subr.mxu0 0.0
        %4282 = vmatpush1.msra.mxu0 0.0
        %4283 = vmatprep.subr.mxu0 0.0
        %4284 = vmatpush1.msra.mxu0 0.0
        %4285 = vmatprep.subr.mxu0 0.0
        %4286 = vmatpush1.msra.mxu0 0.0
        %4287 = vmatprep.subr.mxu0 0.0
        %4288 = vmatpush1.msra.mxu0 0.0
        %4289 = vmatprep.subr.mxu0 0.0
        %4290 = vmatpush1.msra.mxu0 0.0
        %4291 = vmatprep.subr.mxu0 0.0
        %4292 = vmatpush1.msra.mxu0 0.0
        %4293 = vmatprep.subr.mxu0 0.0
        %4294 = vmatpush1.msra.mxu0 0.0
        %4295 = vmatprep.mubr.f32.mxu0 0.0
        %4296 = vmatmul.mubr.f32.gmra.mrb[0].mxu0 %v4229
        %v4297 = vpop.f32.mrb[0].mxu0
        %v4298 = vadd.f32 0.0, %v4297
        %v4299 = vpop.f32.mrb[0].mxu0
        %4300 = vdwg.mxu0
        %v4302 = vsel %vm1554, %v4081, 0
        %4304 = vmatprep.subr.mxu0 0.0
        %4305 = vmatpush1.msra.mxu0 %v3731
        %4306 = vmatprep.subr.mxu0 0.0
        %4307 = vmatpush1.msra.mxu0 0.0
        %4308 = vmatprep.subr.mxu0 0.0
        %4309 = vmatpush1.msra.mxu0 0.0
        %4310 = vmatprep.subr.mxu0 0.0
        %4311 = vmatpush1.msra.mxu0 0.0
        %4312 = vmatprep.subr.mxu0 0.0
        %4313 = vmatpush1.msra.mxu0 0.0
        %4314 = vmatprep.subr.mxu0 0.0
        %4315 = vmatpush1.msra.mxu0 0.0
        %4316 = vmatprep.subr.mxu0 0.0
        %4317 = vmatpush1.msra.mxu0 0.0
        %4318 = vmatprep.subr.mxu0 0.0
        %4319 = vmatpush1.msra.mxu0 0.0
        %4320 = vmatprep.subr.mxu0 0.0
        %4321 = vmatpush1.msra.mxu0 0.0
        %4322 = vmatprep.subr.mxu0 0.0
        %4323 = vmatpush1.msra.mxu0 0.0
        %4324 = vmatprep.subr.mxu0 0.0
        %4325 = vmatpush1.msra.mxu0 0.0
        %4326 = vmatprep.subr.mxu0 0.0
        %4327 = vmatpush1.msra.mxu0 0.0
        %4328 = vmatprep.subr.mxu0 0.0
        %4329 = vmatpush1.msra.mxu0 0.0
        %4330 = vmatprep.subr.mxu0 0.0
        %4331 = vmatpush1.msra.mxu0 0.0
        %4332 = vmatprep.subr.mxu0 0.0
        %4333 = vmatpush1.msra.mxu0 0.0
        %4334 = vmatprep.subr.mxu0 0.0
        %4335 = vmatpush1.msra.mxu0 0.0
        %4336 = vmatprep.subr.mxu0 0.0
        %4337 = vmatpush1.msra.mxu0 0.0
        %4338 = vmatprep.subr.mxu0 0.0
        %4339 = vmatpush1.msra.mxu0 0.0
        %4340 = vmatprep.subr.mxu0 0.0
        %4341 = vmatpush1.msra.mxu0 0.0
        %4342 = vmatprep.subr.mxu0 0.0
        %4343 = vmatpush1.msra.mxu0 0.0
        %4344 = vmatprep.subr.mxu0 0.0
        %4345 = vmatpush1.msra.mxu0 0.0
        %4346 = vmatprep.subr.mxu0 0.0
        %4347 = vmatpush1.msra.mxu0 0.0
        %4348 = vmatprep.subr.mxu0 0.0
        %4349 = vmatpush1.msra.mxu0 0.0
        %4350 = vmatprep.subr.mxu0 0.0
        %4351 = vmatpush1.msra.mxu0 0.0
        %4352 = vmatprep.subr.mxu0 0.0
        %4353 = vmatpush1.msra.mxu0 0.0
        %4354 = vmatprep.subr.mxu0 0.0
        %4355 = vmatpush1.msra.mxu0 0.0
        %4356 = vmatprep.subr.mxu0 0.0
        %4357 = vmatpush1.msra.mxu0 0.0
        %4358 = vmatprep.subr.mxu0 0.0
        %4359 = vmatpush1.msra.mxu0 0.0
        %4360 = vmatprep.subr.mxu0 0.0
        %4361 = vmatpush1.msra.mxu0 0.0
        %4362 = vmatprep.subr.mxu0 0.0
        %4363 = vmatpush1.msra.mxu0 0.0
        %4364 = vmatprep.subr.mxu0 0.0
        %4365 = vmatpush1.msra.mxu0 0.0
        %4366 = vmatprep.subr.mxu0 0.0
        %4367 = vmatpush1.msra.mxu0 0.0
        %4368 = vmatprep.mubr.f32.mxu0 0.0
        %4369 = vmatmul.mubr.f32.gmra.mrb[0].mxu0 %v4302
        %v4370 = vpop.f32.mrb[0].mxu0
        %v4371 = vadd.f32 0.0, %v4370
        %v4372 = vpop.f32.mrb[0].mxu0
        %4373 = vdwg.mxu0
        %s4374 = scalar_lea.vmem %s6, 32
        %v4375 = vld [vmem:[%s4374] sm:$0xff]
        %v4376 = vld [vmem:[%s4374 + $0x8] sm:$0xff]
        %v4377 = vld [vmem:[%s4374 + $0x10] sm:$0xff]
        %v4378 = vld [vmem:[%s4374 + $0x18] sm:$0xff]
        %v4380 = vsel %vm1554, %v4152, 0
        %4382 = vmatprep.subr.mxu0 0.0
        %4383 = vmatpush1.msra.mxu0 %v4375
        %4384 = vmatprep.subr.mxu0 0.0
        %4385 = vmatpush1.msra.mxu0 0.0
        %4386 = vmatprep.subr.mxu0 0.0
        %4387 = vmatpush1.msra.mxu0 0.0
        %4388 = vmatprep.subr.mxu0 0.0
        %4389 = vmatpush1.msra.mxu0 0.0
        %4390 = vmatprep.subr.mxu0 0.0
        %4391 = vmatpush1.msra.mxu0 0.0
        %4392 = vmatprep.subr.mxu0 0.0
        %4393 = vmatpush1.msra.mxu0 0.0
        %4394 = vmatprep.subr.mxu0 0.0
        %4395 = vmatpush1.msra.mxu0 0.0
        %4396 = vmatprep.subr.mxu0 0.0
        %4397 = vmatpush1.msra.mxu0 0.0
        %4398 = vmatprep.subr.mxu0 0.0
        %4399 = vmatpush1.msra.mxu0 0.0
        %4400 = vmatprep.subr.mxu0 0.0
        %4401 = vmatpush1.msra.mxu0 0.0
        %4402 = vmatprep.subr.mxu0 0.0
        %4403 = vmatpush1.msra.mxu0 0.0
        %4404 = vmatprep.subr.mxu0 0.0
        %4405 = vmatpush1.msra.mxu0 0.0
        %4406 = vmatprep.subr.mxu0 0.0
        %4407 = vmatpush1.msra.mxu0 0.0
        %4408 = vmatprep.subr.mxu0 0.0
        %4409 = vmatpush1.msra.mxu0 0.0
        %4410 = vmatprep.subr.mxu0 0.0
        %4411 = vmatpush1.msra.mxu0 0.0
        %4412 = vmatprep.subr.mxu0 0.0
        %4413 = vmatpush1.msra.mxu0 0.0
        %4414 = vmatprep.subr.mxu0 0.0
        %4415 = vmatpush1.msra.mxu0 0.0
        %4416 = vmatprep.subr.mxu0 0.0
        %4417 = vmatpush1.msra.mxu0 0.0
        %4418 = vmatprep.subr.mxu0 0.0
        %4419 = vmatpush1.msra.mxu0 0.0
        %4420 = vmatprep.subr.mxu0 0.0
        %4421 = vmatpush1.msra.mxu0 0.0
        %4422 = vmatprep.subr.mxu0 0.0
        %4423 = vmatpush1.msra.mxu0 0.0
        %4424 = vmatprep.subr.mxu0 0.0
        %4425 = vmatpush1.msra.mxu0 0.0
        %4426 = vmatprep.subr.mxu0 0.0
        %4427 = vmatpush1.msra.mxu0 0.0
        %4428 = vmatprep.subr.mxu0 0.0
        %4429 = vmatpush1.msra.mxu0 0.0
        %4430 = vmatprep.subr.mxu0 0.0
        %4431 = vmatpush1.msra.mxu0 0.0
        %4432 = vmatprep.subr.mxu0 0.0
        %4433 = vmatpush1.msra.mxu0 0.0
        %4434 = vmatprep.subr.mxu0 0.0
        %4435 = vmatpush1.msra.mxu0 0.0
        %4436 = vmatprep.subr.mxu0 0.0
        %4437 = vmatpush1.msra.mxu0 0.0
        %4438 = vmatprep.subr.mxu0 0.0
        %4439 = vmatpush1.msra.mxu0 0.0
        %4440 = vmatprep.subr.mxu0 0.0
        %4441 = vmatpush1.msra.mxu0 0.0
        %4442 = vmatprep.subr.mxu0 0.0
        %4443 = vmatpush1.msra.mxu0 0.0
        %4444 = vmatprep.subr.mxu0 0.0
        %4445 = vmatpush1.msra.mxu0 0.0
        %4446 = vmatprep.mubr.f32.mxu0 0.0
        %4447 = vmatmul.mubr.f32.gmra.mrb[0].mxu0 %v4380
        %v4448 = vpop.f32.mrb[0].mxu0
        %v4449 = vadd.f32 0.0, %v4448
        %v4450 = vpop.f32.mrb[0].mxu0
        %4451 = vdwg.mxu0
        %v4453 = vsel %vm1554, %v4225, 0
        %4455 = vmatprep.subr.mxu0 0.0
        %4456 = vmatpush1.msra.mxu0 %v4376
        %4457 = vmatprep.subr.mxu0 0.0
        %4458 = vmatpush1.msra.mxu0 0.0
        %4459 = vmatprep.subr.mxu0 0.0
        %4460 = vmatpush1.msra.mxu0 0.0
        %4461 = vmatprep.subr.mxu0 0.0
        %4462 = vmatpush1.msra.mxu0 0.0
        %4463 = vmatprep.subr.mxu0 0.0
        %4464 = vmatpush1.msra.mxu0 0.0
        %4465 = vmatprep.subr.mxu0 0.0
        %4466 = vmatpush1.msra.mxu0 0.0
        %4467 = vmatprep.subr.mxu0 0.0
        %4468 = vmatpush1.msra.mxu0 0.0
        %4469 = vmatprep.subr.mxu0 0.0
        %4470 = vmatpush1.msra.mxu0 0.0
        %4471 = vmatprep.subr.mxu0 0.0
        %4472 = vmatpush1.msra.mxu0 0.0
        %4473 = vmatprep.subr.mxu0 0.0
        %4474 = vmatpush1.msra.mxu0 0.0
        %4475 = vmatprep.subr.mxu0 0.0
        %4476 = vmatpush1.msra.mxu0 0.0
        %4477 = vmatprep.subr.mxu0 0.0
        %4478 = vmatpush1.msra.mxu0 0.0
        %4479 = vmatprep.subr.mxu0 0.0
        %4480 = vmatpush1.msra.mxu0 0.0
        %4481 = vmatprep.subr.mxu0 0.0
        %4482 = vmatpush1.msra.mxu0 0.0
        %4483 = vmatprep.subr.mxu0 0.0
        %4484 = vmatpush1.msra.mxu0 0.0
        %4485 = vmatprep.subr.mxu0 0.0
        %4486 = vmatpush1.msra.mxu0 0.0
        %4487 = vmatprep.subr.mxu0 0.0
        %4488 = vmatpush1.msra.mxu0 0.0
        %4489 = vmatprep.subr.mxu0 0.0
        %4490 = vmatpush1.msra.mxu0 0.0
        %4491 = vmatprep.subr.mxu0 0.0
        %4492 = vmatpush1.msra.mxu0 0.0
        %4493 = vmatprep.subr.mxu0 0.0
        %4494 = vmatpush1.msra.mxu0 0.0
        %4495 = vmatprep.subr.mxu0 0.0
        %4496 = vmatpush1.msra.mxu0 0.0
        %4497 = vmatprep.subr.mxu0 0.0
        %4498 = vmatpush1.msra.mxu0 0.0
        %4499 = vmatprep.subr.mxu0 0.0
        %4500 = vmatpush1.msra.mxu0 0.0
        %4501 = vmatprep.subr.mxu0 0.0
        %4502 = vmatpush1.msra.mxu0 0.0
        %4503 = vmatprep.subr.mxu0 0.0
        %4504 = vmatpush1.msra.mxu0 0.0
        %4505 = vmatprep.subr.mxu0 0.0
        %4506 = vmatpush1.msra.mxu0 0.0
        %4507 = vmatprep.subr.mxu0 0.0
        %4508 = vmatpush1.msra.mxu0 0.0
        %4509 = vmatprep.subr.mxu0 0.0
        %4510 = vmatpush1.msra.mxu0 0.0
        %4511 = vmatprep.subr.mxu0 0.0
        %4512 = vmatpush1.msra.mxu0 0.0
        %4513 = vmatprep.subr.mxu0 0.0
        %4514 = vmatpush1.msra.mxu0 0.0
        %4515 = vmatprep.subr.mxu0 0.0
        %4516 = vmatpush1.msra.mxu0 0.0
        %4517 = vmatprep.subr.mxu0 0.0
        %4518 = vmatpush1.msra.mxu0 0.0
        %4519 = vmatprep.mubr.f32.mxu0 0.0
        %4520 = vmatmul.mubr.f32.gmra.mrb[0].mxu0 %v4453
        %v4521 = vpop.f32.mrb[0].mxu0
        %v4522 = vadd.f32 0.0, %v4521
        %v4523 = vpop.f32.mrb[0].mxu0
        %4524 = vdwg.mxu0
        %v4526 = vsel %vm1554, %v4298, 0
        %4528 = vmatprep.subr.mxu0 0.0
        %4529 = vmatpush1.msra.mxu0 %v4377
        %4530 = vmatprep.subr.mxu0 0.0
        %4531 = vmatpush1.msra.mxu0 0.0
        %4532 = vmatprep.subr.mxu0 0.0
        %4533 = vmatpush1.msra.mxu0 0.0
        %4534 = vmatprep.subr.mxu0 0.0
        %4535 = vmatpush1.msra.mxu0 0.0
        %4536 = vmatprep.subr.mxu0 0.0
        %4537 = vmatpush1.msra.mxu0 0.0
        %4538 = vmatprep.subr.mxu0 0.0
        %4539 = vmatpush1.msra.mxu0 0.0
        %4540 = vmatprep.subr.mxu0 0.0
        %4541 = vmatpush1.msra.mxu0 0.0
        %4542 = vmatprep.subr.mxu0 0.0
        %4543 = vmatpush1.msra.mxu0 0.0
        %4544 = vmatprep.subr.mxu0 0.0
        %4545 = vmatpush1.msra.mxu0 0.0
        %4546 = vmatprep.subr.mxu0 0.0
        %4547 = vmatpush1.msra.mxu0 0.0
        %4548 = vmatprep.subr.mxu0 0.0
        %4549 = vmatpush1.msra.mxu0 0.0
        %4550 = vmatprep.subr.mxu0 0.0
        %4551 = vmatpush1.msra.mxu0 0.0
        %4552 = vmatprep.subr.mxu0 0.0
        %4553 = vmatpush1.msra.mxu0 0.0
        %4554 = vmatprep.subr.mxu0 0.0
        %4555 = vmatpush1.msra.mxu0 0.0
        %4556 = vmatprep.subr.mxu0 0.0
        %4557 = vmatpush1.msra.mxu0 0.0
        %4558 = vmatprep.subr.mxu0 0.0
        %4559 = vmatpush1.msra.mxu0 0.0
        %4560 = vmatprep.subr.mxu0 0.0
        %4561 = vmatpush1.msra.mxu0 0.0
        %4562 = vmatprep.subr.mxu0 0.0
        %4563 = vmatpush1.msra.mxu0 0.0
        %4564 = vmatprep.subr.mxu0 0.0
        %4565 = vmatpush1.msra.mxu0 0.0
        %4566 = vmatprep.subr.mxu0 0.0
        %4567 = vmatpush1.msra.mxu0 0.0
        %4568 = vmatprep.subr.mxu0 0.0
        %4569 = vmatpush1.msra.mxu0 0.0
        %4570 = vmatprep.subr.mxu0 0.0
        %4571 = vmatpush1.msra.mxu0 0.0
        %4572 = vmatprep.subr.mxu0 0.0
        %4573 = vmatpush1.msra.mxu0 0.0
        %4574 = vmatprep.subr.mxu0 0.0
        %4575 = vmatpush1.msra.mxu0 0.0
        %4576 = vmatprep.subr.mxu0 0.0
        %4577 = vmatpush1.msra.mxu0 0.0
        %4578 = vmatprep.subr.mxu0 0.0
        %4579 = vmatpush1.msra.mxu0 0.0
        %4580 = vmatprep.subr.mxu0 0.0
        %4581 = vmatpush1.msra.mxu0 0.0
        %4582 = vmatprep.subr.mxu0 0.0
        %4583 = vmatpush1.msra.mxu0 0.0
        %4584 = vmatprep.subr.mxu0 0.0
        %4585 = vmatpush1.msra.mxu0 0.0
        %4586 = vmatprep.subr.mxu0 0.0
        %4587 = vmatpush1.msra.mxu0 0.0
        %4588 = vmatprep.subr.mxu0 0.0
        %4589 = vmatpush1.msra.mxu0 0.0
        %4590 = vmatprep.subr.mxu0 0.0
        %4591 = vmatpush1.msra.mxu0 0.0
        %4592 = vmatprep.mubr.f32.mxu0 0.0
        %4593 = vmatmul.mubr.f32.gmra.mrb[0].mxu0 %v4526
        %v4594 = vpop.f32.mrb[0].mxu0
        %v4595 = vadd.f32 0.0, %v4594
        %v4596 = vpop.f32.mrb[0].mxu0
        %4597 = vdwg.mxu0
        %v4599 = vsel %vm1554, %v4371, 0
        %4601 = vmatprep.subr.mxu0 0.0
        %4602 = vmatpush1.msra.mxu0 %v4378
        %4603 = vmatprep.subr.mxu0 0.0
        %4604 = vmatpush1.msra.mxu0 0.0
        %4605 = vmatprep.subr.mxu0 0.0
        %4606 = vmatpush1.msra.mxu0 0.0
        %4607 = vmatprep.subr.mxu0 0.0
        %4608 = vmatpush1.msra.mxu0 0.0
        %4609 = vmatprep.subr.mxu0 0.0
        %4610 = vmatpush1.msra.mxu0 0.0
        %4611 = vmatprep.subr.mxu0 0.0
        %4612 = vmatpush1.msra.mxu0 0.0
        %4613 = vmatprep.subr.mxu0 0.0
        %4614 = vmatpush1.msra.mxu0 0.0
        %4615 = vmatprep.subr.mxu0 0.0
        %4616 = vmatpush1.msra.mxu0 0.0
        %4617 = vmatprep.subr.mxu0 0.0
        %4618 = vmatpush1.msra.mxu0 0.0
        %4619 = vmatprep.subr.mxu0 0.0
        %4620 = vmatpush1.msra.mxu0 0.0
        %4621 = vmatprep.subr.mxu0 0.0
        %4622 = vmatpush1.msra.mxu0 0.0
        %4623 = vmatprep.subr.mxu0 0.0
        %4624 = vmatpush1.msra.mxu0 0.0
        %4625 = vmatprep.subr.mxu0 0.0
        %4626 = vmatpush1.msra.mxu0 0.0
        %4627 = vmatprep.subr.mxu0 0.0
        %4628 = vmatpush1.msra.mxu0 0.0
        %4629 = vmatprep.subr.mxu0 0.0
        %4630 = vmatpush1.msra.mxu0 0.0
        %4631 = vmatprep.subr.mxu0 0.0
        %4632 = vmatpush1.msra.mxu0 0.0
        %4633 = vmatprep.subr.mxu0 0.0
        %4634 = vmatpush1.msra.mxu0 0.0
        %4635 = vmatprep.subr.mxu0 0.0
        %4636 = vmatpush1.msra.mxu0 0.0
        %4637 = vmatprep.subr.mxu0 0.0
        %4638 = vmatpush1.msra.mxu0 0.0
        %4639 = vmatprep.subr.mxu0 0.0
        %4640 = vmatpush1.msra.mxu0 0.0
        %4641 = vmatprep.subr.mxu0 0.0
        %4642 = vmatpush1.msra.mxu0 0.0
        %4643 = vmatprep.subr.mxu0 0.0
        %4644 = vmatpush1.msra.mxu0 0.0
        %4645 = vmatprep.subr.mxu0 0.0
        %4646 = vmatpush1.msra.mxu0 0.0
        %4647 = vmatprep.subr.mxu0 0.0
        %4648 = vmatpush1.msra.mxu0 0.0
        %4649 = vmatprep.subr.mxu0 0.0
        %4650 = vmatpush1.msra.mxu0 0.0
        %4651 = vmatprep.subr.mxu0 0.0
        %4652 = vmatpush1.msra.mxu0 0.0
        %4653 = vmatprep.subr.mxu0 0.0
        %4654 = vmatpush1.msra.mxu0 0.0
        %4655 = vmatprep.subr.mxu0 0.0
        %4656 = vmatpush1.msra.mxu0 0.0
        %4657 = vmatprep.subr.mxu0 0.0
        %4658 = vmatpush1.msra.mxu0 0.0
        %4659 = vmatprep.subr.mxu0 0.0
        %4660 = vmatpush1.msra.mxu0 0.0
        %4661 = vmatprep.subr.mxu0 0.0
        %4662 = vmatpush1.msra.mxu0 0.0
        %4663 = vmatprep.subr.mxu0 0.0
        %4664 = vmatpush1.msra.mxu0 0.0
        %4665 = vmatprep.mubr.f32.mxu0 0.0
        %4666 = vmatmul.mubr.f32.gmra.mrb[0].mxu0 %v4599
        %v4667 = vpop.f32.mrb[0].mxu0
        %v4668 = vadd.f32 0.0, %v4667
        %v4669 = vpop.f32.mrb[0].mxu0
        %4670 = vdwg.mxu0
        %v4671 = vsel %vm537, %v4449, 0.0
        %v4672 = vsel %vm537, %v4522, 0.0
        %v4673 = vadd.f32 %v4671, %v4672
        %v4674 = vsel %vm537, %v4595, 0.0
        %v4675 = vadd.f32 %v4673, %v4674
        %v4676 = vsel %vm537, %v4668, 0.0
        %v4677 = vadd.f32 %v4675, %v4676
        %s4678 = scalar_lea.vmem %s7, 1
        %v4679 = vld [vmem:[%s4678] sm:$0x1]
        %v4681 = vlaneseq
        %v4682 = vshrl.u32 %v4681, 7
        %v4683 = vsub.s32 0, %v4682
        %v4684 = vrot.slane %v4679, %v4683
        %v4686 = vadd.f32 %v4677, %v4684
        %v4687 = vadd.f32 %v2718, %v4686
        %s4688 = scalar_lea.vmem %s8, 1
        %v4689 = vld [vmem:[%s4688] sm:$0x1]
        %s4690 = scalar_lea.vmem %s9, 1
        %v4691 = vld [vmem:[%s4690] sm:$0x1]
        %v4692 = vsel %vm537, %v4687, 0.0
        %4693 = vadd.xlane.f32.xlu0 %v4692
        %v4694 = vpop.xlane.xlu0 %4693
        %v4695 = vmul.f32 %v4694, %v541
        %v4696 = vsub.f32 %v4687, %v4695
        %v4697 = vmul.f32 %v4696, %v4696
        %v4698 = vsel %vm537, %v4697, 0.0
        %4699 = vadd.xlane.f32.xlu0 %v4698
        %v4700 = vpop.xlane.xlu0 %4699
        %v4701 = vmul.f32 %v4700, 0.032258064
        %v4702 = vrsqrt.pop %v4701
        %v4703 = vmul.f32 %v4701, %v4702
        %vm4704 = vcmp.eq.f32.partialorder %v4701, inf
        %v4705 = vsel %vm4704, %v4701, %v4703
        %vm4706 = vcmp.eq.f32.partialorder %v4701, 0.0
        %v4707 = vand.u32 %v4701, 2147483648
        %v4708 = vsel %vm4706, %v4707, %v4705
        %v4709 = vadd.f32 %v4708, 1e-06
        %v4710 = vrcp.pop %v4709
        %v4711 = vmul.f32 %v4696, %v4710
        %v4713 = vlaneseq
        %v4714 = vshrl.u32 %v4713, 7
        %v4715 = vsub.s32 0, %v4714
        %v4716 = vrot.slane %v4689, %v4715
        %v4718 = vmul.f32 %v4716, %v4711
        %v4720 = vlaneseq
        %v4721 = vshrl.u32 %v4720, 7
        %v4722 = vsub.s32 0, %v4721
        %v4723 = vrot.slane %v4691, %v4722
        %v4725 = vadd.f32 %v4718, %v4723
        %s4726 = scalar_lea.vmem %s10, 32
        %v4727 = vld [vmem:[%s4726] sm:$0xff]
        %v4728 = vld [vmem:[%s4726 + $0x8] sm:$0xff]
        %v4729 = vld [vmem:[%s4726 + $0x10] sm:$0xff]
        %v4730 = vld [vmem:[%s4726 + $0x18] sm:$0xff]
        %s4731 = scalar_lea.vmem %s11, 1
        %v4732 = vld [vmem:[%s4731] sm:$0x1]
        %v4734 = vlaneseq
        %v4735 = vshrl.u32 %v4734, 7
        %v4736 = vsub.s32 0, %v4735
        %v4737 = vrot.slane %v4732, %v4736
        %v4740 = vsel %vm537, %v4725, 0
        %4742 = vmatprep.subr.mxu0 0.0
        %4743 = vmatpush1.msra.mxu0 %v4727
        %4744 = vmatprep.subr.mxu0 0.0
        %4745 = vmatpush1.msra.mxu0 %v4728
        %4746 = vmatprep.subr.mxu0 0.0
        %4747 = vmatpush1.msra.mxu0 %v4729
        %4748 = vmatprep.subr.mxu0 0.0
        %4749 = vmatpush1.msra.mxu0 %v4730
        %4750 = vmatprep.subr.mxu0 0.0
        %4751 = vmatpush1.msra.mxu0 0.0
        %4752 = vmatprep.subr.mxu0 0.0
        %4753 = vmatpush1.msra.mxu0 0.0
        %4754 = vmatprep.subr.mxu0 0.0
        %4755 = vmatpush1.msra.mxu0 0.0
        %4756 = vmatprep.subr.mxu0 0.0
        %4757 = vmatpush1.msra.mxu0 0.0
        %4758 = vmatprep.subr.mxu0 0.0
        %4759 = vmatpush1.msra.mxu0 0.0
        %4760 = vmatprep.subr.mxu0 0.0
        %4761 = vmatpush1.msra.mxu0 0.0
        %4762 = vmatprep.subr.mxu0 0.0
        %4763 = vmatpush1.msra.mxu0 0.0
        %4764 = vmatprep.subr.mxu0 0.0
        %4765 = vmatpush1.msra.mxu0 0.0
        %4766 = vmatprep.subr.mxu0 0.0
        %4767 = vmatpush1.msra.mxu0 0.0
        %4768 = vmatprep.subr.mxu0 0.0
        %4769 = vmatpush1.msra.mxu0 0.0
        %4770 = vmatprep.subr.mxu0 0.0
        %4771 = vmatpush1.msra.mxu0 0.0
        %4772 = vmatprep.subr.mxu0 0.0
        %4773 = vmatpush1.msra.mxu0 0.0
        %4774 = vmatprep.subr.mxu0 0.0
        %4775 = vmatpush1.msra.mxu0 0.0
        %4776 = vmatprep.subr.mxu0 0.0
        %4777 = vmatpush1.msra.mxu0 0.0
        %4778 = vmatprep.subr.mxu0 0.0
        %4779 = vmatpush1.msra.mxu0 0.0
        %4780 = vmatprep.subr.mxu0 0.0
        %4781 = vmatpush1.msra.mxu0 0.0
        %4782 = vmatprep.subr.mxu0 0.0
        %4783 = vmatpush1.msra.mxu0 0.0
        %4784 = vmatprep.subr.mxu0 0.0
        %4785 = vmatpush1.msra.mxu0 0.0
        %4786 = vmatprep.subr.mxu0 0.0
        %4787 = vmatpush1.msra.mxu0 0.0
        %4788 = vmatprep.subr.mxu0 0.0
        %4789 = vmatpush1.msra.mxu0 0.0
        %4790 = vmatprep.subr.mxu0 0.0
        %4791 = vmatpush1.msra.mxu0 0.0
        %4792 = vmatprep.subr.mxu0 0.0
        %4793 = vmatpush1.msra.mxu0 0.0
        %4794 = vmatprep.subr.mxu0 0.0
        %4795 = vmatpush1.msra.mxu0 0.0
        %4796 = vmatprep.subr.mxu0 0.0
        %4797 = vmatpush1.msra.mxu0 0.0
        %4798 = vmatprep.subr.mxu0 0.0
        %4799 = vmatpush1.msra.mxu0 0.0
        %4800 = vmatprep.subr.mxu0 0.0
        %4801 = vmatpush1.msra.mxu0 0.0
        %4802 = vmatprep.subr.mxu0 0.0
        %4803 = vmatpush1.msra.mxu0 0.0
        %4804 = vmatprep.subr.mxu0 0.0
        %4805 = vmatpush1.msra.mxu0 0.0
        %4806 = vmatprep.mubr.f32.mxu0 0.0
        %4807 = vmatmul.mubr.f32.gmra.mrb[0].mxu0 %v4740
        %v4808 = vpop.f32.mrb[0].mxu0
        %v4809 = vadd.f32 %v4737, %v4808
        %v4810 = vpop.f32.mrb[0].mxu0
        %4811 = vdwg.mxu0
        %v4812 = vmax.f32 %v4809, 0.0
        %s4813 = scalar_lea.vmem %s12, 64
        %v4814 = vld [vmem:[%s4813] sm:$0xff]
        %v4815 = vld [vmem:[%s4813 + $0x8] sm:$0xff]
        %v4816 = vld [vmem:[%s4813 + $0x10] sm:$0xff]
        %v4817 = vld [vmem:[%s4813 + $0x18] sm:$0xff]
        %v4818 = vld [vmem:[%s4813 + $0x20] sm:$0xff]
        %v4819 = vld [vmem:[%s4813 + $0x28] sm:$0xff]
        %v4820 = vld [vmem:[%s4813 + $0x30] sm:$0xff]
        %v4821 = vld [vmem:[%s4813 + $0x38] sm:$0xff]
        %v4823 = vsel %vm2636, %v4812, 0
        %4825 = vmatprep.subr.mxu0 0.0
        %4826 = vmatpush1.msra.mxu0 %v4814
        %4827 = vmatprep.subr.mxu0 0.0
        %4828 = vmatpush1.msra.mxu0 %v4815
        %4829 = vmatprep.subr.mxu0 0.0
        %4830 = vmatpush1.msra.mxu0 %v4816
        %4831 = vmatprep.subr.mxu0 0.0
        %4832 = vmatpush1.msra.mxu0 %v4817
        %4833 = vmatprep.subr.mxu0 0.0
        %4834 = vmatpush1.msra.mxu0 %v4818
        %4835 = vmatprep.subr.mxu0 0.0
        %4836 = vmatpush1.msra.mxu0 %v4819
        %4837 = vmatprep.subr.mxu0 0.0
        %4838 = vmatpush1.msra.mxu0 %v4820
        %4839 = vmatprep.subr.mxu0 0.0
        %4840 = vmatpush1.msra.mxu0 %v4821
        %4841 = vmatprep.subr.mxu0 0.0
        %4842 = vmatpush1.msra.mxu0 0.0
        %4843 = vmatprep.subr.mxu0 0.0
        %4844 = vmatpush1.msra.mxu0 0.0
        %4845 = vmatprep.subr.mxu0 0.0
        %4846 = vmatpush1.msra.mxu0 0.0
        %4847 = vmatprep.subr.mxu0 0.0
        %4848 = vmatpush1.msra.mxu0 0.0
        %4849 = vmatprep.subr.mxu0 0.0
        %4850 = vmatpush1.msra.mxu0 0.0
        %4851 = vmatprep.subr.mxu0 0.0
        %4852 = vmatpush1.msra.mxu0 0.0
        %4853 = vmatprep.subr.mxu0 0.0
        %4854 = vmatpush1.msra.mxu0 0.0
        %4855 = vmatprep.subr.mxu0 0.0
        %4856 = vmatpush1.msra.mxu0 0.0
        %4857 = vmatprep.subr.mxu0 0.0
        %4858 = vmatpush1.msra.mxu0 0.0
        %4859 = vmatprep.subr.mxu0 0.0
        %4860 = vmatpush1.msra.mxu0 0.0
        %4861 = vmatprep.subr.mxu0 0.0
        %4862 = vmatpush1.msra.mxu0 0.0
        %4863 = vmatprep.subr.mxu0 0.0
        %4864 = vmatpush1.msra.mxu0 0.0
        %4865 = vmatprep.subr.mxu0 0.0
        %4866 = vmatpush1.msra.mxu0 0.0
        %4867 = vmatprep.subr.mxu0 0.0
        %4868 = vmatpush1.msra.mxu0 0.0
        %4869 = vmatprep.subr.mxu0 0.0
        %4870 = vmatpush1.msra.mxu0 0.0
        %4871 = vmatprep.subr.mxu0 0.0
        %4872 = vmatpush1.msra.mxu0 0.0
        %4873 = vmatprep.subr.mxu0 0.0
        %4874 = vmatpush1.msra.mxu0 0.0
        %4875 = vmatprep.subr.mxu0 0.0
        %4876 = vmatpush1.msra.mxu0 0.0
        %4877 = vmatprep.subr.mxu0 0.0
        %4878 = vmatpush1.msra.mxu0 0.0
        %4879 = vmatprep.subr.mxu0 0.0
        %4880 = vmatpush1.msra.mxu0 0.0
        %4881 = vmatprep.subr.mxu0 0.0
        %4882 = vmatpush1.msra.mxu0 0.0
        %4883 = vmatprep.subr.mxu0 0.0
        %4884 = vmatpush1.msra.mxu0 0.0
        %4885 = vmatprep.subr.mxu0 0.0
        %4886 = vmatpush1.msra.mxu0 0.0
        %4887 = vmatprep.subr.mxu0 0.0
        %4888 = vmatpush1.msra.mxu0 0.0
        %4889 = vmatprep.mubr.f32.mxu0 0.0
        %4890 = vmatmul.mubr.f32.gmra.mrb[0].mxu0 %v4823
        %v4891 = vpop.f32.mrb[0].mxu0
        %v4892 = vadd.f32 0.0, %v4891
        %v4893 = vpop.f32.mrb[0].mxu0
        %4894 = vdwg.mxu0
        %v4895 = vadd.f32 %v4687, %v4892
        %s4896 = scalar_lea.vmem %s13, 1
        %v4897 = vld [vmem:[%s4896] sm:$0x1]
        %v4899 = vlaneseq
        %v4900 = vshrl.u32 %v4899, 7
        %v4901 = vsub.s32 0, %v4900
        %v4902 = vrot.slane %v4897, %v4901
        %v4904 = vadd.f32 %v4895, %v4902
        %v4905 = vld [vmem:[%s14] sm:$0x1]
        %v4906 = vld [vmem:[%s15] sm:$0x1]
        %v4907 = vsel %vm537, %v4904, 0.0
        %4908 = vadd.xlane.f32.xlu0 %v4907
        %v4909 = vpop.xlane.xlu0 %4908
        %v4910 = vmul.f32 %v4909, %v541
        %v4911 = vsub.f32 %v4904, %v4910
        %v4912 = vmul.f32 %v4911, %v4911
        %v4913 = vsel %vm537, %v4912, 0.0
        %4914 = vadd.xlane.f32.xlu0 %v4913
        %v4915 = vpop.xlane.xlu0 %4914
        %v4916 = vmul.f32 %v4915, 0.032258064
        %v4917 = vrsqrt.pop %v4916
        %v4918 = vmul.f32 %v4916, %v4917
        %vm4919 = vcmp.eq.f32.partialorder %v4916, inf
        %v4920 = vsel %vm4919, %v4916, %v4918
        %vm4921 = vcmp.eq.f32.partialorder %v4916, 0.0
        %v4922 = vand.u32 %v4916, 2147483648
        %v4923 = vsel %vm4921, %v4922, %v4920
        %v4924 = vadd.f32 %v4923, 1e-06
        %v4925 = vrcp.pop %v4924
        %v4926 = vmul.f32 %v4911, %v4925
        %v4928 = vlaneseq
        %v4929 = vshrl.u32 %v4928, 7
        %v4930 = vsub.s32 0, %v4929
        %v4931 = vrot.slane %v4905, %v4930
        %v4933 = vmul.f32 %v4931, %v4926
        %v4935 = vlaneseq
        %v4936 = vshrl.u32 %v4935, 7
        %v4937 = vsub.s32 0, %v4936
        %v4938 = vrot.slane %v4906, %v4937
        %v4940 = vadd.f32 %v4933, %v4938
        %4941 = vst.msk [vmem:[%s523] sm:$0xff] %vm537, %v4940
        %s4942 = sand.u32 %s384, 1
        %s4943 = scalar_lea.sflag [#allocation3], %s4942
        %s4944 = sand.u32 %s384, 1
        %s4945 = smul.addr %s4944, 8
        %s4946 = scalar_lea.vmem [#allocation2], %s4945
        // Predicated region
        $region85: #{tpu_custom_call.1} parent=83 // pred_check
          %p4947 = pneg %p394
        $region86: #{tpu_custom_call.1} parent=83 // pred_check_branch
          %4949 = sbr.rel (%p4947) target = $region88
        $region87: #{tpu_custom_call.1} parent=83 // pred_region
          %s4951 = ssub.s32 128, 128
          %4952 = vsyncadd %s4943, %s4951
          %s4953 = smul.addr %s30, 128
          %s4954 = scalar_lea.hbm %s16, %s4953
          %s4956 = sshll.u32 %s4946, 4
          %s4957 = int_to_ptr.vmem [resolvable:$true] %s4956
          %4959 = dma.vmem_to_hbm [thread:$0]  %s4957, 128, %s4954, %s4943
        $region88: #{tpu_custom_call.1} parent=83 // pred_fallthru
          _
      $region84: #{tpu_custom_call.1} parent=5 // pred_fallthru
        _
      %p4960 = scmp.le.s32.totalorder 2, %s25
      // Predicated region
      $region89: #{tpu_custom_call.1} parent=5 // pred_check
        %p4961 = pneg %p4960
      $region90: #{tpu_custom_call.1} parent=5 // pred_check_branch
        %4963 = sbr.rel (%p4961) target = $region92
      $region91: #{tpu_custom_call.1} parent=5 // pred_region
        %s4964 = ssub.s32 %s25, 2
        // Predicated region
        $region93: #{tpu_custom_call.1} parent=91 // pred_check
          %p4965 = pneg %p400
        $region94: #{tpu_custom_call.1} parent=91 // pred_check_branch
          %4967 = sbr.rel (%p4965) target = $region96
        $region95: #{tpu_custom_call.1} parent=91 // pred_region
          %s4968 = sand.u32 %s385, 1
          %s4969 = scalar_lea.sflag [#allocation3], %s4968
          %s4970 = sand.u32 %s385, 1
          %s4971 = smul.addr %s4970, 8
          %s4972 = scalar_lea.vmem [#allocation2], %s4971
          %4973 = dma.done %s4969, 128
        $region96: #{tpu_custom_call.1} parent=91 // pred_fallthru
          _
      $region92: #{tpu_custom_call.1} parent=5 // pred_fallthru
        _
    $region6: #{tpu_custom_call.1} parent=1 // loop_footer
      %s29 = sadd.s32 1, %s25
    $region7: #{tpu_custom_call.1} parent=1 // loop_footer_branch
      %24 = sbr.rel target = $region3
    $region8: #{tpu_custom_call.1} parent=1 // loop_exit
      _
    %4974 = vsyncpa [#allocation3], 1
    %s4975 = scalar_lea.sflag [#allocation3], 1
    %4976 = vsyncpa %s4975, 1

</llo_original>
